<compile_context>
chip_gen: v7x
topology: tpu7x:2x2x1
jax: 0.10.0
libtpu: 0.0.40
codegen_flags: <defaults>
</compile_context>

<pallas_src>
import functools

import jax
import jax.numpy as jnp
from jax.experimental import pallas as pl
from jax.experimental.pallas import tpu as pltpu


def _round_up(x, m):
    return (x + m - 1) // m * m


def _pick_row_tile(rows):
    for cand in (512, 256, 128, 64, 32, 16, 8):
        if rows % cand == 0:
            return cand
    return rows  # single full-row block (full-dim blocks are always legal)


# ------------------ kernel A: layer-streamed GRU recurrence -------------------
def make_gru_kernel(seq_len, batch, hp, mm_dtype):
    T, B, HP = seq_len, batch, hp

    def kernel(x_ref, h0_ref, wi_ref, wh_ref, brzn_ref, bhn_ref,
               seq_out_ref, hT_ref, seq_scr, proj_scr):
        l = pl.program_id(0)
        n_layer = pl.num_programs(0)

        # Layer 0: pull the (time-major, lane-padded) embeddings into the sequence
        # slab; layers l>0 find the previous layer's output already there.
        @pl.when(l == 0)
        def _():
            seq_scr[...] = x_ref[...].astype(jnp.float32)

        # Hoisted input projection for ALL time steps of this layer (one MXU matmul).
        # NOTE: the full-slab read happens before the time loop overwrites seq_scr
        # (value semantics) — keep it that way if restructuring.
        inp = seq_scr[...]                                          # (T*B, HP)
        proj_scr[...] = (
            jnp.dot(inp.astype(mm_dtype), wi_ref[0],
                    preferred_element_type=jnp.float32)
            + brzn_ref[0])                                          # (T*B, 3*HP)

        h0 = h0_ref[0].astype(jnp.float32)                          # (B, HP)
        bhn_b = jnp.broadcast_to(bhn_ref[0], (B, HP))               # hoisted broadcast

        def step(t, h):
            row = pl.multiple_of(t * B, B)
            hg = jnp.dot(h.astype(mm_dtype), wh_ref[0],
                         preferred_element_type=jnp.float32)        # (B, 3*HP)
            pr = proj_scr[pl.ds(row, B), :]                         # (B, 3*HP)
            # PyTorch gate order (r, z, n); gate blocks are 128-lane aligned.
            r = jax.nn.sigmoid(pr[:, 0:HP] + hg[:, 0:HP])
            z = jax.nn.sigmoid(pr[:, HP:2 * HP] + hg[:, HP:2 * HP])
            n = jnp.tanh(pr[:, 2 * HP:3 * HP] + r * (hg[:, 2 * HP:3 * HP] + bhn_b))
            h = (1.0 - z) * n + z * h
            seq_scr[pl.ds(row, B), :] = h                           # stays in VMEM
            return h

        h_final = jax.lax.fori_loop(0, T, step, h0,
                                    unroll=True if T <= 8 else 2)
        hT_ref[0] = h_final.astype(hT_ref.dtype)                    # streamed per layer

        # Last layer: emit the ReLU'd sequence (matmul dtype) for the head kernel.
        @pl.when(l == n_layer - 1)
        def _():
            seq_out_ref[...] = jnp.maximum(seq_scr[...], 0.0).astype(seq_out_ref.dtype)

    return kernel


# ------------------------ kernel B: row-tiled head ----------------------------
def head_kernel(x_ref, wo_ref, bo_ref, out_ref):
    logits = (jnp.dot(x_ref[...], wo_ref[...], preferred_element_type=jnp.float32)
              + bo_ref[...])                                        # (rt, VP)
    m = jnp.max(logits, axis=-1, keepdims=True)
    s = logits - m
    lse = jnp.log(jnp.sum(jnp.exp(s), axis=-1, keepdims=True))
    out_ref[...] = (s - lse).astype(out_ref.dtype)


# --------------------------------- wrapper ------------------------------------
def gru_forward(x_idx, hidden, params, mm_dtype=jnp.bfloat16):
    """x_idx:(B, T) int32, hidden:(n_layer, B, H) -> (out:(T,B,V), h_T:(n_layer,B,H))."""
    B, T = x_idx.shape
    n_layer, _, H = hidden.shape
    E = params["embedding"].shape[1]
    V = params["h2o_w"].shape[1]

    HP = _round_up(max(H, E), 128)       # lane-aligned hidden / gate / input width
    VP = _round_up(V, 128)               # lane-dense vocab width
    TB = T * B

    # Embedding gather directly in time-major (t, b) row order; zero-pad lanes E -> HP.
    x = params["embedding"][x_idx.T].reshape(TB, E)
    x = jnp.pad(x, ((0, 0), (0, HP - E))).astype(mm_dtype)

    h0 = jnp.pad(hidden, ((0, 0), (0, 0), (0, HP - H)))             # (L, B, HP)

    def pad_w(w):   # (d_in, H) -> (HP, HP), zero pad (padded cols/rows stay inert)
        return jnp.pad(w, ((0, HP - w.shape[0]), (0, HP - H)))

    def pad_b(b):   # (1, H) -> (1, HP)
        return jnp.pad(b, ((0, 0), (0, HP - H)))

    wi_l, wh_l, brzn_l, bhn_l = [], [], [], []
    for lp in params["gru"]:
        wir, wiz, win, whr, whz, whn, bir, biz, bin_, bhr, bhz, bhn = lp
        wi_l.append(jnp.concatenate([pad_w(wir), pad_w(wiz), pad_w(win)], axis=1))
        wh_l.append(jnp.concatenate([pad_w(whr), pad_w(whz), pad_w(whn)], axis=1))
        brzn_l.append(jnp.concatenate([pad_b(bir + bhr), pad_b(biz + bhz),
                                       pad_b(bin_)], axis=1))
        bhn_l.append(pad_b(bhn))
    wi_all = jnp.stack(wi_l).astype(mm_dtype)        # (L, HP, 3*HP)
    wh_all = jnp.stack(wh_l).astype(mm_dtype)        # (L, HP, 3*HP)
    brzn_all = jnp.stack(brzn_l)                     # (L, 1, 3*HP) f32
    bhn_all = jnp.stack(bhn_l)                       # (L, 1, HP)   f32

    # --------------------- kernel A: layer-streamed recurrence ---------------------
    seq_out, hT_pad = pl.pallas_call(
        make_gru_kernel(T, B, HP, mm_dtype),
        out_shape=(jax.ShapeDtypeStruct((TB, HP), mm_dtype),         # relu'd sequence
                   jax.ShapeDtypeStruct((n_layer, B, HP), jnp.float32)),
        grid_spec=pltpu.PrefetchScalarGridSpec(
            num_scalar_prefetch=0,
            grid=(n_layer,),
            in_specs=[
                pl.BlockSpec((TB, HP), lambda l: (0, 0)),             # x (fetched once)
                pl.BlockSpec((1, B, HP), lambda l: (l, 0, 0)),        # h0[l]
                pl.BlockSpec((1, HP, 3 * HP), lambda l: (l, 0, 0)),   # Wi[l]
                pl.BlockSpec((1, HP, 3 * HP), lambda l: (l, 0, 0)),   # Wh[l]
                pl.BlockSpec((1, 1, 3 * HP), lambda l: (l, 0, 0)),    # b_rzn[l]
                pl.BlockSpec((1, 1, HP), lambda l: (l, 0, 0)),        # b_hn[l]
            ],
            out_specs=(
                pl.BlockSpec((TB, HP), lambda l: (0, 0)),             # sequence out
                pl.BlockSpec((1, B, HP), lambda l: (l, 0, 0)),        # h_T[l]
            ),
            scratch_shapes=[pltpu.VMEM((TB, HP), jnp.float32),        # sequence slab
                            pltpu.VMEM((TB, 3 * HP), jnp.float32)]),  # proj slab
        compiler_params=pltpu.CompilerParams(
            dimension_semantics=("arbitrary",)),
    )(x, h0, wi_all, wh_all, brzn_all, bhn_all)

    # ----------------------------- kernel B: head ----------------------------------
    wo = jnp.pad(params["h2o_w"], ((0, HP - H), (0, VP - V))).astype(mm_dtype)
    bo = jnp.pad(params["h2o_b"], ((0, 0), (0, VP - V)),
                 constant_values=-1e30)                               # mask padded vocab

    rt = _pick_row_tile(TB)
    out_pad = pl.pallas_call(
        head_kernel,
        out_shape=jax.ShapeDtypeStruct((TB, VP), jnp.float32),
        grid_spec=pltpu.PrefetchScalarGridSpec(
            num_scalar_prefetch=0,
            grid=(TB // rt,),
            in_specs=[pl.BlockSpec((rt, HP), lambda r: (r, 0)),
                      pl.BlockSpec((HP, VP), lambda r: (0, 0)),
                      pl.BlockSpec((1, VP), lambda r: (0, 0))],
            out_specs=pl.BlockSpec((rt, VP), lambda r: (r, 0))),
        compiler_params=pltpu.CompilerParams(
            dimension_semantics=("parallel",)),
    )(seq_out, wo, bo)

    out = out_pad[:, :V].reshape(T, B, V)
    hT = hT_pad[:, :, :H]
    return out, hT


# --------------------------------- params -------------------------------------
def init_params(key, hidden_size, n_layer, embed_size, input_size):
    ks = jax.random.split(key, 4 + n_layer)
    params = {
        "embedding": 0.1 * jax.random.normal(ks[0], (input_size, embed_size),
                                             jnp.float32),
        "h2o_w": 0.1 * jax.random.normal(ks[1], (hidden_size, input_size),
                                         jnp.float32),   # stored transposed (H, V)
        "h2o_b": 0.1 * jax.random.normal(ks[2], (1, input_size), jnp.float32),
        "gru": [],
    }
    for l in range(n_layer):
        d_in = embed_size if l == 0 else hidden_size
        kk = jax.random.split(ks[4 + l], 12)
        ws = [0.1 * jax.random.normal(kk[i], (d_in, hidden_size), jnp.float32)
              for i in range(3)]                                   # W_ir, W_iz, W_in
        ws += [0.1 * jax.random.normal(kk[3 + i], (hidden_size, hidden_size),
                                       jnp.float32) for i in range(3)]  # W_hr, W_hz, W_hn
        bs = [0.1 * jax.random.normal(kk[6 + i], (1, hidden_size), jnp.float32)
              for i in range(6)]                                   # b_ir..b_hn
        params["gru"].append(tuple(ws + bs))
    return params


# ------------------------------ pure-JAX reference -----------------------------
def ref_forward(x_idx, hidden, params):
    emb = params["embedding"][x_idx]
    seq = jnp.transpose(emb, (1, 0, 2))
    new_hidden = []
    for l, lp in enumerate(params["gru"]):
        wir, wiz, win, whr, whz, whn, bir, biz, bin_, bhr, bhz, bhn = lp

        def step(h, x):
            r = jax.nn.sigmoid(x @ wir + bir + h @ whr + bhr)
            z = jax.nn.sigmoid(x @ wiz + biz + h @ whz + bhz)
            n = jnp.tanh(x @ win + bin_ + r * (h @ whn + bhn))
            hn = (1.0 - z) * n + z * h
            return hn, hn

        hT, outs = jax.lax.scan(step, hidden[l], seq)
        seq = outs
        new_hidden.append(hT)
    logits = jnp.maximum(seq, 0.0) @ params["h2o_w"] + params["h2o_b"]
    out = jax.nn.log_softmax(logits, axis=2)
    return out, jnp.stack(new_hidden, axis=0)


if __name__ == "__main__":
    hidden_size, n_layer, embed_size, input_size = 32, 2, 16, 64
    batch, seq_len = 8, 6

    key = jax.random.PRNGKey(0)
    kp, kx, kh = jax.random.split(key, 3)
    params = init_params(kp, hidden_size, n_layer, embed_size, input_size)

    x_idx = jax.random.randint(kx, (batch, seq_len), 0, input_size, dtype=jnp.int32)
    h0 = 0.1 * jax.random.normal(kh, (n_layer, batch, hidden_size), jnp.float32)

    ref_out, ref_hidden = ref_forward(x_idx, h0, params)

    # f32 matmul path: tight check against the PyTorch-semantics f32 reference.
    out32, hid32 = jax.jit(functools.partial(gru_forward, params=params,
                                             mm_dtype=jnp.float32))(x_idx, h0)
    out32, hid32 = jax.block_until_ready((out32, hid32))
    assert out32.shape == (seq_len, batch, input_size)
    assert hid32.shape == (n_layer, batch, hidden_size)
    assert jnp.allclose(out32, ref_out, rtol=1e-3, atol=2e-3), "f32 output mismatch"
    assert jnp.allclose(hid32, ref_hidden, rtol=1e-3, atol=2e-3), "f32 hidden mismatch"

    # bf16-matmul path (default; MXU-native on v6e/v7x, gate math stays f32):
    # looser tolerance accounts for bf16 operand rounding only.
    out, hidden_out = jax.jit(functools.partial(gru_forward, params=params))(x_idx, h0)
    out, hidden_out = jax.block_until_ready((out, hidden_out))
    assert out.shape == (seq_len, batch, input_size)
    assert hidden_out.shape == (n_layer, batch, hidden_size)
    assert jnp.allclose(out, ref_out, rtol=5e-2, atol=5e-2), "bf16 output mismatch"
    assert jnp.allclose(hidden_out, ref_hidden, rtol=5e-2, atol=5e-2), "bf16 hidden mismatch"

    print("KERNEL_OK")
</pallas_src>

<mosaic_0001>
module attributes {stable_mosaic.version = 11 : i64} {
  func.func @head_kernel(%arg0: i32, %arg1: memref<16x128xf32, #tpu.memory_space<vmem>>, %arg2: memref<128x128xf32, #tpu.memory_space<vmem>>, %arg3: memref<1x128xf32, #tpu.memory_space<vmem>>, %arg4: memref<16x128xf32, #tpu.memory_space<vmem>>) attributes {dimension_semantics = [#tpu.dimension_semantics<parallel>], iteration_bounds = array<i64: 3>, scalar_prefetch = 0 : i64, scratch_operands = 0 : i64, tpu.core_type = #tpu.core_type<tc>, window_params = [{transform_indices = @transform_0, window_bounds = array<i64: 16, 128>}, {pipeline_mode = #tpu.pipeline_mode<synchronous>, transform_indices = @transform_1, window_bounds = array<i64: 128, 128>}, {pipeline_mode = #tpu.pipeline_mode<synchronous>, transform_indices = @transform_2, window_bounds = array<i64: 1, 128>}, {transform_indices = @transform_3, window_bounds = array<i64: 16, 128>}]} {
    %c0 = arith.constant 0 : index
    %c0_0 = arith.constant 0 : index
    %0 = vector.load %arg1[%c0, %c0_0] : memref<16x128xf32, #tpu.memory_space<vmem>>, vector<16x128xf32>
    %c0_1 = arith.constant 0 : index
    %c0_2 = arith.constant 0 : index
    %1 = vector.load %arg2[%c0_1, %c0_2] : memref<128x128xf32, #tpu.memory_space<vmem>>, vector<128x128xf32>
    %cst = arith.constant dense<0.000000e+00> : vector<16x128xf32>
    %2 = tpu.matmul %0, %1, %cst {dimension_numbers = #tpu.dot_dimension_numbers<[1], [0], [0], [1], [0, 0, 1, 1], [], []>} : vector<16x128xf32>, vector<128x128xf32>, vector<16x128xf32> -> vector<16x128xf32>
    %c0_3 = arith.constant 0 : index
    %c0_4 = arith.constant 0 : index
    %3 = vector.load %arg3[%c0_3, %c0_4] : memref<1x128xf32, #tpu.memory_space<vmem>>, vector<1x128xf32>
    %4 = vector.broadcast %3 : vector<1x128xf32> to vector<16x128xf32>
    %5 = arith.addf %2, %4 : vector<16x128xf32>
    %cst_5 = arith.constant dense<0xFF800000> : vector<16xf32>
    %6 = vector.multi_reduction <maximumf>, %5, %cst_5 [1] : vector<16x128xf32> to vector<16xf32>
    %7 = vector.shape_cast %6 : vector<16xf32> to vector<16x1xf32>
    %8 = vector.broadcast %7 : vector<16x1xf32> to vector<16x128xf32>
    %9 = arith.subf %5, %8 : vector<16x128xf32>
    %10 = math.exp %9 : vector<16x128xf32>
    %cst_6 = arith.constant dense<0.000000e+00> : vector<16xf32>
    %11 = vector.multi_reduction <add>, %10, %cst_6 [1] : vector<16x128xf32> to vector<16xf32>
    %12 = vector.shape_cast %11 : vector<16xf32> to vector<16x1xf32>
    %13 = math.log %12 : vector<16x1xf32>
    %14 = vector.broadcast %13 : vector<16x1xf32> to vector<16x128xf32>
    %15 = arith.subf %9, %14 : vector<16x128xf32>
    %c0_7 = arith.constant 0 : index
    %c0_8 = arith.constant 0 : index
    %16 = vector.load %arg4[%c0_7, %c0_8] : memref<16x128xf32, #tpu.memory_space<vmem>>, vector<16x128xf32>
    tpu.vector_store %arg4[%c0_7, %c0_8], %15 {strides = array<i32>} : memref<16x128xf32, #tpu.memory_space<vmem>>, vector<16x128xf32>,
    return
  }
  func.func @transform_0(%arg0: i32) -> (i32, i32) {
    %c0_i32 = arith.constant 0 : i32
    %c0_i32_0 = arith.constant 0 : i32
    return %arg0, %c0_i32 : i32, i32
  }
  func.func @transform_1(%arg0: i32) -> (i32, i32) {
    %c0_i32 = arith.constant 0 : i32
    %c0_i32_0 = arith.constant 0 : i32
    %c0_i32_1 = arith.constant 0 : i32
    return %c0_i32, %c0_i32_0 : i32, i32
  }
  func.func @transform_2(%arg0: i32) -> (i32, i32) {
    %c0_i32 = arith.constant 0 : i32
    %c0_i32_0 = arith.constant 0 : i32
    %c0_i32_1 = arith.constant 0 : i32
    return %c0_i32, %c0_i32_0 : i32, i32
  }
  func.func @transform_3(%arg0: i32) -> (i32, i32) {
    %c0_i32 = arith.constant 0 : i32
    %c0_i32_0 = arith.constant 0 : i32
    return %arg0, %c0_i32 : i32, i32
  }
}

module attributes {stable_mosaic.version = 11 : i64} {
  func.func @kernel(%arg0: i32, %arg1: memref<48x128xf32, #tpu.memory_space<vmem>>, %arg2: memref<1x8x128xf32, #tpu.memory_space<vmem>>, %arg3: memref<1x128x384xf32, #tpu.memory_space<vmem>>, %arg4: memref<1x128x384xf32, #tpu.memory_space<vmem>>, %arg5: memref<1x1x384xf32, #tpu.memory_space<vmem>>, %arg6: memref<1x1x128xf32, #tpu.memory_space<vmem>>, %arg7: memref<48x128xf32, #tpu.memory_space<vmem>>, %arg8: memref<1x8x128xf32, #tpu.memory_space<vmem>>, %arg9: memref<48x128xf32, #tpu.memory_space<vmem>>, %arg10: memref<48x384xf32, #tpu.memory_space<vmem>>) attributes {dimension_semantics = [#tpu.dimension_semantics<arbitrary>], iteration_bounds = array<i64: 2>, scalar_prefetch = 0 : i64, scratch_operands = 2 : i64, tpu.core_type = #tpu.core_type<tc>, window_params = [{pipeline_mode = #tpu.pipeline_mode<synchronous>, transform_indices = @transform_0, window_bounds = array<i64: 48, 128>}, {transform_indices = @transform_1, window_bounds = array<i64: 1, 8, 128>}, {transform_indices = @transform_2, window_bounds = array<i64: 1, 128, 384>}, {transform_indices = @transform_3, window_bounds = array<i64: 1, 128, 384>}, {transform_indices = @transform_4, window_bounds = array<i64: 1, 1, 384>}, {transform_indices = @transform_5, window_bounds = array<i64: 1, 1, 128>}, {pipeline_mode = #tpu.pipeline_mode<synchronous>, transform_indices = @transform_6, window_bounds = array<i64: 48, 128>}, {transform_indices = @transform_7, window_bounds = array<i64: 1, 8, 128>}]} {
    %c0_i32 = arith.constant 0 : i32
    %0 = arith.cmpi eq, %arg0, %c0_i32 : i32
    %1 = arith.extui %0 : i1 to i32
    %c0_i32_0 = arith.constant 0 : i32
    %2 = arith.cmpi ne, %1, %c0_i32_0 : i32
    scf.if %2 {
      %c0_81 = arith.constant 0 : index
      %c0_82 = arith.constant 0 : index
      %240 = vector.load %arg1[%c0_81, %c0_82] : memref<48x128xf32, #tpu.memory_space<vmem>>, vector<48x128xf32>
      %c0_83 = arith.constant 0 : index
      %c0_84 = arith.constant 0 : index
      %241 = vector.load %arg9[%c0_83, %c0_84] : memref<48x128xf32, #tpu.memory_space<vmem>>, vector<48x128xf32>
      tpu.vector_store %arg9[%c0_83, %c0_84], %240 {strides = array<i32>} : memref<48x128xf32, #tpu.memory_space<vmem>>, vector<48x128xf32>,
    } else {
    }
    %c0 = arith.constant 0 : index
    %c0_1 = arith.constant 0 : index
    %3 = vector.load %arg9[%c0, %c0_1] : memref<48x128xf32, #tpu.memory_space<vmem>>, vector<48x128xf32>
    %c0_2 = arith.constant 0 : index
    %c0_3 = arith.constant 0 : index
    %c0_4 = arith.constant 0 : index
    %4 = vector.load %arg3[%c0_2, %c0_3, %c0_4] : memref<1x128x384xf32, #tpu.memory_space<vmem>>, vector<1x128x384xf32>
    %5 = vector.shape_cast %4 : vector<1x128x384xf32> to vector<128x384xf32>
    %cst = arith.constant dense<0.000000e+00> : vector<48x384xf32>
    %6 = tpu.matmul %3, %5, %cst {dimension_numbers = #tpu.dot_dimension_numbers<[1], [0], [0], [1], [0, 0, 1, 1], [], []>} : vector<48x128xf32>, vector<128x384xf32>, vector<48x384xf32> -> vector<48x384xf32>
    %c0_5 = arith.constant 0 : index
    %c0_6 = arith.constant 0 : index
    %c0_7 = arith.constant 0 : index
    %7 = vector.load %arg5[%c0_5, %c0_6, %c0_7] : memref<1x1x384xf32, #tpu.memory_space<vmem>>, vector<1x1x384xf32>
    %8 = vector.shape_cast %7 : vector<1x1x384xf32> to vector<1x384xf32>
    %9 = vector.broadcast %8 : vector<1x384xf32> to vector<48x384xf32>
    %10 = arith.addf %6, %9 : vector<48x384xf32>
    %c0_8 = arith.constant 0 : index
    %c0_9 = arith.constant 0 : index
    %11 = vector.load %arg10[%c0_8, %c0_9] : memref<48x384xf32, #tpu.memory_space<vmem>>, vector<48x384xf32>
    tpu.vector_store %arg10[%c0_8, %c0_9], %10 {strides = array<i32>} : memref<48x384xf32, #tpu.memory_space<vmem>>, vector<48x384xf32>,
    %c0_10 = arith.constant 0 : index
    %c0_11 = arith.constant 0 : index
    %c0_12 = arith.constant 0 : index
    %12 = vector.load %arg2[%c0_10, %c0_11, %c0_12] : memref<1x8x128xf32, #tpu.memory_space<vmem>>, vector<1x8x128xf32>
    %13 = vector.shape_cast %12 : vector<1x8x128xf32> to vector<8x128xf32>
    %c0_13 = arith.constant 0 : index
    %c0_14 = arith.constant 0 : index
    %c0_15 = arith.constant 0 : index
    %14 = vector.load %arg6[%c0_13, %c0_14, %c0_15] : memref<1x1x128xf32, #tpu.memory_space<vmem>>, vector<1x1x128xf32>
    %15 = vector.shape_cast %14 : vector<1x1x128xf32> to vector<1x128xf32>
    %16 = vector.shape_cast %15 : vector<1x128xf32> to vector<1x128xf32>
    %17 = vector.broadcast %16 : vector<1x128xf32> to vector<8x128xf32>
    %c0_i32_16 = arith.constant 0 : i32
    %c8_i32 = arith.constant 8 : i32
    %18 = arith.muli %c0_i32_16, %c8_i32 : i32
    %19 = tpu.assume_multiple %18, 8 : i32
    %c0_17 = arith.constant 0 : index
    %c0_18 = arith.constant 0 : index
    %c0_19 = arith.constant 0 : index
    %20 = vector.load %arg4[%c0_17, %c0_18, %c0_19] : memref<1x128x384xf32, #tpu.memory_space<vmem>>, vector<1x128x384xf32>
    %21 = vector.shape_cast %20 : vector<1x128x384xf32> to vector<128x384xf32>
    %cst_20 = arith.constant dense<0.000000e+00> : vector<8x384xf32>
    %22 = tpu.matmul %13, %21, %cst_20 {dimension_numbers = #tpu.dot_dimension_numbers<[1], [0], [0], [1], [0, 0, 1, 1], [], []>} : vector<8x128xf32>, vector<128x384xf32>, vector<8x384xf32> -> vector<8x384xf32>
    %23 = arith.index_cast %19 : i32 to index
    %c0_21 = arith.constant 0 : index
    %24 = vector.load %arg10[%23, %c0_21] : memref<48x384xf32, #tpu.memory_space<vmem>>, vector<8x384xf32>
    %25 = vector.extract_strided_slice %24 {offsets = [0, 0], sizes = [8, 128], strides = [1, 1]} : vector<8x384xf32> to vector<8x128xf32>
    %26 = vector.extract_strided_slice %22 {offsets = [0, 0], sizes = [8, 128], strides = [1, 1]} : vector<8x384xf32> to vector<8x128xf32>
    %27 = arith.addf %25, %26 : vector<8x128xf32>
    %28 = arith.negf %27 : vector<8x128xf32>
    %29 = math.exp %28 : vector<8x128xf32>
    %cst_22 = arith.constant 1.000000e+00 : f32
    %30 = vector.broadcast %cst_22 : f32 to vector<8x128xf32>
    %31 = arith.addf %30, %29 : vector<8x128xf32>
    %32 = arith.divf %30, %31 : vector<8x128xf32>
    %33 = vector.extract_strided_slice %24 {offsets = [0, 128], sizes = [8, 128], strides = [1, 1]} : vector<8x384xf32> to vector<8x128xf32>
    %34 = vector.extract_strided_slice %22 {offsets = [0, 128], sizes = [8, 128], strides = [1, 1]} : vector<8x384xf32> to vector<8x128xf32>
    %35 = arith.addf %33, %34 : vector<8x128xf32>
    %36 = arith.negf %35 : vector<8x128xf32>
    %37 = math.exp %36 : vector<8x128xf32>
    %cst_23 = arith.constant 1.000000e+00 : f32
    %38 = vector.broadcast %cst_23 : f32 to vector<8x128xf32>
    %39 = arith.addf %38, %37 : vector<8x128xf32>
    %40 = arith.divf %38, %39 : vector<8x128xf32>
    %41 = vector.extract_strided_slice %24 {offsets = [0, 256], sizes = [8, 128], strides = [1, 1]} : vector<8x384xf32> to vector<8x128xf32>
    %42 = vector.extract_strided_slice %22 {offsets = [0, 256], sizes = [8, 128], strides = [1, 1]} : vector<8x384xf32> to vector<8x128xf32>
    %43 = arith.addf %42, %17 : vector<8x128xf32>
    %44 = arith.mulf %32, %43 : vector<8x128xf32>
    %45 = arith.addf %41, %44 : vector<8x128xf32>
    %46 = math.tanh %45 : vector<8x128xf32>
    %cst_24 = arith.constant 1.000000e+00 : f32
    %47 = vector.broadcast %cst_24 : f32 to vector<8x128xf32>
    %48 = arith.subf %47, %40 : vector<8x128xf32>
    %49 = arith.mulf %48, %46 : vector<8x128xf32>
    %50 = arith.mulf %40, %13 : vector<8x128xf32>
    %51 = arith.addf %49, %50 : vector<8x128xf32>
    %52 = arith.index_cast %19 : i32 to index
    %c0_25 = arith.constant 0 : index
    %53 = vector.load %arg9[%52, %c0_25] : memref<48x128xf32, #tpu.memory_space<vmem>>, vector<8x128xf32>
    tpu.vector_store %arg9[%52, %c0_25], %51 {strides = array<i32>} : memref<48x128xf32, #tpu.memory_space<vmem>>, vector<8x128xf32>,
    %c1_i32 = arith.constant 1 : i32
    %c8_i32_26 = arith.constant 8 : i32
    %54 = arith.muli %c1_i32, %c8_i32_26 : i32
    %55 = tpu.assume_multiple %54, 8 : i32
    %c0_27 = arith.constant 0 : index
    %c0_28 = arith.constant 0 : index
    %c0_29 = arith.constant 0 : index
    %56 = vector.load %arg4[%c0_27, %c0_28, %c0_29] : memref<1x128x384xf32, #tpu.memory_space<vmem>>, vector<1x128x384xf32>
    %57 = vector.shape_cast %56 : vector<1x128x384xf32> to vector<128x384xf32>
    %cst_30 = arith.constant dense<0.000000e+00> : vector<8x384xf32>
    %58 = tpu.matmul %51, %57, %cst_30 {dimension_numbers = #tpu.dot_dimension_numbers<[1], [0], [0], [1], [0, 0, 1, 1], [], []>} : vector<8x128xf32>, vector<128x384xf32>, vector<8x384xf32> -> vector<8x384xf32>
    %59 = arith.index_cast %55 : i32 to index
    %c0_31 = arith.constant 0 : index
    %60 = vector.load %arg10[%59, %c0_31] : memref<48x384xf32, #tpu.memory_space<vmem>>, vector<8x384xf32>
    %61 = vector.extract_strided_slice %60 {offsets = [0, 0], sizes = [8, 128], strides = [1, 1]} : vector<8x384xf32> to vector<8x128xf32>
    %62 = vector.extract_strided_slice %58 {offsets = [0, 0], sizes = [8, 128], strides = [1, 1]} : vector<8x384xf32> to vector<8x128xf32>
    %63 = arith.addf %61, %62 : vector<8x128xf32>
    %64 = arith.negf %63 : vector<8x128xf32>
    %65 = math.exp %64 : vector<8x128xf32>
    %cst_32 = arith.constant 1.000000e+00 : f32
    %66 = vector.broadcast %cst_32 : f32 to vector<8x128xf32>
    %67 = arith.addf %66, %65 : vector<8x128xf32>
    %68 = arith.divf %66, %67 : vector<8x128xf32>
    %69 = vector.extract_strided_slice %60 {offsets = [0, 128], sizes = [8, 128], strides = [1, 1]} : vector<8x384xf32> to vector<8x128xf32>
    %70 = vector.extract_strided_slice %58 {offsets = [0, 128], sizes = [8, 128], strides = [1, 1]} : vector<8x384xf32> to vector<8x128xf32>
    %71 = arith.addf %69, %70 : vector<8x128xf32>
    %72 = arith.negf %71 : vector<8x128xf32>
    %73 = math.exp %72 : vector<8x128xf32>
    %cst_33 = arith.constant 1.000000e+00 : f32
    %74 = vector.broadcast %cst_33 : f32 to vector<8x128xf32>
    %75 = arith.addf %74, %73 : vector<8x128xf32>
    %76 = arith.divf %74, %75 : vector<8x128xf32>
    %77 = vector.extract_strided_slice %60 {offsets = [0, 256], sizes = [8, 128], strides = [1, 1]} : vector<8x384xf32> to vector<8x128xf32>
    %78 = vector.extract_strided_slice %58 {offsets = [0, 256], sizes = [8, 128], strides = [1, 1]} : vector<8x384xf32> to vector<8x128xf32>
    %79 = arith.addf %78, %17 : vector<8x128xf32>
    %80 = arith.mulf %68, %79 : vector<8x128xf32>
    %81 = arith.addf %77, %80 : vector<8x128xf32>
    %82 = math.tanh %81 : vector<8x128xf32>
    %cst_34 = arith.constant 1.000000e+00 : f32
    %83 = vector.broadcast %cst_34 : f32 to vector<8x128xf32>
    %84 = arith.subf %83, %76 : vector<8x128xf32>
    %85 = arith.mulf %84, %82 : vector<8x128xf32>
    %86 = arith.mulf %76, %51 : vector<8x128xf32>
    %87 = arith.addf %85, %86 : vector<8x128xf32>
    %88 = arith.index_cast %55 : i32 to index
    %c0_35 = arith.constant 0 : index
    %89 = vector.load %arg9[%88, %c0_35] : memref<48x128xf32, #tpu.memory_space<vmem>>, vector<8x128xf32>
    tpu.vector_store %arg9[%88, %c0_35], %87 {strides = array<i32>} : memref<48x128xf32, #tpu.memory_space<vmem>>, vector<8x128xf32>,
    %c2_i32 = arith.constant 2 : i32
    %c8_i32_36 = arith.constant 8 : i32
    %90 = arith.muli %c2_i32, %c8_i32_36 : i32
    %91 = tpu.assume_multiple %90, 8 : i32
    %c0_37 = arith.constant 0 : index
    %c0_38 = arith.constant 0 : index
    %c0_39 = arith.constant 0 : index
    %92 = vector.load %arg4[%c0_37, %c0_38, %c0_39] : memref<1x128x384xf32, #tpu.memory_space<vmem>>, vector<1x128x384xf32>
    %93 = vector.shape_cast %92 : vector<1x128x384xf32> to vector<128x384xf32>
    %cst_40 = arith.constant dense<0.000000e+00> : vector<8x384xf32>
    %94 = tpu.matmul %87, %93, %cst_40 {dimension_numbers = #tpu.dot_dimension_numbers<[1], [0], [0], [1], [0, 0, 1, 1], [], []>} : vector<8x128xf32>, vector<128x384xf32>, vector<8x384xf32> -> vector<8x384xf32>
    %95 = arith.index_cast %91 : i32 to index
    %c0_41 = arith.constant 0 : index
    %96 = vector.load %arg10[%95, %c0_41] : memref<48x384xf32, #tpu.memory_space<vmem>>, vector<8x384xf32>
    %97 = vector.extract_strided_slice %96 {offsets = [0, 0], sizes = [8, 128], strides = [1, 1]} : vector<8x384xf32> to vector<8x128xf32>
    %98 = vector.extract_strided_slice %94 {offsets = [0, 0], sizes = [8, 128], strides = [1, 1]} : vector<8x384xf32> to vector<8x128xf32>
    %99 = arith.addf %97, %98 : vector<8x128xf32>
    %100 = arith.negf %99 : vector<8x128xf32>
    %101 = math.exp %100 : vector<8x128xf32>
    %cst_42 = arith.constant 1.000000e+00 : f32
    %102 = vector.broadcast %cst_42 : f32 to vector<8x128xf32>
    %103 = arith.addf %102, %101 : vector<8x128xf32>
    %104 = arith.divf %102, %103 : vector<8x128xf32>
    %105 = vector.extract_strided_slice %96 {offsets = [0, 128], sizes = [8, 128], strides = [1, 1]} : vector<8x384xf32> to vector<8x128xf32>
    %106 = vector.extract_strided_slice %94 {offsets = [0, 128], sizes = [8, 128], strides = [1, 1]} : vector<8x384xf32> to vector<8x128xf32>
    %107 = arith.addf %105, %106 : vector<8x128xf32>
    %108 = arith.negf %107 : vector<8x128xf32>
    %109 = math.exp %108 : vector<8x128xf32>
    %cst_43 = arith.constant 1.000000e+00 : f32
    %110 = vector.broadcast %cst_43 : f32 to vector<8x128xf32>
    %111 = arith.addf %110, %109 : vector<8x128xf32>
    %112 = arith.divf %110, %111 : vector<8x128xf32>
    %113 = vector.extract_strided_slice %96 {offsets = [0, 256], sizes = [8, 128], strides = [1, 1]} : vector<8x384xf32> to vector<8x128xf32>
    %114 = vector.extract_strided_slice %94 {offsets = [0, 256], sizes = [8, 128], strides = [1, 1]} : vector<8x384xf32> to vector<8x128xf32>
    %115 = arith.addf %114, %17 : vector<8x128xf32>
    %116 = arith.mulf %104, %115 : vector<8x128xf32>
    %117 = arith.addf %113, %116 : vector<8x128xf32>
    %118 = math.tanh %117 : vector<8x128xf32>
    %cst_44 = arith.constant 1.000000e+00 : f32
    %119 = vector.broadcast %cst_44 : f32 to vector<8x128xf32>
    %120 = arith.subf %119, %112 : vector<8x128xf32>
    %121 = arith.mulf %120, %118 : vector<8x128xf32>
    %122 = arith.mulf %112, %87 : vector<8x128xf32>
    %123 = arith.addf %121, %122 : vector<8x128xf32>
    %124 = arith.index_cast %91 : i32 to index
    %c0_45 = arith.constant 0 : index
    %125 = vector.load %arg9[%124, %c0_45] : memref<48x128xf32, #tpu.memory_space<vmem>>, vector<8x128xf32>
    tpu.vector_store %arg9[%124, %c0_45], %123 {strides = array<i32>} : memref<48x128xf32, #tpu.memory_space<vmem>>, vector<8x128xf32>,
    %c3_i32 = arith.constant 3 : i32
    %c8_i32_46 = arith.constant 8 : i32
    %126 = arith.muli %c3_i32, %c8_i32_46 : i32
    %127 = tpu.assume_multiple %126, 8 : i32
    %c0_47 = arith.constant 0 : index
    %c0_48 = arith.constant 0 : index
    %c0_49 = arith.constant 0 : index
    %128 = vector.load %arg4[%c0_47, %c0_48, %c0_49] : memref<1x128x384xf32, #tpu.memory_space<vmem>>, vector<1x128x384xf32>
    %129 = vector.shape_cast %128 : vector<1x128x384xf32> to vector<128x384xf32>
    %cst_50 = arith.constant dense<0.000000e+00> : vector<8x384xf32>
    %130 = tpu.matmul %123, %129, %cst_50 {dimension_numbers = #tpu.dot_dimension_numbers<[1], [0], [0], [1], [0, 0, 1, 1], [], []>} : vector<8x128xf32>, vector<128x384xf32>, vector<8x384xf32> -> vector<8x384xf32>
    %131 = arith.index_cast %127 : i32 to index
    %c0_51 = arith.constant 0 : index
    %132 = vector.load %arg10[%131, %c0_51] : memref<48x384xf32, #tpu.memory_space<vmem>>, vector<8x384xf32>
    %133 = vector.extract_strided_slice %132 {offsets = [0, 0], sizes = [8, 128], strides = [1, 1]} : vector<8x384xf32> to vector<8x128xf32>
    %134 = vector.extract_strided_slice %130 {offsets = [0, 0], sizes = [8, 128], strides = [1, 1]} : vector<8x384xf32> to vector<8x128xf32>
    %135 = arith.addf %133, %134 : vector<8x128xf32>
    %136 = arith.negf %135 : vector<8x128xf32>
    %137 = math.exp %136 : vector<8x128xf32>
    %cst_52 = arith.constant 1.000000e+00 : f32
    %138 = vector.broadcast %cst_52 : f32 to vector<8x128xf32>
    %139 = arith.addf %138, %137 : vector<8x128xf32>
    %140 = arith.divf %138, %139 : vector<8x128xf32>
    %141 = vector.extract_strided_slice %132 {offsets = [0, 128], sizes = [8, 128], strides = [1, 1]} : vector<8x384xf32> to vector<8x128xf32>
    %142 = vector.extract_strided_slice %130 {offsets = [0, 128], sizes = [8, 128], strides = [1, 1]} : vector<8x384xf32> to vector<8x128xf32>
    %143 = arith.addf %141, %142 : vector<8x128xf32>
    %144 = arith.negf %143 : vector<8x128xf32>
    %145 = math.exp %144 : vector<8x128xf32>
    %cst_53 = arith.constant 1.000000e+00 : f32
    %146 = vector.broadcast %cst_53 : f32 to vector<8x128xf32>
    %147 = arith.addf %146, %145 : vector<8x128xf32>
    %148 = arith.divf %146, %147 : vector<8x128xf32>
    %149 = vector.extract_strided_slice %132 {offsets = [0, 256], sizes = [8, 128], strides = [1, 1]} : vector<8x384xf32> to vector<8x128xf32>
    %150 = vector.extract_strided_slice %130 {offsets = [0, 256], sizes = [8, 128], strides = [1, 1]} : vector<8x384xf32> to vector<8x128xf32>
    %151 = arith.addf %150, %17 : vector<8x128xf32>
    %152 = arith.mulf %140, %151 : vector<8x128xf32>
    %153 = arith.addf %149, %152 : vector<8x128xf32>
    %154 = math.tanh %153 : vector<8x128xf32>
    %cst_54 = arith.constant 1.000000e+00 : f32
    %155 = vector.broadcast %cst_54 : f32 to vector<8x128xf32>
    %156 = arith.subf %155, %148 : vector<8x128xf32>
    %157 = arith.mulf %156, %154 : vector<8x128xf32>
    %158 = arith.mulf %148, %123 : vector<8x128xf32>
    %159 = arith.addf %157, %158 : vector<8x128xf32>
    %160 = arith.index_cast %127 : i32 to index
    %c0_55 = arith.constant 0 : index
    %161 = vector.load %arg9[%160, %c0_55] : memref<48x128xf32, #tpu.memory_space<vmem>>, vector<8x128xf32>
    tpu.vector_store %arg9[%160, %c0_55], %159 {strides = array<i32>} : memref<48x128xf32, #tpu.memory_space<vmem>>, vector<8x128xf32>,
    %c4_i32 = arith.constant 4 : i32
    %c8_i32_56 = arith.constant 8 : i32
    %162 = arith.muli %c4_i32, %c8_i32_56 : i32
    %163 = tpu.assume_multiple %162, 8 : i32
    %c0_57 = arith.constant 0 : index
    %c0_58 = arith.constant 0 : index
    %c0_59 = arith.constant 0 : index
    %164 = vector.load %arg4[%c0_57, %c0_58, %c0_59] : memref<1x128x384xf32, #tpu.memory_space<vmem>>, vector<1x128x384xf32>
    %165 = vector.shape_cast %164 : vector<1x128x384xf32> to vector<128x384xf32>
    %cst_60 = arith.constant dense<0.000000e+00> : vector<8x384xf32>
    %166 = tpu.matmul %159, %165, %cst_60 {dimension_numbers = #tpu.dot_dimension_numbers<[1], [0], [0], [1], [0, 0, 1, 1], [], []>} : vector<8x128xf32>, vector<128x384xf32>, vector<8x384xf32> -> vector<8x384xf32>
    %167 = arith.index_cast %163 : i32 to index
    %c0_61 = arith.constant 0 : index
    %168 = vector.load %arg10[%167, %c0_61] : memref<48x384xf32, #tpu.memory_space<vmem>>, vector<8x384xf32>
    %169 = vector.extract_strided_slice %168 {offsets = [0, 0], sizes = [8, 128], strides = [1, 1]} : vector<8x384xf32> to vector<8x128xf32>
    %170 = vector.extract_strided_slice %166 {offsets = [0, 0], sizes = [8, 128], strides = [1, 1]} : vector<8x384xf32> to vector<8x128xf32>
    %171 = arith.addf %169, %170 : vector<8x128xf32>
    %172 = arith.negf %171 : vector<8x128xf32>
    %173 = math.exp %172 : vector<8x128xf32>
    %cst_62 = arith.constant 1.000000e+00 : f32
    %174 = vector.broadcast %cst_62 : f32 to vector<8x128xf32>
    %175 = arith.addf %174, %173 : vector<8x128xf32>
    %176 = arith.divf %174, %175 : vector<8x128xf32>
    %177 = vector.extract_strided_slice %168 {offsets = [0, 128], sizes = [8, 128], strides = [1, 1]} : vector<8x384xf32> to vector<8x128xf32>
    %178 = vector.extract_strided_slice %166 {offsets = [0, 128], sizes = [8, 128], strides = [1, 1]} : vector<8x384xf32> to vector<8x128xf32>
    %179 = arith.addf %177, %178 : vector<8x128xf32>
    %180 = arith.negf %179 : vector<8x128xf32>
    %181 = math.exp %180 : vector<8x128xf32>
    %cst_63 = arith.constant 1.000000e+00 : f32
    %182 = vector.broadcast %cst_63 : f32 to vector<8x128xf32>
    %183 = arith.addf %182, %181 : vector<8x128xf32>
    %184 = arith.divf %182, %183 : vector<8x128xf32>
    %185 = vector.extract_strided_slice %168 {offsets = [0, 256], sizes = [8, 128], strides = [1, 1]} : vector<8x384xf32> to vector<8x128xf32>
    %186 = vector.extract_strided_slice %166 {offsets = [0, 256], sizes = [8, 128], strides = [1, 1]} : vector<8x384xf32> to vector<8x128xf32>
    %187 = arith.addf %186, %17 : vector<8x128xf32>
    %188 = arith.mulf %176, %187 : vector<8x128xf32>
    %189 = arith.addf %185, %188 : vector<8x128xf32>
    %190 = math.tanh %189 : vector<8x128xf32>
    %cst_64 = arith.constant 1.000000e+00 : f32
    %191 = vector.broadcast %cst_64 : f32 to vector<8x128xf32>
    %192 = arith.subf %191, %184 : vector<8x128xf32>
    %193 = arith.mulf %192, %190 : vector<8x128xf32>
    %194 = arith.mulf %184, %159 : vector<8x128xf32>
    %195 = arith.addf %193, %194 : vector<8x128xf32>
    %196 = arith.index_cast %163 : i32 to index
    %c0_65 = arith.constant 0 : index
    %197 = vector.load %arg9[%196, %c0_65] : memref<48x128xf32, #tpu.memory_space<vmem>>, vector<8x128xf32>
    tpu.vector_store %arg9[%196, %c0_65], %195 {strides = array<i32>} : memref<48x128xf32, #tpu.memory_space<vmem>>, vector<8x128xf32>,
    %c5_i32 = arith.constant 5 : i32
    %c8_i32_66 = arith.constant 8 : i32
    %198 = arith.muli %c5_i32, %c8_i32_66 : i32
    %199 = tpu.assume_multiple %198, 8 : i32
    %c0_67 = arith.constant 0 : index
    %c0_68 = arith.constant 0 : index
    %c0_69 = arith.constant 0 : index
    %200 = vector.load %arg4[%c0_67, %c0_68, %c0_69] : memref<1x128x384xf32, #tpu.memory_space<vmem>>, vector<1x128x384xf32>
    %201 = vector.shape_cast %200 : vector<1x128x384xf32> to vector<128x384xf32>
    %cst_70 = arith.constant dense<0.000000e+00> : vector<8x384xf32>
    %202 = tpu.matmul %195, %201, %cst_70 {dimension_numbers = #tpu.dot_dimension_numbers<[1], [0], [0], [1], [0, 0, 1, 1], [], []>} : vector<8x128xf32>, vector<128x384xf32>, vector<8x384xf32> -> vector<8x384xf32>
    %203 = arith.index_cast %199 : i32 to index
    %c0_71 = arith.constant 0 : index
    %204 = vector.load %arg10[%203, %c0_71] : memref<48x384xf32, #tpu.memory_space<vmem>>, vector<8x384xf32>
    %205 = vector.extract_strided_slice %204 {offsets = [0, 0], sizes = [8, 128], strides = [1, 1]} : vector<8x384xf32> to vector<8x128xf32>
    %206 = vector.extract_strided_slice %202 {offsets = [0, 0], sizes = [8, 128], strides = [1, 1]} : vector<8x384xf32> to vector<8x128xf32>
    %207 = arith.addf %205, %206 : vector<8x128xf32>
    %208 = arith.negf %207 : vector<8x128xf32>
    %209 = math.exp %208 : vector<8x128xf32>
    %cst_72 = arith.constant 1.000000e+00 : f32
    %210 = vector.broadcast %cst_72 : f32 to vector<8x128xf32>
    %211 = arith.addf %210, %209 : vector<8x128xf32>
    %212 = arith.divf %210, %211 : vector<8x128xf32>
    %213 = vector.extract_strided_slice %204 {offsets = [0, 128], sizes = [8, 128], strides = [1, 1]} : vector<8x384xf32> to vector<8x128xf32>
    %214 = vector.extract_strided_slice %202 {offsets = [0, 128], sizes = [8, 128], strides = [1, 1]} : vector<8x384xf32> to vector<8x128xf32>
    %215 = arith.addf %213, %214 : vector<8x128xf32>
    %216 = arith.negf %215 : vector<8x128xf32>
    %217 = math.exp %216 : vector<8x128xf32>
    %cst_73 = arith.constant 1.000000e+00 : f32
    %218 = vector.broadcast %cst_73 : f32 to vector<8x128xf32>
    %219 = arith.addf %218, %217 : vector<8x128xf32>
    %220 = arith.divf %218, %219 : vector<8x128xf32>
    %221 = vector.extract_strided_slice %204 {offsets = [0, 256], sizes = [8, 128], strides = [1, 1]} : vector<8x384xf32> to vector<8x128xf32>
    %222 = vector.extract_strided_slice %202 {offsets = [0, 256], sizes = [8, 128], strides = [1, 1]} : vector<8x384xf32> to vector<8x128xf32>
    %223 = arith.addf %222, %17 : vector<8x128xf32>
    %224 = arith.mulf %212, %223 : vector<8x128xf32>
    %225 = arith.addf %221, %224 : vector<8x128xf32>
    %226 = math.tanh %225 : vector<8x128xf32>
    %cst_74 = arith.constant 1.000000e+00 : f32
    %227 = vector.broadcast %cst_74 : f32 to vector<8x128xf32>
    %228 = arith.subf %227, %220 : vector<8x128xf32>
    %229 = arith.mulf %228, %226 : vector<8x128xf32>
    %230 = arith.mulf %220, %195 : vector<8x128xf32>
    %231 = arith.addf %229, %230 : vector<8x128xf32>
    %232 = arith.index_cast %199 : i32 to index
    %c0_75 = arith.constant 0 : index
    %233 = vector.load %arg9[%232, %c0_75] : memref<48x128xf32, #tpu.memory_space<vmem>>, vector<8x128xf32>
    tpu.vector_store %arg9[%232, %c0_75], %231 {strides = array<i32>} : memref<48x128xf32, #tpu.memory_space<vmem>>, vector<8x128xf32>,
    %c6_i32 = arith.constant 6 : i32
    %c0_76 = arith.constant 0 : index
    %c0_77 = arith.constant 0 : index
    %c0_78 = arith.constant 0 : index
    %234 = vector.load %arg8[%c0_76, %c0_77, %c0_78] : memref<1x8x128xf32, #tpu.memory_space<vmem>>, vector<1x8x128xf32>
    %235 = vector.shape_cast %234 : vector<1x8x128xf32> to vector<8x128xf32>
    %236 = vector.shape_cast %231 : vector<8x128xf32> to vector<1x8x128xf32>
    tpu.vector_store %arg8[%c0_76, %c0_77, %c0_78], %236 {strides = array<i32>} : memref<1x8x128xf32, #tpu.memory_space<vmem>>, vector<1x8x128xf32>,
    %c1_i32_79 = arith.constant 1 : i32
    %237 = arith.cmpi eq, %arg0, %c1_i32_79 : i32
    %238 = arith.extui %237 : i1 to i32
    %c0_i32_80 = arith.constant 0 : i32
    %239 = arith.cmpi ne, %238, %c0_i32_80 : i32
    scf.if %239 {
      %c0_81 = arith.constant 0 : index
      %c0_82 = arith.constant 0 : index
      %240 = vector.load %arg9[%c0_81, %c0_82] : memref<48x128xf32, #tpu.memory_space<vmem>>, vector<48x128xf32>
      %cst_83 = arith.constant 0.000000e+00 : f32
      %241 = vector.broadcast %cst_83 : f32 to vector<48x128xf32>
      %242 = arith.maximumf %240, %241 : vector<48x128xf32>
      %c0_84 = arith.constant 0 : index
      %c0_85 = arith.constant 0 : index
      %243 = vector.load %arg7[%c0_84, %c0_85] : memref<48x128xf32, #tpu.memory_space<vmem>>, vector<48x128xf32>
      tpu.vector_store %arg7[%c0_84, %c0_85], %242 {strides = array<i32>} : memref<48x128xf32, #tpu.memory_space<vmem>>, vector<48x128xf32>,
    } else {
    }
    return
  }
  func.func @transform_0(%arg0: i32) -> (i32, i32) {
    %c0_i32 = arith.constant 0 : i32
    %c0_i32_0 = arith.constant 0 : i32
    %c0_i32_1 = arith.constant 0 : i32
    return %c0_i32, %c0_i32_0 : i32, i32
  }
  func.func @transform_1(%arg0: i32) -> (i32, i32, i32) {
    %c0_i32 = arith.constant 0 : i32
    %c0_i32_0 = arith.constant 0 : i32
    %c0_i32_1 = arith.constant 0 : i32
    return %arg0, %c0_i32, %c0_i32_0 : i32, i32, i32
  }
  func.func @transform_2(%arg0: i32) -> (i32, i32, i32) {
    %c0_i32 = arith.constant 0 : i32
    %c0_i32_0 = arith.constant 0 : i32
    %c0_i32_1 = arith.constant 0 : i32
    return %arg0, %c0_i32, %c0_i32_0 : i32, i32, i32
  }
  func.func @transform_3(%arg0: i32) -> (i32, i32, i32) {
    %c0_i32 = arith.constant 0 : i32
    %c0_i32_0 = arith.constant 0 : i32
    %c0_i32_1 = arith.constant 0 : i32
    return %arg0, %c0_i32, %c0_i32_0 : i32, i32, i32
  }
  func.func @transform_4(%arg0: i32) -> (i32, i32, i32) {
    %c0_i32 = arith.constant 0 : i32
    %c0_i32_0 = arith.constant 0 : i32
    %c0_i32_1 = arith.constant 0 : i32
    return %arg0, %c0_i32, %c0_i32_0 : i32, i32, i32
  }
  func.func @transform_5(%arg0: i32) -> (i32, i32, i32) {
    %c0_i32 = arith.constant 0 : i32
    %c0_i32_0 = arith.constant 0 : i32
    %c0_i32_1 = arith.constant 0 : i32
    return %arg0, %c0_i32, %c0_i32_0 : i32, i32, i32
  }
  func.func @transform_6(%arg0: i32) -> (i32, i32) {
    %c0_i32 = arith.constant 0 : i32
    %c0_i32_0 = arith.constant 0 : i32
    %c0_i32_1 = arith.constant 0 : i32
    return %c0_i32, %c0_i32_0 : i32, i32
  }
  func.func @transform_7(%arg0: i32) -> (i32, i32, i32) {
    %c0_i32 = arith.constant 0 : i32
    %c0_i32_0 = arith.constant 0 : i32
    %c0_i32_1 = arith.constant 0 : i32
    return %arg0, %c0_i32, %c0_i32_0 : i32, i32, i32
  }
}

</mosaic_0001>

<llo_original>
// kernel: gru_forward.3
$region0: #{gru_forward.3}
  #allocation0 [shape = 'u32[]', space=smem, size = 0x4, offset = 0x4, fixed_abs, tag = 'smem constant byte address 0x4 - core index']
  #allocation1 [shape = 'u32[144,128]{1,0:T(1,128)}', space=vmem, size = 0x12000, scoped, tag = 'internal scratch']
  %s0 = inlined_call_operand.vmem [shape: f32[48,128], index: 0, kind: input, shape index: {}]
  %s1 = inlined_call_operand.vmem [shape: f32[128,128], index: 1, kind: input, shape index: {}]
  %s2 = inlined_call_operand.vmem [shape: f32[1,128], index: 2, kind: input, shape index: {}]
  %s3 = inlined_call_operand.vmem [shape: f32[48,128], index: 3, kind: output, shape index: {}]
  %s4 = sld [smem:[#allocation0]]
  $region45: #{gru_forward.3} parent=0
    _
  %s6 = ssub.s32 1, %s4
  %s7 = scalar_select 0, %s6, %s4
  loop: start=0, step=1, limit=5
  $region2: #{gru_forward.3} parent=0 // loop_pre_header
    _
  $region3: #{gru_forward.3} parent=0 // loop_header
    %s9 = sphi 0, %s13
    %p10 = scmp.ge.s32.totalorder %s9, 5
    %s19 = sphi 0, %s21
    %s22 = sphi 0, %s19
    %s23 = sphi 0, %s22
    %s39 = sphi 0, %s23
    %s43 = sphi 0, %s43
    %s45 = sphi 0, %s43
    %s46 = sphi 0, %s45
    %s60 = sphi 0, %s46
    %s64 = sphi 0, %s64
    %s66 = sphi 0, %s64
    %s67 = sphi 0, %s66
    %s81 = sphi 0, %s67
    %s87 = sphi 0, %s89
    %s90 = sphi 0, %s87
    %s91 = sphi 0, %s90
    %s107 = sphi 0, %s91
  $region4: #{gru_forward.3} parent=0 // loop_header_branch
    %12 = sbr.rel (%p10) target = $region8
  $region5: #{gru_forward.3} parent=0 // loop_body
    %s14 = ssub.s32 %s9, 1
    %s15 = ssub.s32 %s9, 2
    %s16 = sadd.s32 %s9, 1
    %s17 = ssub.s32 %s9, %s16
    %p18 = scmp.eq.s32.totalorder %s17, 0
    %s20 = sadd.s32 %s19, 1
    %s21 = scalar_select %p18, %s19, %s20
    %p24 = pneg %p18
    %p25 = scmp.eq.s32.totalorder %s9, 2
    %p26 = por %p24, %p25
    %p27 = scmp.ne.s32.totalorder %s19, %s22
    %p28 = scmp.eq.s32.totalorder %s9, 0
    %p29 = por %p27, %p28
    %p30 = scmp.ne.s32.totalorder %s19, %s22
    %p31 = scmp.eq.s32.totalorder %s14, 2
    %p32 = por %p30, %p31
    %p33 = scmp.ne.s32.totalorder %s22, %s23
    %p34 = scmp.eq.s32.totalorder %s14, 0
    %p35 = por %p33, %p34
    %p36 = scmp.ne.s32.totalorder %s22, %s23
    %p37 = scmp.eq.s32.totalorder %s15, 2
    %p38 = por %p36, %p37
    %p40 = scmp.ne.s32.totalorder %s23, %s39
    %p41 = scmp.eq.s32.totalorder %s15, 0
    %p42 = por %p40, %p41
    %s44 = sadd.s32 %s43, 1
    %p47 = scmp.eq.s32.totalorder %s9, 2
    %p48 = scmp.ne.s32.totalorder %s43, %s45
    %p49 = scmp.eq.s32.totalorder %s9, 0
    %p50 = por %p48, %p49
    %p51 = scmp.ne.s32.totalorder %s43, %s45
    %p52 = scmp.eq.s32.totalorder %s14, 2
    %p53 = por %p51, %p52
    %p54 = scmp.ne.s32.totalorder %s45, %s46
    %p55 = scmp.eq.s32.totalorder %s14, 0
    %p56 = por %p54, %p55
    %p57 = scmp.ne.s32.totalorder %s45, %s46
    %p58 = scmp.eq.s32.totalorder %s15, 2
    %p59 = por %p57, %p58
    %p61 = scmp.ne.s32.totalorder %s46, %s60
    %p62 = scmp.eq.s32.totalorder %s15, 0
    %p63 = por %p61, %p62
    %s65 = sadd.s32 %s64, 1
    %p68 = scmp.eq.s32.totalorder %s9, 2
    %p69 = scmp.ne.s32.totalorder %s64, %s66
    %p70 = scmp.eq.s32.totalorder %s9, 0
    %p71 = por %p69, %p70
    %p72 = scmp.ne.s32.totalorder %s64, %s66
    %p73 = scmp.eq.s32.totalorder %s14, 2
    %p74 = por %p72, %p73
    %p75 = scmp.ne.s32.totalorder %s66, %s67
    %p76 = scmp.eq.s32.totalorder %s14, 0
    %p77 = por %p75, %p76
    %p78 = scmp.ne.s32.totalorder %s66, %s67
    %p79 = scmp.eq.s32.totalorder %s15, 2
    %p80 = por %p78, %p79
    %p82 = scmp.ne.s32.totalorder %s67, %s81
    %p83 = scmp.eq.s32.totalorder %s15, 0
    %p84 = por %p82, %p83
    %s85 = ssub.s32 %s9, %s16
    %p86 = scmp.eq.s32.totalorder %s85, 0
    %s88 = sadd.s32 %s87, 1
    %s89 = scalar_select %p86, %s87, %s88
    %p92 = pneg %p86
    %p93 = scmp.eq.s32.totalorder %s9, 2
    %p94 = por %p92, %p93
    %p95 = scmp.ne.s32.totalorder %s87, %s90
    %p96 = scmp.eq.s32.totalorder %s9, 0
    %p97 = por %p95, %p96
    %p98 = scmp.ne.s32.totalorder %s87, %s90
    %p99 = scmp.eq.s32.totalorder %s14, 2
    %p100 = por %p98, %p99
    %p101 = scmp.ne.s32.totalorder %s90, %s91
    %p102 = scmp.eq.s32.totalorder %s14, 0
    %p103 = por %p101, %p102
    %p104 = scmp.ne.s32.totalorder %s90, %s91
    %p105 = scmp.eq.s32.totalorder %s15, 2
    %p106 = por %p104, %p105
    %p108 = scmp.ne.s32.totalorder %s91, %s107
    %p109 = scmp.eq.s32.totalorder %s15, 0
    %p110 = por %p108, %p109
    %p111 = scmp.le.s32.totalorder 1, %s9
    %p112 = scmp.lt.s32.totalorder %s9, 4
    %p113 = pnand %p111, %p112
    %p114 = pneg %p113
    // Predicated region
    $region9: #{gru_forward.3} parent=5 // pred_check
      _
    $region10: #{gru_forward.3} parent=5 // pred_check_branch
      %116 = sbr.rel (%p113) target = $region12
    $region11: #{gru_forward.3} parent=5 // pred_region
      %s117 = ssub.s32 %s9, 1
      // Predicated region
      $region13: #{gru_forward.3} parent=11 // pred_check
        %p118 = pneg %p56
      $region14: #{gru_forward.3} parent=11 // pred_check_branch
        %120 = sbr.rel (%p118) target = $region16
      $region15: #{gru_forward.3} parent=11 // pred_region
        _
      $region16: #{gru_forward.3} parent=11 // pred_fallthru
        _
      // Predicated region
      $region17: #{gru_forward.3} parent=11 // pred_check
        %p121 = pneg %p77
      $region18: #{gru_forward.3} parent=11 // pred_check_branch
        %123 = sbr.rel (%p121) target = $region20
      $region19: #{gru_forward.3} parent=11 // pred_region
        _
      $region20: #{gru_forward.3} parent=11 // pred_fallthru
        _
    $region12: #{gru_forward.3} parent=5 // pred_fallthru
      _
    %p124 = scmp.lt.s32.totalorder %s9, 3
    // Predicated region
    $region21: #{gru_forward.3} parent=5 // pred_check
      %p125 = pneg %p124
    $region22: #{gru_forward.3} parent=5 // pred_check_branch
      %127 = sbr.rel (%p125) target = $region24
    $region23: #{gru_forward.3} parent=5 // pred_region
      // Predicated region
      $region25: #{gru_forward.3} parent=23 // pred_check
        %p128 = pneg %p29
      $region26: #{gru_forward.3} parent=23 // pred_check_branch
        %130 = sbr.rel (%p128) target = $region28
      $region27: #{gru_forward.3} parent=23 // pred_region
        %s131 = smul.u32 2, %s9
        %p132 = scmp.lt.s32.totalorder %s131, 5
        %s133 = scalar_select %p132, %s131, 5
        %s134 = smul.addr %s133, 8
        %s135 = scalar_lea.vmem %s0, %s134
        %s136 = smul.u32 2, %s9
      $region28: #{gru_forward.3} parent=23 // pred_fallthru
        _
    $region24: #{gru_forward.3} parent=5 // pred_fallthru
      _
    %p137 = scmp.le.s32.totalorder 1, %s9
    %p138 = scmp.lt.s32.totalorder %s9, 4
    %p139 = pnand %p137, %p138
    %p140 = pneg %p139
    // Predicated region
    $region29: #{gru_forward.3} parent=5 // pred_check
      _
    $region30: #{gru_forward.3} parent=5 // pred_check_branch
      %142 = sbr.rel (%p139) target = $region32
    $region31: #{gru_forward.3} parent=5 // pred_region
      %s143 = ssub.s32 %s9, 1
      %s144 = smul.u32 2, %s14
      %p145 = scmp.lt.s32.totalorder %s144, 5
      %s146 = scalar_select %p145, %s144, 5
      %s147 = smul.addr %s146, 8
      %s148 = scalar_lea.vmem %s0, %s147
      %p149 = pneg %p35
      %p150 = pneg %p32
      %p151 = pneg %p56
      %p152 = pneg %p53
      %p153 = pneg %p77
      %p154 = pneg %p74
      %p155 = pneg %p103
      %p156 = pneg %p100
      %s157 = smul.u32 2, %s14
      %p158 = scmp.lt.s32.totalorder %s157, 5
      %s159 = scalar_select %p158, %s157, 5
      %s160 = smul.addr %s159, 8
      %s161 = scalar_lea.vmem %s3, %s160
      %s162 = smul.u32 2, %s14
      %p163 = scmp.lt.s32.totalorder %s162, 5
      %s164 = scalar_select %p163, %s162, 5
      %s165 = smul.addr %s164, 8
      %s166 = scalar_lea.vmem %s0, %s165
      %s167 = smul.u32 2, %s14
      %s168 = smul.u32 2, %s14
      %p169 = scmp.lt.s32.totalorder %s168, 5
      %s170 = scalar_select %p169, %s168, 5
      %s171 = smul.addr %s170, 8
      %s172 = scalar_lea.vmem %s3, %s171
      %s173 = smul.u32 2, %s14
      %v174 = vld [vmem:[%s166] sm:$0xff]
      %v175 = vld [vmem:[%s166 + $0x8] sm:$0xff]
      %v176 = vld [vmem:[%s1] sm:$0xff]
      %v177 = vld [vmem:[%s1 + $0x8] sm:$0xff]
      %v178 = vld [vmem:[%s1 + $0x10] sm:$0xff]
      %v179 = vld [vmem:[%s1 + $0x18] sm:$0xff]
      %v180 = vld [vmem:[%s1 + $0x20] sm:$0xff]
      %v181 = vld [vmem:[%s1 + $0x28] sm:$0xff]
      %v182 = vld [vmem:[%s1 + $0x30] sm:$0xff]
      %v183 = vld [vmem:[%s1 + $0x38] sm:$0xff]
      %v184 = vld [vmem:[%s1 + $0x40] sm:$0xff]
      %v185 = vld [vmem:[%s1 + $0x48] sm:$0xff]
      %v186 = vld [vmem:[%s1 + $0x50] sm:$0xff]
      %v187 = vld [vmem:[%s1 + $0x58] sm:$0xff]
      %v188 = vld [vmem:[%s1 + $0x60] sm:$0xff]
      %v189 = vld [vmem:[%s1 + $0x68] sm:$0xff]
      %v190 = vld [vmem:[%s1 + $0x70] sm:$0xff]
      %v191 = vld [vmem:[%s1 + $0x78] sm:$0xff]
      %v192 = vld [vmem:[%s2] sm:$0x1]
      %v194 = vlaneseq
      %v195 = vshrl.u32 %v194, 7
      %v196 = vsub.s32 0, %v195
      %v197 = vrot.slane %v192, %v196
      %199 = vmatprep.subr.mxu0 0.0
      %200 = vmatpush1.msra.mxu0 %v176
      %201 = vmatprep.subr.mxu0 0.0
      %202 = vmatpush1.msra.mxu0 %v177
      %203 = vmatprep.subr.mxu0 0.0
      %204 = vmatpush1.msra.mxu0 %v178
      %205 = vmatprep.subr.mxu0 0.0
      %206 = vmatpush1.msra.mxu0 %v179
      %207 = vmatprep.subr.mxu0 0.0
      %208 = vmatpush1.msra.mxu0 %v180
      %209 = vmatprep.subr.mxu0 0.0
      %210 = vmatpush1.msra.mxu0 %v181
      %211 = vmatprep.subr.mxu0 0.0
      %212 = vmatpush1.msra.mxu0 %v182
      %213 = vmatprep.subr.mxu0 0.0
      %214 = vmatpush1.msra.mxu0 %v183
      %215 = vmatprep.subr.mxu0 0.0
      %216 = vmatpush1.msra.mxu0 %v184
      %217 = vmatprep.subr.mxu0 0.0
      %218 = vmatpush1.msra.mxu0 %v185
      %219 = vmatprep.subr.mxu0 0.0
      %220 = vmatpush1.msra.mxu0 %v186
      %221 = vmatprep.subr.mxu0 0.0
      %222 = vmatpush1.msra.mxu0 %v187
      %223 = vmatprep.subr.mxu0 0.0
      %224 = vmatpush1.msra.mxu0 %v188
      %225 = vmatprep.subr.mxu0 0.0
      %226 = vmatpush1.msra.mxu0 %v189
      %227 = vmatprep.subr.mxu0 0.0
      %228 = vmatpush1.msra.mxu0 %v190
      %229 = vmatprep.subr.mxu0 0.0
      %230 = vmatpush1.msra.mxu0 %v191
      %231 = vmatprep.subr.mxu0 0.0
      %232 = vmatpush1.msra.mxu0 0.0
      %233 = vmatprep.subr.mxu0 0.0
      %234 = vmatpush1.msra.mxu0 0.0
      %235 = vmatprep.subr.mxu0 0.0
      %236 = vmatpush1.msra.mxu0 0.0
      %237 = vmatprep.subr.mxu0 0.0
      %238 = vmatpush1.msra.mxu0 0.0
      %239 = vmatprep.subr.mxu0 0.0
      %240 = vmatpush1.msra.mxu0 0.0
      %241 = vmatprep.subr.mxu0 0.0
      %242 = vmatpush1.msra.mxu0 0.0
      %243 = vmatprep.subr.mxu0 0.0
      %244 = vmatpush1.msra.mxu0 0.0
      %245 = vmatprep.subr.mxu0 0.0
      %246 = vmatpush1.msra.mxu0 0.0
      %247 = vmatprep.subr.mxu0 0.0
      %248 = vmatpush1.msra.mxu0 0.0
      %249 = vmatprep.subr.mxu0 0.0
      %250 = vmatpush1.msra.mxu0 0.0
      %251 = vmatprep.subr.mxu0 0.0
      %252 = vmatpush1.msra.mxu0 0.0
      %253 = vmatprep.subr.mxu0 0.0
      %254 = vmatpush1.msra.mxu0 0.0
      %255 = vmatprep.subr.mxu0 0.0
      %256 = vmatpush1.msra.mxu0 0.0
      %257 = vmatprep.subr.mxu0 0.0
      %258 = vmatpush1.msra.mxu0 0.0
      %259 = vmatprep.subr.mxu0 0.0
      %260 = vmatpush1.msra.mxu0 0.0
      %261 = vmatprep.subr.mxu0 0.0
      %262 = vmatpush1.msra.mxu0 0.0
      %263 = vmatprep.mubr.f32.mxu0 0.0
      %264 = vmatmul.mubr.f32.gmra.mrb[0].mxu0 %v174
      %v265 = vpop.f32.mrb[0].mxu0
      %v266 = vadd.f32 %v197, %v265
      %v267 = vpop.f32.mrb[0].mxu0
      %268 = vmatprep.mubr.f32.mxu0 0.0
      %269 = vmatmul.mubr.f32.gmra.mrb[0].mxu0 %v175
      %v270 = vpop.f32.mrb[0].mxu0
      %v271 = vadd.f32 %v197, %v270
      %v272 = vpop.f32.mrb[0].mxu0
      %273 = vdwg.mxu0
      %274 = vmax.xlane.f32.xlu0 %v266
      %v275 = vpop.xlane.xlu0 %274
      %276 = vmax.xlane.f32.xlu0 %v271
      %v277 = vpop.xlane.xlu0 %276
      %v278 = vsub.f32 %v266, %v275
      %v279 = vsub.f32 %v271, %v277
      %v280 = vmul.f32 %v278, 1.442695
      %v281 = vpow.pop %v280
      %v282 = vmul.f32 %v279, 1.442695
      %v283 = vpow.pop %v282
      %284 = vadd.xlane.f32.xlu0 %v281
      %v285 = vpop.xlane.xlu0 %284
      %286 = vadd.xlane.f32.xlu0 %v283
      %v287 = vpop.xlane.xlu0 %286
      %v288 = vlog2.pop %v285
      %v289 = vmul.f32 %v288, 0.6931472
      %v290 = vlog2.pop %v287
      %v291 = vmul.f32 %v290, 0.6931472
      %v292 = vsub.f32 %v278, %v289
      %v293 = vsub.f32 %v279, %v291
      %294 = vst [vmem:[%s172] sm:$0xff] %v292
      %295 = vst [vmem:[%s172 + $0x8] sm:$0xff] %v293
      %s296 = smul.u32 2, %s14
      %p297 = scmp.lt.s32.totalorder %s296, 5
      %s298 = scalar_select %p297, %s296, 5
      %s299 = smul.addr %s298, 8
      %s300 = scalar_lea.vmem %s3, %s299
      // Predicated region
      $region33: #{gru_forward.3} parent=31 // pred_check
        %p301 = pneg %p100
      $region34: #{gru_forward.3} parent=31 // pred_check_branch
        %303 = sbr.rel (%p301) target = $region36
      $region35: #{gru_forward.3} parent=31 // pred_region
        %s304 = smul.u32 2, %s14
      $region36: #{gru_forward.3} parent=31 // pred_fallthru
        _
    $region32: #{gru_forward.3} parent=5 // pred_fallthru
      _
    %p305 = scmp.le.s32.totalorder 2, %s9
    // Predicated region
    $region37: #{gru_forward.3} parent=5 // pred_check
      %p306 = pneg %p305
    $region38: #{gru_forward.3} parent=5 // pred_check_branch
      %308 = sbr.rel (%p306) target = $region40
    $region39: #{gru_forward.3} parent=5 // pred_region
      %s309 = ssub.s32 %s9, 2
      // Predicated region
      $region41: #{gru_forward.3} parent=39 // pred_check
        %p310 = pneg %p106
      $region42: #{gru_forward.3} parent=39 // pred_check_branch
        %312 = sbr.rel (%p310) target = $region44
      $region43: #{gru_forward.3} parent=39 // pred_region
        %s313 = smul.u32 2, %s15
        %p314 = scmp.lt.s32.totalorder %s313, 5
        %s315 = scalar_select %p314, %s313, 5
        %s316 = smul.addr %s315, 8
        %s317 = scalar_lea.vmem %s3, %s316
      $region44: #{gru_forward.3} parent=39 // pred_fallthru
        _
    $region40: #{gru_forward.3} parent=5 // pred_fallthru
      _
  $region6: #{gru_forward.3} parent=0 // loop_footer
    %s13 = sadd.s32 1, %s9
  $region7: #{gru_forward.3} parent=0 // loop_footer_branch
    %8 = sbr.rel target = $region3
  $region8: #{gru_forward.3} parent=0 // loop_exit
    _

// kernel: gru_forward.2
$region0: #{gru_forward.2}
  #allocation0 [shape = 'u32[]', space=smem, size = 0x4, offset = 0x4, fixed_abs, tag = 'smem constant byte address 0x4 - core index']
  #allocation1 [shape = 'u32[144,128]{1,0:T(1,128)}', space=vmem, size = 0x12000, scoped, tag = 'internal scratch']
  #allocation2 [shape = 'f32[48,128]{1,0:T(8,128)}', space=vmem, size = 0x6000, scoped, tag = 'scratch operand']
  #allocation3 [shape = 'f32[48,384]{1,0:T(8,128)}', space=vmem, size = 0x12000, scoped, tag = 'scratch operand']
  %s0 = inlined_call_operand.vmem [shape: f32[48,128], index: 0, kind: input, shape index: {}]
  %s1 = inlined_call_operand.vmem [shape: f32[2,8,128], index: 1, kind: input, shape index: {}]
  %s2 = inlined_call_operand.hbm [shape: f32[2,128,384], index: 2, kind: input, shape index: {}]
  %s3 = inlined_call_operand.hbm [shape: f32[2,128,384], index: 3, kind: input, shape index: {}]
  %s4 = inlined_call_operand.vmem [shape: f32[2,1,384], index: 4, kind: input, shape index: {}]
  %s5 = inlined_call_operand.vmem [shape: f32[2,1,128], index: 5, kind: input, shape index: {}]
  %s6 = inlined_call_operand.vmem [shape: f32[48,128], index: 6, kind: output, shape index: {0}]
  %s7 = inlined_call_operand.hbm [shape: f32[2,8,128], index: 7, kind: output, shape index: {1}]
  %8 = xla_tuple %s6, %s7
  %s9 = sld [smem:[#allocation0]]
  $region81: #{gru_forward.2} parent=0
    _
  %s11 = ssub.s32 1, %s9
  %s12 = scalar_select 0, %s11, %s9
  $region1: #{gru_forward.2} parent=0
    #allocation4 [shape = 'u8[393216]{0}', space=vmem, size = 0x60000, scoped, tag = 'input window, operand 2']
    #allocation5 [shape = 's32[2]{0}', space=sflag, size = 0x8, scoped, tag = 'scoped memory for gru_forward.2']
    #allocation6 [shape = 's32[2]{0}', space=sflag, size = 0x8, scoped, tag = 'scoped memory for gru_forward.2']
    #allocation7 [shape = 'u8[393216]{0}', space=vmem, size = 0x60000, scoped, tag = 'input window, operand 3']
    #allocation8 [shape = 's32[2]{0}', space=sflag, size = 0x8, scoped, tag = 'scoped memory for gru_forward.2']
    #allocation9 [shape = 'u8[8192]{0}', space=vmem, size = 0x2000, scoped, tag = 'output window, operand 1']
    %13 = vsyncpa [#allocation5], 0
    %s14 = scalar_lea.sflag [#allocation5], 1
    %15 = vsyncpa %s14, 0
    %16 = vsyncpa [#allocation8], 0
    %s17 = scalar_lea.sflag [#allocation8], 1
    %18 = vsyncpa %s17, 0
    %19 = vsyncpa [#allocation6], 0
    %s20 = scalar_lea.sflag [#allocation6], 1
    %21 = vsyncpa %s20, 0
    loop: start=0, step=1, limit=4
    $region2: #{gru_forward.2} parent=1 // loop_pre_header
      _
    $region3: #{gru_forward.2} parent=1 // loop_header
      %s23 = sphi 0, %s27
      %p24 = scmp.ge.s32.totalorder %s23, 4
      %s31 = sphi 0, %s31
      %s33 = sphi 0, %s31
      %s34 = sphi 0, %s33
      %s48 = sphi 0, %s34
      %s54 = sphi 0, %s56
      %s57 = sphi 0, %s54
      %s58 = sphi 0, %s57
      %s74 = sphi 0, %s58
      %s80 = sphi 0, %s82
      %s83 = sphi 0, %s80
      %s84 = sphi 0, %s83
      %s100 = sphi 0, %s84
      %s106 = sphi 0, %s108
      %s109 = sphi 0, %s106
      %s110 = sphi 0, %s109
      %s126 = sphi 0, %s110
      %s132 = sphi 0, %s134
      %s135 = sphi 0, %s132
      %s136 = sphi 0, %s135
      %s152 = sphi 0, %s136
      %s158 = sphi 0, %s160
      %s161 = sphi 0, %s158
      %s162 = sphi 0, %s161
      %s178 = sphi 0, %s162
      %s182 = sphi 0, %s182
      %s184 = sphi 0, %s182
      %s185 = sphi 0, %s184
      %s199 = sphi 0, %s185
      %s205 = sphi 0, %s207
      %s208 = sphi 0, %s205
      %s209 = sphi 0, %s208
      %s225 = sphi 0, %s209
    $region4: #{gru_forward.2} parent=1 // loop_header_branch
      %26 = sbr.rel (%p24) target = $region8
    $region5: #{gru_forward.2} parent=1 // loop_body
      %s28 = ssub.s32 %s23, 1
      %s29 = ssub.s32 %s23, 2
      %s30 = sadd.s32 %s23, 1
      %s32 = sadd.s32 %s31, 1
      %p35 = scmp.eq.s32.totalorder %s23, 1
      %p36 = scmp.ne.s32.totalorder %s31, %s33
      %p37 = scmp.eq.s32.totalorder %s23, 0
      %p38 = por %p36, %p37
      %p39 = scmp.ne.s32.totalorder %s31, %s33
      %p40 = scmp.eq.s32.totalorder %s28, 1
      %p41 = por %p39, %p40
      %p42 = scmp.ne.s32.totalorder %s33, %s34
      %p43 = scmp.eq.s32.totalorder %s28, 0
      %p44 = por %p42, %p43
      %p45 = scmp.ne.s32.totalorder %s33, %s34
      %p46 = scmp.eq.s32.totalorder %s29, 1
      %p47 = por %p45, %p46
      %p49 = scmp.ne.s32.totalorder %s34, %s48
      %p50 = scmp.eq.s32.totalorder %s29, 0
      %p51 = por %p49, %p50
      %s52 = ssub.s32 %s23, %s30
      %p53 = scmp.eq.s32.totalorder %s52, 0
      %s55 = sadd.s32 %s54, 1
      %s56 = scalar_select %p53, %s54, %s55
      %p59 = pneg %p53
      %p60 = scmp.eq.s32.totalorder %s23, 1
      %p61 = por %p59, %p60
      %p62 = scmp.ne.s32.totalorder %s54, %s57
      %p63 = scmp.eq.s32.totalorder %s23, 0
      %p64 = por %p62, %p63
      %p65 = scmp.ne.s32.totalorder %s54, %s57
      %p66 = scmp.eq.s32.totalorder %s28, 1
      %p67 = por %p65, %p66
      %p68 = scmp.ne.s32.totalorder %s57, %s58
      %p69 = scmp.eq.s32.totalorder %s28, 0
      %p70 = por %p68, %p69
      %p71 = scmp.ne.s32.totalorder %s57, %s58
      %p72 = scmp.eq.s32.totalorder %s29, 1
      %p73 = por %p71, %p72
      %p75 = scmp.ne.s32.totalorder %s58, %s74
      %p76 = scmp.eq.s32.totalorder %s29, 0
      %p77 = por %p75, %p76
      %s78 = ssub.s32 %s23, %s30
      %p79 = scmp.eq.s32.totalorder %s78, 0
      %s81 = sadd.s32 %s80, 1
      %s82 = scalar_select %p79, %s80, %s81
      %p85 = pneg %p79
      %p86 = scmp.eq.s32.totalorder %s23, 1
      %p87 = por %p85, %p86
      %p88 = scmp.ne.s32.totalorder %s80, %s83
      %p89 = scmp.eq.s32.totalorder %s23, 0
      %p90 = por %p88, %p89
      %p91 = scmp.ne.s32.totalorder %s80, %s83
      %p92 = scmp.eq.s32.totalorder %s28, 1
      %p93 = por %p91, %p92
      %p94 = scmp.ne.s32.totalorder %s83, %s84
      %p95 = scmp.eq.s32.totalorder %s28, 0
      %p96 = por %p94, %p95
      %p97 = scmp.ne.s32.totalorder %s83, %s84
      %p98 = scmp.eq.s32.totalorder %s29, 1
      %p99 = por %p97, %p98
      %p101 = scmp.ne.s32.totalorder %s84, %s100
      %p102 = scmp.eq.s32.totalorder %s29, 0
      %p103 = por %p101, %p102
      %s104 = ssub.s32 %s23, %s30
      %p105 = scmp.eq.s32.totalorder %s104, 0
      %s107 = sadd.s32 %s106, 1
      %s108 = scalar_select %p105, %s106, %s107
      %p111 = pneg %p105
      %p112 = scmp.eq.s32.totalorder %s23, 1
      %p113 = por %p111, %p112
      %p114 = scmp.ne.s32.totalorder %s106, %s109
      %p115 = scmp.eq.s32.totalorder %s23, 0
      %p116 = por %p114, %p115
      %p117 = scmp.ne.s32.totalorder %s106, %s109
      %p118 = scmp.eq.s32.totalorder %s28, 1
      %p119 = por %p117, %p118
      %p120 = scmp.ne.s32.totalorder %s109, %s110
      %p121 = scmp.eq.s32.totalorder %s28, 0
      %p122 = por %p120, %p121
      %p123 = scmp.ne.s32.totalorder %s109, %s110
      %p124 = scmp.eq.s32.totalorder %s29, 1
      %p125 = por %p123, %p124
      %p127 = scmp.ne.s32.totalorder %s110, %s126
      %p128 = scmp.eq.s32.totalorder %s29, 0
      %p129 = por %p127, %p128
      %s130 = ssub.s32 %s23, %s30
      %p131 = scmp.eq.s32.totalorder %s130, 0
      %s133 = sadd.s32 %s132, 1
      %s134 = scalar_select %p131, %s132, %s133
      %p137 = pneg %p131
      %p138 = scmp.eq.s32.totalorder %s23, 1
      %p139 = por %p137, %p138
      %p140 = scmp.ne.s32.totalorder %s132, %s135
      %p141 = scmp.eq.s32.totalorder %s23, 0
      %p142 = por %p140, %p141
      %p143 = scmp.ne.s32.totalorder %s132, %s135
      %p144 = scmp.eq.s32.totalorder %s28, 1
      %p145 = por %p143, %p144
      %p146 = scmp.ne.s32.totalorder %s135, %s136
      %p147 = scmp.eq.s32.totalorder %s28, 0
      %p148 = por %p146, %p147
      %p149 = scmp.ne.s32.totalorder %s135, %s136
      %p150 = scmp.eq.s32.totalorder %s29, 1
      %p151 = por %p149, %p150
      %p153 = scmp.ne.s32.totalorder %s136, %s152
      %p154 = scmp.eq.s32.totalorder %s29, 0
      %p155 = por %p153, %p154
      %s156 = ssub.s32 %s23, %s30
      %p157 = scmp.eq.s32.totalorder %s156, 0
      %s159 = sadd.s32 %s158, 1
      %s160 = scalar_select %p157, %s158, %s159
      %p163 = pneg %p157
      %p164 = scmp.eq.s32.totalorder %s23, 1
      %p165 = por %p163, %p164
      %p166 = scmp.ne.s32.totalorder %s158, %s161
      %p167 = scmp.eq.s32.totalorder %s23, 0
      %p168 = por %p166, %p167
      %p169 = scmp.ne.s32.totalorder %s158, %s161
      %p170 = scmp.eq.s32.totalorder %s28, 1
      %p171 = por %p169, %p170
      %p172 = scmp.ne.s32.totalorder %s161, %s162
      %p173 = scmp.eq.s32.totalorder %s28, 0
      %p174 = por %p172, %p173
      %p175 = scmp.ne.s32.totalorder %s161, %s162
      %p176 = scmp.eq.s32.totalorder %s29, 1
      %p177 = por %p175, %p176
      %p179 = scmp.ne.s32.totalorder %s162, %s178
      %p180 = scmp.eq.s32.totalorder %s29, 0
      %p181 = por %p179, %p180
      %s183 = sadd.s32 %s182, 1
      %p186 = scmp.eq.s32.totalorder %s23, 1
      %p187 = scmp.ne.s32.totalorder %s182, %s184
      %p188 = scmp.eq.s32.totalorder %s23, 0
      %p189 = por %p187, %p188
      %p190 = scmp.ne.s32.totalorder %s182, %s184
      %p191 = scmp.eq.s32.totalorder %s28, 1
      %p192 = por %p190, %p191
      %p193 = scmp.ne.s32.totalorder %s184, %s185
      %p194 = scmp.eq.s32.totalorder %s28, 0
      %p195 = por %p193, %p194
      %p196 = scmp.ne.s32.totalorder %s184, %s185
      %p197 = scmp.eq.s32.totalorder %s29, 1
      %p198 = por %p196, %p197
      %p200 = scmp.ne.s32.totalorder %s185, %s199
      %p201 = scmp.eq.s32.totalorder %s29, 0
      %p202 = por %p200, %p201
      %s203 = ssub.s32 %s23, %s30
      %p204 = scmp.eq.s32.totalorder %s203, 0
      %s206 = sadd.s32 %s205, 1
      %s207 = scalar_select %p204, %s205, %s206
      %p210 = pneg %p204
      %p211 = scmp.eq.s32.totalorder %s23, 1
      %p212 = por %p210, %p211
      %p213 = scmp.ne.s32.totalorder %s205, %s208
      %p214 = scmp.eq.s32.totalorder %s23, 0
      %p215 = por %p213, %p214
      %p216 = scmp.ne.s32.totalorder %s205, %s208
      %p217 = scmp.eq.s32.totalorder %s28, 1
      %p218 = por %p216, %p217
      %p219 = scmp.ne.s32.totalorder %s208, %s209
      %p220 = scmp.eq.s32.totalorder %s28, 0
      %p221 = por %p219, %p220
      %p222 = scmp.ne.s32.totalorder %s208, %s209
      %p223 = scmp.eq.s32.totalorder %s29, 1
      %p224 = por %p222, %p223
      %p226 = scmp.ne.s32.totalorder %s209, %s225
      %p227 = scmp.eq.s32.totalorder %s29, 0
      %p228 = por %p226, %p227
      %p229 = scmp.le.s32.totalorder 1, %s23
      %p230 = scmp.lt.s32.totalorder %s23, 3
      %p231 = pnand %p229, %p230
      %p232 = pneg %p231
      // Predicated region
      $region9: #{gru_forward.2} parent=5 // pred_check
        _
      $region10: #{gru_forward.2} parent=5 // pred_check_branch
        %234 = sbr.rel (%p231) target = $region12
      $region11: #{gru_forward.2} parent=5 // pred_region
        %s235 = ssub.s32 %s23, 1
        // Predicated region
        $region13: #{gru_forward.2} parent=11 // pred_check
          %p236 = pneg %p44
        $region14: #{gru_forward.2} parent=11 // pred_check_branch
          %238 = sbr.rel (%p236) target = $region16
        $region15: #{gru_forward.2} parent=11 // pred_region
          _
        $region16: #{gru_forward.2} parent=11 // pred_fallthru
          _
      $region12: #{gru_forward.2} parent=5 // pred_fallthru
        _
      %p239 = scmp.lt.s32.totalorder %s23, 2
      // Predicated region
      $region17: #{gru_forward.2} parent=5 // pred_check
        %p240 = pneg %p239
      $region18: #{gru_forward.2} parent=5 // pred_check_branch
        %242 = sbr.rel (%p240) target = $region20
      $region19: #{gru_forward.2} parent=5 // pred_region
        // Predicated region
        $region21: #{gru_forward.2} parent=19 // pred_check
          %p243 = pneg %p64
        $region22: #{gru_forward.2} parent=19 // pred_check_branch
          %245 = sbr.rel (%p243) target = $region24
        $region23: #{gru_forward.2} parent=19 // pred_region
          %p246 = scmp.lt.s32.totalorder %s23, 1
          %s247 = scalar_select %p246, %s23, 1
          %s248 = smul.addr %s247, 8
          %s249 = scalar_lea.vmem %s1, %s248
        $region24: #{gru_forward.2} parent=19 // pred_fallthru
          _
        // Predicated region
        $region25: #{gru_forward.2} parent=19 // pred_check
          %p250 = pneg %p90
        $region26: #{gru_forward.2} parent=19 // pred_check_branch
          %252 = sbr.rel (%p250) target = $region28
        $region27: #{gru_forward.2} parent=19 // pred_region
          %s253 = sand.u32 %s80, 1
          %s254 = scalar_lea.sflag [#allocation5], %s253
          %s255 = sand.u32 %s80, 1
          %s256 = smul.addr %s255, 384
          %s257 = scalar_lea.vmem [#allocation4], %s256
          %s259 = ssub.s32 6144, 6144
          %260 = vsyncadd %s254, %s259
          %s261 = smul.addr %s23, 48
          %s262 = smul.addr %s261, 128
          %s263 = scalar_lea.hbm %s2, %s262
          %s264 = sshll.u32 %s257, 4
          %s265 = int_to_ptr.vmem [resolvable:$true] %s264
          %270 = dma.hbm_to_vmem [thread:$0]  %s263, 6144, %s265, %s254, 384, 384, 24
        $region28: #{gru_forward.2} parent=19 // pred_fallthru
          _
        // Predicated region
        $region29: #{gru_forward.2} parent=19 // pred_check
          %p271 = pneg %p116
        $region30: #{gru_forward.2} parent=19 // pred_check_branch
          %273 = sbr.rel (%p271) target = $region32
        $region31: #{gru_forward.2} parent=19 // pred_region
          %s274 = sand.u32 %s106, 1
          %s275 = scalar_lea.sflag [#allocation8], %s274
          %s276 = sand.u32 %s106, 1
          %s277 = smul.addr %s276, 384
          %s278 = scalar_lea.vmem [#allocation7], %s277
          %s280 = ssub.s32 6144, 6144
          %281 = vsyncadd %s275, %s280
          %s282 = smul.addr %s23, 48
          %s283 = smul.addr %s282, 128
          %s284 = scalar_lea.hbm %s3, %s283
          %s285 = sshll.u32 %s278, 4
          %s286 = int_to_ptr.vmem [resolvable:$true] %s285
          %291 = dma.hbm_to_vmem [thread:$0]  %s284, 6144, %s286, %s275, 384, 384, 24
        $region32: #{gru_forward.2} parent=19 // pred_fallthru
          _
        // Predicated region
        $region33: #{gru_forward.2} parent=19 // pred_check
          %p292 = pneg %p142
        $region34: #{gru_forward.2} parent=19 // pred_check_branch
          %294 = sbr.rel (%p292) target = $region36
        $region35: #{gru_forward.2} parent=19 // pred_region
          %p295 = scmp.lt.s32.totalorder %s23, 1
          %s296 = scalar_select %p295, %s23, 1
          %s297 = smul.addr %s296, 3
          %s298 = scalar_lea.vmem %s4, %s297
        $region36: #{gru_forward.2} parent=19 // pred_fallthru
          _
        // Predicated region
        $region37: #{gru_forward.2} parent=19 // pred_check
          %p299 = pneg %p168
        $region38: #{gru_forward.2} parent=19 // pred_check_branch
          %301 = sbr.rel (%p299) target = $region40
        $region39: #{gru_forward.2} parent=19 // pred_region
          %p302 = scmp.lt.s32.totalorder %s23, 1
          %s303 = scalar_select %p302, %s23, 1
          %s304 = scalar_lea.vmem %s5, %s303
        $region40: #{gru_forward.2} parent=19 // pred_fallthru
          _
      $region20: #{gru_forward.2} parent=5 // pred_fallthru
        _
      %p305 = scmp.le.s32.totalorder 1, %s23
      %p306 = scmp.lt.s32.totalorder %s23, 3
      %p307 = pnand %p305, %p306
      %p308 = pneg %p307
      // Predicated region
      $region41: #{gru_forward.2} parent=5 // pred_check
        _
      $region42: #{gru_forward.2} parent=5 // pred_check_branch
        %310 = sbr.rel (%p307) target = $region44
      $region43: #{gru_forward.2} parent=5 // pred_region
        %s311 = ssub.s32 %s23, 1
        %s312 = sand.u32 %s83, 1
        %s313 = scalar_lea.sflag [#allocation5], %s312
        %s314 = sand.u32 %s83, 1
        %s315 = smul.addr %s314, 384
        %s316 = scalar_lea.vmem [#allocation4], %s315
        // Predicated region
        $region45: #{gru_forward.2} parent=43 // pred_check
          %p317 = pneg %p96
        $region46: #{gru_forward.2} parent=43 // pred_check_branch
          %319 = sbr.rel (%p317) target = $region48
        $region47: #{gru_forward.2} parent=43 // pred_region
          %320 = dma.done %s313, 6144
        $region48: #{gru_forward.2} parent=43 // pred_fallthru
          _
        %s321 = sand.u32 %s109, 1
        %s322 = scalar_lea.sflag [#allocation8], %s321
        %s323 = sand.u32 %s109, 1
        %s324 = smul.addr %s323, 384
        %s325 = scalar_lea.vmem [#allocation7], %s324
        // Predicated region
        $region49: #{gru_forward.2} parent=43 // pred_check
          %p326 = pneg %p122
        $region50: #{gru_forward.2} parent=43 // pred_check_branch
          %328 = sbr.rel (%p326) target = $region52
        $region51: #{gru_forward.2} parent=43 // pred_region
          %329 = dma.done %s322, 6144
        $region52: #{gru_forward.2} parent=43 // pred_fallthru
          _
        %p330 = pneg %p44
        %p331 = pneg %p41
        %p332 = scmp.lt.s32.totalorder %s28, 1
        %s333 = scalar_select %p332, %s28, 1
        %s334 = smul.addr %s333, 8
        %s335 = scalar_lea.vmem %s1, %s334
        %p336 = pneg %p70
        %p337 = pneg %p67
        %s338 = sand.u32 %s83, 1
        %s339 = scalar_lea.sflag [#allocation5], %s338
        %s340 = sand.u32 %s83, 1
        %s341 = smul.addr %s340, 384
        %s342 = scalar_lea.vmem [#allocation4], %s341
        %p343 = pneg %p96
        %p344 = pneg %p93
        %s345 = sand.u32 %s109, 1
        %s346 = scalar_lea.sflag [#allocation8], %s345
        %s347 = sand.u32 %s109, 1
        %s348 = smul.addr %s347, 384
        %s349 = scalar_lea.vmem [#allocation7], %s348
        %p350 = pneg %p122
        %p351 = pneg %p119
        %p352 = scmp.lt.s32.totalorder %s28, 1
        %s353 = scalar_select %p352, %s28, 1
        %s354 = smul.addr %s353, 3
        %s355 = scalar_lea.vmem %s4, %s354
        %p356 = pneg %p148
        %p357 = pneg %p145
        %p358 = scmp.lt.s32.totalorder %s28, 1
        %s359 = scalar_select %p358, %s28, 1
        %s360 = scalar_lea.vmem %s5, %s359
        %p361 = pneg %p174
        %p362 = pneg %p171
        %p363 = pneg %p195
        %p364 = pneg %p192
        %p365 = pneg %p221
        %p366 = pneg %p218
        %s367 = sand.u32 %s208, 1
        %s368 = scalar_lea.sflag [#allocation6], %s367
        %s369 = sand.u32 %s208, 1
        %s370 = smul.addr %s369, 8
        %s371 = scalar_lea.vmem [#allocation9], %s370
        %p372 = scmp.lt.s32.totalorder %s28, 1
        %s373 = scalar_select %p372, %s28, 1
        %s374 = smul.addr %s373, 8
        %s375 = scalar_lea.vmem %s1, %s374
        %p376 = scmp.lt.s32.totalorder %s28, 1
        %s377 = scalar_select %p376, %s28, 1
        %s378 = smul.addr %s377, 3
        %s379 = scalar_lea.vmem %s4, %s378
        %p380 = scmp.lt.s32.totalorder %s28, 1
        %s381 = scalar_select %p380, %s28, 1
        %s382 = scalar_lea.vmem %s5, %s381
        %p383 = scmp.eq.s32.totalorder %s28, 0
        // Predicated region
        $region53: #{gru_forward.2} parent=43 // pred_check
          %p384 = pneg %p383
        $region54: #{gru_forward.2} parent=43 // pred_check_branch
          %386 = sbr.rel (%p384) target = $region56
        $region55: #{gru_forward.2} parent=43 // pred_region
          %v387 = vld [vmem:[%s0] sm:$0xff]
          %v388 = vld [vmem:[%s0 + $0x8] sm:$0xff]
          %v389 = vld [vmem:[%s0 + $0x10] sm:$0xff]
          %v390 = vld [vmem:[%s0 + $0x18] sm:$0xff]
          %v391 = vld [vmem:[%s0 + $0x20] sm:$0xff]
          %v392 = vld [vmem:[%s0 + $0x28] sm:$0xff]
          %393 = vst [vmem:[#allocation2] sm:$0xff] %v387
          %394 = vst [vmem:[#allocation2 + $0x8] sm:$0xff] %v388
          %395 = vst [vmem:[#allocation2 + $0x10] sm:$0xff] %v389
          %396 = vst [vmem:[#allocation2 + $0x18] sm:$0xff] %v390
          %397 = vst [vmem:[#allocation2 + $0x20] sm:$0xff] %v391
          %398 = vst [vmem:[#allocation2 + $0x28] sm:$0xff] %v392
        $region56: #{gru_forward.2} parent=43 // pred_fallthru
          _
        %v399 = vld [vmem:[#allocation2] sm:$0xff]
        %v400 = vld [vmem:[#allocation2 + $0x8] sm:$0xff]
        %v401 = vld [vmem:[#allocation2 + $0x10] sm:$0xff]
        %v402 = vld [vmem:[#allocation2 + $0x18] sm:$0xff]
        %v403 = vld [vmem:[#allocation2 + $0x20] sm:$0xff]
        %v404 = vld [vmem:[#allocation2 + $0x28] sm:$0xff]
        %v405 = vld [vmem:[%s316] sm:$0xff]
        %v406 = vld [vmem:[%s316 + $0x8] sm:$0xff]
        %v407 = vld [vmem:[%s316 + $0x10] sm:$0xff]
        %v408 = vld [vmem:[%s316 + $0x18] sm:$0xff]
        %v409 = vld [vmem:[%s316 + $0x20] sm:$0xff]
        %v410 = vld [vmem:[%s316 + $0x28] sm:$0xff]
        %v411 = vld [vmem:[%s316 + $0x30] sm:$0xff]
        %v412 = vld [vmem:[%s316 + $0x38] sm:$0xff]
        %v413 = vld [vmem:[%s316 + $0x40] sm:$0xff]
        %v414 = vld [vmem:[%s316 + $0x48] sm:$0xff]
        %v415 = vld [vmem:[%s316 + $0x50] sm:$0xff]
        %v416 = vld [vmem:[%s316 + $0x58] sm:$0xff]
        %v417 = vld [vmem:[%s316 + $0x60] sm:$0xff]
        %v418 = vld [vmem:[%s316 + $0x68] sm:$0xff]
        %v419 = vld [vmem:[%s316 + $0x70] sm:$0xff]
        %v420 = vld [vmem:[%s316 + $0x78] sm:$0xff]
        %v421 = vld [vmem:[%s316 + $0x80] sm:$0xff]
        %v422 = vld [vmem:[%s316 + $0x88] sm:$0xff]
        %v423 = vld [vmem:[%s316 + $0x90] sm:$0xff]
        %v424 = vld [vmem:[%s316 + $0x98] sm:$0xff]
        %v425 = vld [vmem:[%s316 + $0xa0] sm:$0xff]
        %v426 = vld [vmem:[%s316 + $0xa8] sm:$0xff]
        %v427 = vld [vmem:[%s316 + $0xb0] sm:$0xff]
        %v428 = vld [vmem:[%s316 + $0xb8] sm:$0xff]
        %v429 = vld [vmem:[%s316 + $0xc0] sm:$0xff]
        %v430 = vld [vmem:[%s316 + $0xc8] sm:$0xff]
        %v431 = vld [vmem:[%s316 + $0xd0] sm:$0xff]
        %v432 = vld [vmem:[%s316 + $0xd8] sm:$0xff]
        %v433 = vld [vmem:[%s316 + $0xe0] sm:$0xff]
        %v434 = vld [vmem:[%s316 + $0xe8] sm:$0xff]
        %v435 = vld [vmem:[%s316 + $0xf0] sm:$0xff]
        %v436 = vld [vmem:[%s316 + $0xf8] sm:$0xff]
        %v437 = vld [vmem:[%s316 + $0x100] sm:$0xff]
        %v438 = vld [vmem:[%s316 + $0x108] sm:$0xff]
        %v439 = vld [vmem:[%s316 + $0x110] sm:$0xff]
        %v440 = vld [vmem:[%s316 + $0x118] sm:$0xff]
        %v441 = vld [vmem:[%s316 + $0x120] sm:$0xff]
        %v442 = vld [vmem:[%s316 + $0x128] sm:$0xff]
        %v443 = vld [vmem:[%s316 + $0x130] sm:$0xff]
        %v444 = vld [vmem:[%s316 + $0x138] sm:$0xff]
        %v445 = vld [vmem:[%s316 + $0x140] sm:$0xff]
        %v446 = vld [vmem:[%s316 + $0x148] sm:$0xff]
        %v447 = vld [vmem:[%s316 + $0x150] sm:$0xff]
        %v448 = vld [vmem:[%s316 + $0x158] sm:$0xff]
        %v449 = vld [vmem:[%s316 + $0x160] sm:$0xff]
        %v450 = vld [vmem:[%s316 + $0x168] sm:$0xff]
        %v451 = vld [vmem:[%s316 + $0x170] sm:$0xff]
        %v452 = vld [vmem:[%s316 + $0x178] sm:$0xff]
        %v453 = vld [vmem:[%s379] sm:$0x7]
        %v455 = vlaneseq
        %v456 = vshrl.u32 %v455, 7
        %v457 = vsub.s32 0, %v456
        %v458 = vrot.slane %v453, %v457
        %v459 = vlaneseq
        %v460 = vshrl.u32 %v459, 7
        %v461 = vsub.s32 1, %v460
        %v462 = vrot.slane %v453, %v461
        %v463 = vlaneseq
        %v464 = vshrl.u32 %v463, 7
        %v465 = vsub.s32 2, %v464
        %v466 = vrot.slane %v453, %v465
        %470 = vmatprep.subr.mxu0 %v406
        %471 = vmatpush1.msra.mxu0 %v405
        %472 = vmatprep.subr.mxu0 %v409
        %473 = vmatpush1.msra.mxu0 %v408
        %474 = vmatprep.subr.mxu0 %v412
        %475 = vmatpush1.msra.mxu0 %v411
        %476 = vmatprep.subr.mxu0 %v415
        %477 = vmatpush1.msra.mxu0 %v414
        %478 = vmatprep.subr.mxu0 %v418
        %479 = vmatpush1.msra.mxu0 %v417
        %480 = vmatprep.subr.mxu0 %v421
        %481 = vmatpush1.msra.mxu0 %v420
        %482 = vmatprep.subr.mxu0 %v424
        %483 = vmatpush1.msra.mxu0 %v423
        %484 = vmatprep.subr.mxu0 %v427
        %485 = vmatpush1.msra.mxu0 %v426
        %486 = vmatprep.subr.mxu0 %v430
        %487 = vmatpush1.msra.mxu0 %v429
        %488 = vmatprep.subr.mxu0 %v433
        %489 = vmatpush1.msra.mxu0 %v432
        %490 = vmatprep.subr.mxu0 %v436
        %491 = vmatpush1.msra.mxu0 %v435
        %492 = vmatprep.subr.mxu0 %v439
        %493 = vmatpush1.msra.mxu0 %v438
        %494 = vmatprep.subr.mxu0 %v442
        %495 = vmatpush1.msra.mxu0 %v441
        %496 = vmatprep.subr.mxu0 %v445
        %497 = vmatpush1.msra.mxu0 %v444
        %498 = vmatprep.subr.mxu0 %v448
        %499 = vmatpush1.msra.mxu0 %v447
        %500 = vmatprep.subr.mxu0 %v451
        %501 = vmatpush1.msra.mxu0 %v450
        %502 = vmatprep.subr.mxu0 0.0
        %503 = vmatpush1.msra.mxu0 0.0
        %504 = vmatprep.subr.mxu0 0.0
        %505 = vmatpush1.msra.mxu0 0.0
        %506 = vmatprep.subr.mxu0 0.0
        %507 = vmatpush1.msra.mxu0 0.0
        %508 = vmatprep.subr.mxu0 0.0
        %509 = vmatpush1.msra.mxu0 0.0
        %510 = vmatprep.subr.mxu0 0.0
        %511 = vmatpush1.msra.mxu0 0.0
        %512 = vmatprep.subr.mxu0 0.0
        %513 = vmatpush1.msra.mxu0 0.0
        %514 = vmatprep.subr.mxu0 0.0
        %515 = vmatpush1.msra.mxu0 0.0
        %516 = vmatprep.subr.mxu0 0.0
        %517 = vmatpush1.msra.mxu0 0.0
        %518 = vmatprep.subr.mxu0 0.0
        %519 = vmatpush1.msra.mxu0 0.0
        %520 = vmatprep.subr.mxu0 0.0
        %521 = vmatpush1.msra.mxu0 0.0
        %522 = vmatprep.subr.mxu0 0.0
        %523 = vmatpush1.msra.mxu0 0.0
        %524 = vmatprep.subr.mxu0 0.0
        %525 = vmatpush1.msra.mxu0 0.0
        %526 = vmatprep.subr.mxu0 0.0
        %527 = vmatpush1.msra.mxu0 0.0
        %528 = vmatprep.subr.mxu0 0.0
        %529 = vmatpush1.msra.mxu0 0.0
        %530 = vmatprep.subr.mxu0 0.0
        %531 = vmatpush1.msra.mxu0 0.0
        %532 = vmatprep.subr.mxu0 0.0
        %533 = vmatpush1.msra.mxu0 0.0
        %534 = vmatprep.mubr.f32.mxu0 0.0
        %535 = vmatmul.mubr.f32.gmra.mrb[0].mxu0 %v399
        %v536 = vpop.f32.mrb[0].mxu0
        %v537 = vadd.f32 %v458, %v536
        %v538 = vpop.f32.mrb[0].mxu0
        %v539 = vadd.f32 %v462, %v538
        %540 = vmatprep.mubr.f32.mxu0 0.0
        %541 = vmatmul.mubr.f32.gmra.mrb[0].mxu0 %v400
        %v542 = vpop.f32.mrb[0].mxu0
        %v543 = vadd.f32 %v458, %v542
        %v544 = vpop.f32.mrb[0].mxu0
        %v545 = vadd.f32 %v462, %v544
        %546 = vmatprep.mubr.f32.mxu0 0.0
        %547 = vmatmul.mubr.f32.gmra.mrb[0].mxu0 %v401
        %v548 = vpop.f32.mrb[0].mxu0
        %v549 = vadd.f32 %v458, %v548
        %v550 = vpop.f32.mrb[0].mxu0
        %v551 = vadd.f32 %v462, %v550
        %552 = vmatprep.mubr.f32.mxu0 0.0
        %553 = vmatmul.mubr.f32.gmra.mrb[0].mxu0 %v402
        %v554 = vpop.f32.mrb[0].mxu0
        %v555 = vadd.f32 %v458, %v554
        %v556 = vpop.f32.mrb[0].mxu0
        %v557 = vadd.f32 %v462, %v556
        %558 = vmatprep.mubr.f32.mxu0 0.0
        %559 = vmatmul.mubr.f32.gmra.mrb[0].mxu0 %v403
        %v560 = vpop.f32.mrb[0].mxu0
        %v561 = vadd.f32 %v458, %v560
        %v562 = vpop.f32.mrb[0].mxu0
        %v563 = vadd.f32 %v462, %v562
        %564 = vmatprep.mubr.f32.mxu0 0.0
        %565 = vmatmul.mubr.f32.gmra.mrb[0].mxu0 %v404
        %v566 = vpop.f32.mrb[0].mxu0
        %v567 = vadd.f32 %v458, %v566
        %v568 = vpop.f32.mrb[0].mxu0
        %v569 = vadd.f32 %v462, %v568
        %570 = vdwg.mxu0
        %571 = vmatprep.subr.mxu0 0.0
        %572 = vmatpush1.msra.mxu0 %v407
        %573 = vmatprep.subr.mxu0 0.0
        %574 = vmatpush1.msra.mxu0 %v410
        %575 = vmatprep.subr.mxu0 0.0
        %576 = vmatpush1.msra.mxu0 %v413
        %577 = vmatprep.subr.mxu0 0.0
        %578 = vmatpush1.msra.mxu0 %v416
        %579 = vmatprep.subr.mxu0 0.0
        %580 = vmatpush1.msra.mxu0 %v419
        %581 = vmatprep.subr.mxu0 0.0
        %582 = vmatpush1.msra.mxu0 %v422
        %583 = vmatprep.subr.mxu0 0.0
        %584 = vmatpush1.msra.mxu0 %v425
        %585 = vmatprep.subr.mxu0 0.0
        %586 = vmatpush1.msra.mxu0 %v428
        %587 = vmatprep.subr.mxu0 0.0
        %588 = vmatpush1.msra.mxu0 %v431
        %589 = vmatprep.subr.mxu0 0.0
        %590 = vmatpush1.msra.mxu0 %v434
        %591 = vmatprep.subr.mxu0 0.0
        %592 = vmatpush1.msra.mxu0 %v437
        %593 = vmatprep.subr.mxu0 0.0
        %594 = vmatpush1.msra.mxu0 %v440
        %595 = vmatprep.subr.mxu0 0.0
        %596 = vmatpush1.msra.mxu0 %v443
        %597 = vmatprep.subr.mxu0 0.0
        %598 = vmatpush1.msra.mxu0 %v446
        %599 = vmatprep.subr.mxu0 0.0
        %600 = vmatpush1.msra.mxu0 %v449
        %601 = vmatprep.subr.mxu0 0.0
        %602 = vmatpush1.msra.mxu0 %v452
        %603 = vmatprep.subr.mxu0 0.0
        %604 = vmatpush1.msra.mxu0 0.0
        %605 = vmatprep.subr.mxu0 0.0
        %606 = vmatpush1.msra.mxu0 0.0
        %607 = vmatprep.subr.mxu0 0.0
        %608 = vmatpush1.msra.mxu0 0.0
        %609 = vmatprep.subr.mxu0 0.0
        %610 = vmatpush1.msra.mxu0 0.0
        %611 = vmatprep.subr.mxu0 0.0
        %612 = vmatpush1.msra.mxu0 0.0
        %613 = vmatprep.subr.mxu0 0.0
        %614 = vmatpush1.msra.mxu0 0.0
        %615 = vmatprep.subr.mxu0 0.0
        %616 = vmatpush1.msra.mxu0 0.0
        %617 = vmatprep.subr.mxu0 0.0
        %618 = vmatpush1.msra.mxu0 0.0
        %619 = vmatprep.subr.mxu0 0.0
        %620 = vmatpush1.msra.mxu0 0.0
        %621 = vmatprep.subr.mxu0 0.0
        %622 = vmatpush1.msra.mxu0 0.0
        %623 = vmatprep.subr.mxu0 0.0
        %624 = vmatpush1.msra.mxu0 0.0
        %625 = vmatprep.subr.mxu0 0.0
        %626 = vmatpush1.msra.mxu0 0.0
        %627 = vmatprep.subr.mxu0 0.0
        %628 = vmatpush1.msra.mxu0 0.0
        %629 = vmatprep.subr.mxu0 0.0
        %630 = vmatpush1.msra.mxu0 0.0
        %631 = vmatprep.subr.mxu0 0.0
        %632 = vmatpush1.msra.mxu0 0.0
        %633 = vmatprep.subr.mxu0 0.0
        %634 = vmatpush1.msra.mxu0 0.0
        %635 = vmatprep.mubr.f32.mxu0 0.0
        %636 = vmatmul.mubr.f32.gmra.mrb[0].mxu0 %v399
        %v637 = vpop.f32.mrb[0].mxu0
        %v638 = vadd.f32 %v466, %v637
        %v639 = vpop.f32.mrb[0].mxu0
        %640 = vmatprep.mubr.f32.mxu0 0.0
        %641 = vmatmul.mubr.f32.gmra.mrb[0].mxu0 %v400
        %v642 = vpop.f32.mrb[0].mxu0
        %v643 = vadd.f32 %v466, %v642
        %v644 = vpop.f32.mrb[0].mxu0
        %645 = vmatprep.mubr.f32.mxu0 0.0
        %646 = vmatmul.mubr.f32.gmra.mrb[0].mxu0 %v401
        %v647 = vpop.f32.mrb[0].mxu0
        %v648 = vadd.f32 %v466, %v647
        %v649 = vpop.f32.mrb[0].mxu0
        %650 = vmatprep.mubr.f32.mxu0 0.0
        %651 = vmatmul.mubr.f32.gmra.mrb[0].mxu0 %v402
        %v652 = vpop.f32.mrb[0].mxu0
        %v653 = vadd.f32 %v466, %v652
        %v654 = vpop.f32.mrb[0].mxu0
        %655 = vmatprep.mubr.f32.mxu0 0.0
        %656 = vmatmul.mubr.f32.gmra.mrb[0].mxu0 %v403
        %v657 = vpop.f32.mrb[0].mxu0
        %v658 = vadd.f32 %v466, %v657
        %v659 = vpop.f32.mrb[0].mxu0
        %660 = vmatprep.mubr.f32.mxu0 0.0
        %661 = vmatmul.mubr.f32.gmra.mrb[0].mxu0 %v404
        %v662 = vpop.f32.mrb[0].mxu0
        %v663 = vadd.f32 %v466, %v662
        %v664 = vpop.f32.mrb[0].mxu0
        %665 = vdwg.mxu0
        %666 = vst [vmem:[#allocation3] sm:$0xff] %v537
        %667 = vst [vmem:[#allocation3 + $0x8] sm:$0xff] %v539
        %668 = vst [vmem:[#allocation3 + $0x10] sm:$0xff] %v638
        %669 = vst [vmem:[#allocation3 + $0x18] sm:$0xff] %v543
        %670 = vst [vmem:[#allocation3 + $0x20] sm:$0xff] %v545
        %671 = vst [vmem:[#allocation3 + $0x28] sm:$0xff] %v643
        %672 = vst [vmem:[#allocation3 + $0x30] sm:$0xff] %v549
        %673 = vst [vmem:[#allocation3 + $0x38] sm:$0xff] %v551
        %674 = vst [vmem:[#allocation3 + $0x40] sm:$0xff] %v648
        %675 = vst [vmem:[#allocation3 + $0x48] sm:$0xff] %v555
        %676 = vst [vmem:[#allocation3 + $0x50] sm:$0xff] %v557
        %677 = vst [vmem:[#allocation3 + $0x58] sm:$0xff] %v653
        %678 = vst [vmem:[#allocation3 + $0x60] sm:$0xff] %v561
        %679 = vst [vmem:[#allocation3 + $0x68] sm:$0xff] %v563
        %680 = vst [vmem:[#allocation3 + $0x70] sm:$0xff] %v658
        %681 = vst [vmem:[#allocation3 + $0x78] sm:$0xff] %v567
        %682 = vst [vmem:[#allocation3 + $0x80] sm:$0xff] %v569
        %683 = vst [vmem:[#allocation3 + $0x88] sm:$0xff] %v663
        %v684 = vld [vmem:[%s375] sm:$0xff]
        %v685 = vld [vmem:[%s382] sm:$0x1]
        %v687 = vlaneseq
        %v688 = vshrl.u32 %v687, 7
        %v689 = vsub.s32 0, %v688
        %v690 = vrot.slane %v685, %v689
        %v692 = vld [vmem:[%s325] sm:$0xff]
        %v693 = vld [vmem:[%s325 + $0x8] sm:$0xff]
        %v694 = vld [vmem:[%s325 + $0x10] sm:$0xff]
        %v695 = vld [vmem:[%s325 + $0x18] sm:$0xff]
        %v696 = vld [vmem:[%s325 + $0x20] sm:$0xff]
        %v697 = vld [vmem:[%s325 + $0x28] sm:$0xff]
        %v698 = vld [vmem:[%s325 + $0x30] sm:$0xff]
        %v699 = vld [vmem:[%s325 + $0x38] sm:$0xff]
        %v700 = vld [vmem:[%s325 + $0x40] sm:$0xff]
        %v701 = vld [vmem:[%s325 + $0x48] sm:$0xff]
        %v702 = vld [vmem:[%s325 + $0x50] sm:$0xff]
        %v703 = vld [vmem:[%s325 + $0x58] sm:$0xff]
        %v704 = vld [vmem:[%s325 + $0x60] sm:$0xff]
        %v705 = vld [vmem:[%s325 + $0x68] sm:$0xff]
        %v706 = vld [vmem:[%s325 + $0x70] sm:$0xff]
        %v707 = vld [vmem:[%s325 + $0x78] sm:$0xff]
        %v708 = vld [vmem:[%s325 + $0x80] sm:$0xff]
        %v709 = vld [vmem:[%s325 + $0x88] sm:$0xff]
        %v710 = vld [vmem:[%s325 + $0x90] sm:$0xff]
        %v711 = vld [vmem:[%s325 + $0x98] sm:$0xff]
        %v712 = vld [vmem:[%s325 + $0xa0] sm:$0xff]
        %v713 = vld [vmem:[%s325 + $0xa8] sm:$0xff]
        %v714 = vld [vmem:[%s325 + $0xb0] sm:$0xff]
        %v715 = vld [vmem:[%s325 + $0xb8] sm:$0xff]
        %v716 = vld [vmem:[%s325 + $0xc0] sm:$0xff]
        %v717 = vld [vmem:[%s325 + $0xc8] sm:$0xff]
        %v718 = vld [vmem:[%s325 + $0xd0] sm:$0xff]
        %v719 = vld [vmem:[%s325 + $0xd8] sm:$0xff]
        %v720 = vld [vmem:[%s325 + $0xe0] sm:$0xff]
        %v721 = vld [vmem:[%s325 + $0xe8] sm:$0xff]
        %v722 = vld [vmem:[%s325 + $0xf0] sm:$0xff]
        %v723 = vld [vmem:[%s325 + $0xf8] sm:$0xff]
        %v724 = vld [vmem:[%s325 + $0x100] sm:$0xff]
        %v725 = vld [vmem:[%s325 + $0x108] sm:$0xff]
        %v726 = vld [vmem:[%s325 + $0x110] sm:$0xff]
        %v727 = vld [vmem:[%s325 + $0x118] sm:$0xff]
        %v728 = vld [vmem:[%s325 + $0x120] sm:$0xff]
        %v729 = vld [vmem:[%s325 + $0x128] sm:$0xff]
        %v730 = vld [vmem:[%s325 + $0x130] sm:$0xff]
        %v731 = vld [vmem:[%s325 + $0x138] sm:$0xff]
        %v732 = vld [vmem:[%s325 + $0x140] sm:$0xff]
        %v733 = vld [vmem:[%s325 + $0x148] sm:$0xff]
        %v734 = vld [vmem:[%s325 + $0x150] sm:$0xff]
        %v735 = vld [vmem:[%s325 + $0x158] sm:$0xff]
        %v736 = vld [vmem:[%s325 + $0x160] sm:$0xff]
        %v737 = vld [vmem:[%s325 + $0x168] sm:$0xff]
        %v738 = vld [vmem:[%s325 + $0x170] sm:$0xff]
        %v739 = vld [vmem:[%s325 + $0x178] sm:$0xff]
        %740 = vmatprep.subr.mxu0 %v693
        %741 = vmatpush1.msra.mxu0 %v692
        %742 = vmatprep.subr.mxu0 %v696
        %743 = vmatpush1.msra.mxu0 %v695
        %744 = vmatprep.subr.mxu0 %v699
        %745 = vmatpush1.msra.mxu0 %v698
        %746 = vmatprep.subr.mxu0 %v702
        %747 = vmatpush1.msra.mxu0 %v701
        %748 = vmatprep.subr.mxu0 %v705
        %749 = vmatpush1.msra.mxu0 %v704
        %750 = vmatprep.subr.mxu0 %v708
        %751 = vmatpush1.msra.mxu0 %v707
        %752 = vmatprep.subr.mxu0 %v711
        %753 = vmatpush1.msra.mxu0 %v710
        %754 = vmatprep.subr.mxu0 %v714
        %755 = vmatpush1.msra.mxu0 %v713
        %756 = vmatprep.subr.mxu0 %v717
        %757 = vmatpush1.msra.mxu0 %v716
        %758 = vmatprep.subr.mxu0 %v720
        %759 = vmatpush1.msra.mxu0 %v719
        %760 = vmatprep.subr.mxu0 %v723
        %761 = vmatpush1.msra.mxu0 %v722
        %762 = vmatprep.subr.mxu0 %v726
        %763 = vmatpush1.msra.mxu0 %v725
        %764 = vmatprep.subr.mxu0 %v729
        %765 = vmatpush1.msra.mxu0 %v728
        %766 = vmatprep.subr.mxu0 %v732
        %767 = vmatpush1.msra.mxu0 %v731
        %768 = vmatprep.subr.mxu0 %v735
        %769 = vmatpush1.msra.mxu0 %v734
        %770 = vmatprep.subr.mxu0 %v738
        %771 = vmatpush1.msra.mxu0 %v737
        %772 = vmatprep.subr.mxu0 0.0
        %773 = vmatpush1.msra.mxu0 0.0
        %774 = vmatprep.subr.mxu0 0.0
        %775 = vmatpush1.msra.mxu0 0.0
        %776 = vmatprep.subr.mxu0 0.0
        %777 = vmatpush1.msra.mxu0 0.0
        %778 = vmatprep.subr.mxu0 0.0
        %779 = vmatpush1.msra.mxu0 0.0
        %780 = vmatprep.subr.mxu0 0.0
        %781 = vmatpush1.msra.mxu0 0.0
        %782 = vmatprep.subr.mxu0 0.0
        %783 = vmatpush1.msra.mxu0 0.0
        %784 = vmatprep.subr.mxu0 0.0
        %785 = vmatpush1.msra.mxu0 0.0
        %786 = vmatprep.subr.mxu0 0.0
        %787 = vmatpush1.msra.mxu0 0.0
        %788 = vmatprep.subr.mxu0 0.0
        %789 = vmatpush1.msra.mxu0 0.0
        %790 = vmatprep.subr.mxu0 0.0
        %791 = vmatpush1.msra.mxu0 0.0
        %792 = vmatprep.subr.mxu0 0.0
        %793 = vmatpush1.msra.mxu0 0.0
        %794 = vmatprep.subr.mxu0 0.0
        %795 = vmatpush1.msra.mxu0 0.0
        %796 = vmatprep.subr.mxu0 0.0
        %797 = vmatpush1.msra.mxu0 0.0
        %798 = vmatprep.subr.mxu0 0.0
        %799 = vmatpush1.msra.mxu0 0.0
        %800 = vmatprep.subr.mxu0 0.0
        %801 = vmatpush1.msra.mxu0 0.0
        %802 = vmatprep.subr.mxu0 0.0
        %803 = vmatpush1.msra.mxu0 0.0
        %804 = vmatprep.mubr.f32.mxu0 0.0
        %805 = vmatmul.mubr.f32.gmra.mrb[0].mxu0 %v684
        %v806 = vpop.f32.mrb[0].mxu0
        %v807 = vadd.f32 0.0, %v806
        %v808 = vpop.f32.mrb[0].mxu0
        %v809 = vadd.f32 0.0, %v808
        %810 = vdwg.mxu0
        %811 = vmatprep.subr.mxu0 0.0
        %812 = vmatpush1.msra.mxu0 %v694
        %813 = vmatprep.subr.mxu0 0.0
        %814 = vmatpush1.msra.mxu0 %v697
        %815 = vmatprep.subr.mxu0 0.0
        %816 = vmatpush1.msra.mxu0 %v700
        %817 = vmatprep.subr.mxu0 0.0
        %818 = vmatpush1.msra.mxu0 %v703
        %819 = vmatprep.subr.mxu0 0.0
        %820 = vmatpush1.msra.mxu0 %v706
        %821 = vmatprep.subr.mxu0 0.0
        %822 = vmatpush1.msra.mxu0 %v709
        %823 = vmatprep.subr.mxu0 0.0
        %824 = vmatpush1.msra.mxu0 %v712
        %825 = vmatprep.subr.mxu0 0.0
        %826 = vmatpush1.msra.mxu0 %v715
        %827 = vmatprep.subr.mxu0 0.0
        %828 = vmatpush1.msra.mxu0 %v718
        %829 = vmatprep.subr.mxu0 0.0
        %830 = vmatpush1.msra.mxu0 %v721
        %831 = vmatprep.subr.mxu0 0.0
        %832 = vmatpush1.msra.mxu0 %v724
        %833 = vmatprep.subr.mxu0 0.0
        %834 = vmatpush1.msra.mxu0 %v727
        %835 = vmatprep.subr.mxu0 0.0
        %836 = vmatpush1.msra.mxu0 %v730
        %837 = vmatprep.subr.mxu0 0.0
        %838 = vmatpush1.msra.mxu0 %v733
        %839 = vmatprep.subr.mxu0 0.0
        %840 = vmatpush1.msra.mxu0 %v736
        %841 = vmatprep.subr.mxu0 0.0
        %842 = vmatpush1.msra.mxu0 %v739
        %843 = vmatprep.subr.mxu0 0.0
        %844 = vmatpush1.msra.mxu0 0.0
        %845 = vmatprep.subr.mxu0 0.0
        %846 = vmatpush1.msra.mxu0 0.0
        %847 = vmatprep.subr.mxu0 0.0
        %848 = vmatpush1.msra.mxu0 0.0
        %849 = vmatprep.subr.mxu0 0.0
        %850 = vmatpush1.msra.mxu0 0.0
        %851 = vmatprep.subr.mxu0 0.0
        %852 = vmatpush1.msra.mxu0 0.0
        %853 = vmatprep.subr.mxu0 0.0
        %854 = vmatpush1.msra.mxu0 0.0
        %855 = vmatprep.subr.mxu0 0.0
        %856 = vmatpush1.msra.mxu0 0.0
        %857 = vmatprep.subr.mxu0 0.0
        %858 = vmatpush1.msra.mxu0 0.0
        %859 = vmatprep.subr.mxu0 0.0
        %860 = vmatpush1.msra.mxu0 0.0
        %861 = vmatprep.subr.mxu0 0.0
        %862 = vmatpush1.msra.mxu0 0.0
        %863 = vmatprep.subr.mxu0 0.0
        %864 = vmatpush1.msra.mxu0 0.0
        %865 = vmatprep.subr.mxu0 0.0
        %866 = vmatpush1.msra.mxu0 0.0
        %867 = vmatprep.subr.mxu0 0.0
        %868 = vmatpush1.msra.mxu0 0.0
        %869 = vmatprep.subr.mxu0 0.0
        %870 = vmatpush1.msra.mxu0 0.0
        %871 = vmatprep.subr.mxu0 0.0
        %872 = vmatpush1.msra.mxu0 0.0
        %873 = vmatprep.subr.mxu0 0.0
        %874 = vmatpush1.msra.mxu0 0.0
        %875 = vmatprep.mubr.f32.mxu0 0.0
        %876 = vmatmul.mubr.f32.gmra.mrb[0].mxu0 %v684
        %v877 = vpop.f32.mrb[0].mxu0
        %v878 = vadd.f32 0.0, %v877
        %v879 = vpop.f32.mrb[0].mxu0
        %880 = vdwg.mxu0
        %s881 = smul.u32 0, 3
        %s882 = smul.addr %s881, 8
        %s883 = scalar_lea.vmem [#allocation3], %s882
        %v884 = vld [vmem:[%s883] sm:$0xff]
        %v885 = vld [vmem:[%s883 + $0x8] sm:$0xff]
        %v886 = vld [vmem:[%s883 + $0x10] sm:$0xff]
        %v887 = vadd.f32 %v884, %v807
        %v888 = vxor.u32 %v887, 2147483648
        %v889 = vmul.f32 %v888, 1.442695
        %v890 = vpow.pop %v889
        %v891 = vadd.f32 %v890, 1.0
        %v892 = vrcp.pop %v891
        %v893 = vmul.f32 1.0, %v892
        %v894 = vadd.f32 %v885, %v809
        %v895 = vxor.u32 %v894, 2147483648
        %v896 = vmul.f32 %v895, 1.442695
        %v897 = vpow.pop %v896
        %v898 = vadd.f32 %v897, 1.0
        %v899 = vrcp.pop %v898
        %v900 = vmul.f32 1.0, %v899
        %v901 = vadd.f32 %v878, %v690
        %v902 = vmul.f32 %v893, %v901
        %v903 = vadd.f32 %v886, %v902
        %v904 = vtanh.pop %v903
        %v905 = vsub.f32 1.0, %v900
        %v906 = vmul.f32 %v905, %v904
        %v907 = vmul.f32 %v900, %v684
        %v908 = vadd.f32 %v906, %v907
        %909 = vst [vmem:[#allocation2] sm:$0xff] %v908
        %v910 = vld [vmem:[%s325] sm:$0xff]
        %v911 = vld [vmem:[%s325 + $0x8] sm:$0xff]
        %v912 = vld [vmem:[%s325 + $0x10] sm:$0xff]
        %v913 = vld [vmem:[%s325 + $0x18] sm:$0xff]
        %v914 = vld [vmem:[%s325 + $0x20] sm:$0xff]
        %v915 = vld [vmem:[%s325 + $0x28] sm:$0xff]
        %v916 = vld [vmem:[%s325 + $0x30] sm:$0xff]
        %v917 = vld [vmem:[%s325 + $0x38] sm:$0xff]
        %v918 = vld [vmem:[%s325 + $0x40] sm:$0xff]
        %v919 = vld [vmem:[%s325 + $0x48] sm:$0xff]
        %v920 = vld [vmem:[%s325 + $0x50] sm:$0xff]
        %v921 = vld [vmem:[%s325 + $0x58] sm:$0xff]
        %v922 = vld [vmem:[%s325 + $0x60] sm:$0xff]
        %v923 = vld [vmem:[%s325 + $0x68] sm:$0xff]
        %v924 = vld [vmem:[%s325 + $0x70] sm:$0xff]
        %v925 = vld [vmem:[%s325 + $0x78] sm:$0xff]
        %v926 = vld [vmem:[%s325 + $0x80] sm:$0xff]
        %v927 = vld [vmem:[%s325 + $0x88] sm:$0xff]
        %v928 = vld [vmem:[%s325 + $0x90] sm:$0xff]
        %v929 = vld [vmem:[%s325 + $0x98] sm:$0xff]
        %v930 = vld [vmem:[%s325 + $0xa0] sm:$0xff]
        %v931 = vld [vmem:[%s325 + $0xa8] sm:$0xff]
        %v932 = vld [vmem:[%s325 + $0xb0] sm:$0xff]
        %v933 = vld [vmem:[%s325 + $0xb8] sm:$0xff]
        %v934 = vld [vmem:[%s325 + $0xc0] sm:$0xff]
        %v935 = vld [vmem:[%s325 + $0xc8] sm:$0xff]
        %v936 = vld [vmem:[%s325 + $0xd0] sm:$0xff]
        %v937 = vld [vmem:[%s325 + $0xd8] sm:$0xff]
        %v938 = vld [vmem:[%s325 + $0xe0] sm:$0xff]
        %v939 = vld [vmem:[%s325 + $0xe8] sm:$0xff]
        %v940 = vld [vmem:[%s325 + $0xf0] sm:$0xff]
        %v941 = vld [vmem:[%s325 + $0xf8] sm:$0xff]
        %v942 = vld [vmem:[%s325 + $0x100] sm:$0xff]
        %v943 = vld [vmem:[%s325 + $0x108] sm:$0xff]
        %v944 = vld [vmem:[%s325 + $0x110] sm:$0xff]
        %v945 = vld [vmem:[%s325 + $0x118] sm:$0xff]
        %v946 = vld [vmem:[%s325 + $0x120] sm:$0xff]
        %v947 = vld [vmem:[%s325 + $0x128] sm:$0xff]
        %v948 = vld [vmem:[%s325 + $0x130] sm:$0xff]
        %v949 = vld [vmem:[%s325 + $0x138] sm:$0xff]
        %v950 = vld [vmem:[%s325 + $0x140] sm:$0xff]
        %v951 = vld [vmem:[%s325 + $0x148] sm:$0xff]
        %v952 = vld [vmem:[%s325 + $0x150] sm:$0xff]
        %v953 = vld [vmem:[%s325 + $0x158] sm:$0xff]
        %v954 = vld [vmem:[%s325 + $0x160] sm:$0xff]
        %v955 = vld [vmem:[%s325 + $0x168] sm:$0xff]
        %v956 = vld [vmem:[%s325 + $0x170] sm:$0xff]
        %v957 = vld [vmem:[%s325 + $0x178] sm:$0xff]
        %958 = vmatprep.subr.mxu0 %v911
        %959 = vmatpush1.msra.mxu0 %v910
        %960 = vmatprep.subr.mxu0 %v914
        %961 = vmatpush1.msra.mxu0 %v913
        %962 = vmatprep.subr.mxu0 %v917
        %963 = vmatpush1.msra.mxu0 %v916
        %964 = vmatprep.subr.mxu0 %v920
        %965 = vmatpush1.msra.mxu0 %v919
        %966 = vmatprep.subr.mxu0 %v923
        %967 = vmatpush1.msra.mxu0 %v922
        %968 = vmatprep.subr.mxu0 %v926
        %969 = vmatpush1.msra.mxu0 %v925
        %970 = vmatprep.subr.mxu0 %v929
        %971 = vmatpush1.msra.mxu0 %v928
        %972 = vmatprep.subr.mxu0 %v932
        %973 = vmatpush1.msra.mxu0 %v931
        %974 = vmatprep.subr.mxu0 %v935
        %975 = vmatpush1.msra.mxu0 %v934
        %976 = vmatprep.subr.mxu0 %v938
        %977 = vmatpush1.msra.mxu0 %v937
        %978 = vmatprep.subr.mxu0 %v941
        %979 = vmatpush1.msra.mxu0 %v940
        %980 = vmatprep.subr.mxu0 %v944
        %981 = vmatpush1.msra.mxu0 %v943
        %982 = vmatprep.subr.mxu0 %v947
        %983 = vmatpush1.msra.mxu0 %v946
        %984 = vmatprep.subr.mxu0 %v950
        %985 = vmatpush1.msra.mxu0 %v949
        %986 = vmatprep.subr.mxu0 %v953
        %987 = vmatpush1.msra.mxu0 %v952
        %988 = vmatprep.subr.mxu0 %v956
        %989 = vmatpush1.msra.mxu0 %v955
        %990 = vmatprep.subr.mxu0 0.0
        %991 = vmatpush1.msra.mxu0 0.0
        %992 = vmatprep.subr.mxu0 0.0
        %993 = vmatpush1.msra.mxu0 0.0
        %994 = vmatprep.subr.mxu0 0.0
        %995 = vmatpush1.msra.mxu0 0.0
        %996 = vmatprep.subr.mxu0 0.0
        %997 = vmatpush1.msra.mxu0 0.0
        %998 = vmatprep.subr.mxu0 0.0
        %999 = vmatpush1.msra.mxu0 0.0
        %1000 = vmatprep.subr.mxu0 0.0
        %1001 = vmatpush1.msra.mxu0 0.0
        %1002 = vmatprep.subr.mxu0 0.0
        %1003 = vmatpush1.msra.mxu0 0.0
        %1004 = vmatprep.subr.mxu0 0.0
        %1005 = vmatpush1.msra.mxu0 0.0
        %1006 = vmatprep.subr.mxu0 0.0
        %1007 = vmatpush1.msra.mxu0 0.0
        %1008 = vmatprep.subr.mxu0 0.0
        %1009 = vmatpush1.msra.mxu0 0.0
        %1010 = vmatprep.subr.mxu0 0.0
        %1011 = vmatpush1.msra.mxu0 0.0
        %1012 = vmatprep.subr.mxu0 0.0
        %1013 = vmatpush1.msra.mxu0 0.0
        %1014 = vmatprep.subr.mxu0 0.0
        %1015 = vmatpush1.msra.mxu0 0.0
        %1016 = vmatprep.subr.mxu0 0.0
        %1017 = vmatpush1.msra.mxu0 0.0
        %1018 = vmatprep.subr.mxu0 0.0
        %1019 = vmatpush1.msra.mxu0 0.0
        %1020 = vmatprep.subr.mxu0 0.0
        %1021 = vmatpush1.msra.mxu0 0.0
        %1022 = vmatprep.mubr.f32.mxu0 0.0
        %1023 = vmatmul.mubr.f32.gmra.mrb[0].mxu0 %v908
        %v1024 = vpop.f32.mrb[0].mxu0
        %v1025 = vadd.f32 0.0, %v1024
        %v1026 = vpop.f32.mrb[0].mxu0
        %v1027 = vadd.f32 0.0, %v1026
        %1028 = vdwg.mxu0
        %1029 = vmatprep.subr.mxu0 0.0
        %1030 = vmatpush1.msra.mxu0 %v912
        %1031 = vmatprep.subr.mxu0 0.0
        %1032 = vmatpush1.msra.mxu0 %v915
        %1033 = vmatprep.subr.mxu0 0.0
        %1034 = vmatpush1.msra.mxu0 %v918
        %1035 = vmatprep.subr.mxu0 0.0
        %1036 = vmatpush1.msra.mxu0 %v921
        %1037 = vmatprep.subr.mxu0 0.0
        %1038 = vmatpush1.msra.mxu0 %v924
        %1039 = vmatprep.subr.mxu0 0.0
        %1040 = vmatpush1.msra.mxu0 %v927
        %1041 = vmatprep.subr.mxu0 0.0
        %1042 = vmatpush1.msra.mxu0 %v930
        %1043 = vmatprep.subr.mxu0 0.0
        %1044 = vmatpush1.msra.mxu0 %v933
        %1045 = vmatprep.subr.mxu0 0.0
        %1046 = vmatpush1.msra.mxu0 %v936
        %1047 = vmatprep.subr.mxu0 0.0
        %1048 = vmatpush1.msra.mxu0 %v939
        %1049 = vmatprep.subr.mxu0 0.0
        %1050 = vmatpush1.msra.mxu0 %v942
        %1051 = vmatprep.subr.mxu0 0.0
        %1052 = vmatpush1.msra.mxu0 %v945
        %1053 = vmatprep.subr.mxu0 0.0
        %1054 = vmatpush1.msra.mxu0 %v948
        %1055 = vmatprep.subr.mxu0 0.0
        %1056 = vmatpush1.msra.mxu0 %v951
        %1057 = vmatprep.subr.mxu0 0.0
        %1058 = vmatpush1.msra.mxu0 %v954
        %1059 = vmatprep.subr.mxu0 0.0
        %1060 = vmatpush1.msra.mxu0 %v957
        %1061 = vmatprep.subr.mxu0 0.0
        %1062 = vmatpush1.msra.mxu0 0.0
        %1063 = vmatprep.subr.mxu0 0.0
        %1064 = vmatpush1.msra.mxu0 0.0
        %1065 = vmatprep.subr.mxu0 0.0
        %1066 = vmatpush1.msra.mxu0 0.0
        %1067 = vmatprep.subr.mxu0 0.0
        %1068 = vmatpush1.msra.mxu0 0.0
        %1069 = vmatprep.subr.mxu0 0.0
        %1070 = vmatpush1.msra.mxu0 0.0
        %1071 = vmatprep.subr.mxu0 0.0
        %1072 = vmatpush1.msra.mxu0 0.0
        %1073 = vmatprep.subr.mxu0 0.0
        %1074 = vmatpush1.msra.mxu0 0.0
        %1075 = vmatprep.subr.mxu0 0.0
        %1076 = vmatpush1.msra.mxu0 0.0
        %1077 = vmatprep.subr.mxu0 0.0
        %1078 = vmatpush1.msra.mxu0 0.0
        %1079 = vmatprep.subr.mxu0 0.0
        %1080 = vmatpush1.msra.mxu0 0.0
        %1081 = vmatprep.subr.mxu0 0.0
        %1082 = vmatpush1.msra.mxu0 0.0
        %1083 = vmatprep.subr.mxu0 0.0
        %1084 = vmatpush1.msra.mxu0 0.0
        %1085 = vmatprep.subr.mxu0 0.0
        %1086 = vmatpush1.msra.mxu0 0.0
        %1087 = vmatprep.subr.mxu0 0.0
        %1088 = vmatpush1.msra.mxu0 0.0
        %1089 = vmatprep.subr.mxu0 0.0
        %1090 = vmatpush1.msra.mxu0 0.0
        %1091 = vmatprep.subr.mxu0 0.0
        %1092 = vmatpush1.msra.mxu0 0.0
        %1093 = vmatprep.mubr.f32.mxu0 0.0
        %1094 = vmatmul.mubr.f32.gmra.mrb[0].mxu0 %v908
        %v1095 = vpop.f32.mrb[0].mxu0
        %v1096 = vadd.f32 0.0, %v1095
        %v1097 = vpop.f32.mrb[0].mxu0
        %1098 = vdwg.mxu0
        %s1099 = smul.u32 1, 3
        %s1100 = smul.addr %s1099, 8
        %s1101 = scalar_lea.vmem [#allocation3], %s1100
        %v1102 = vld [vmem:[%s1101] sm:$0xff]
        %v1103 = vld [vmem:[%s1101 + $0x8] sm:$0xff]
        %v1104 = vld [vmem:[%s1101 + $0x10] sm:$0xff]
        %v1105 = vadd.f32 %v1102, %v1025
        %v1106 = vxor.u32 %v1105, 2147483648
        %v1107 = vmul.f32 %v1106, 1.442695
        %v1108 = vpow.pop %v1107
        %v1109 = vadd.f32 %v1108, 1.0
        %v1110 = vrcp.pop %v1109
        %v1111 = vmul.f32 1.0, %v1110
        %v1112 = vadd.f32 %v1103, %v1027
        %v1113 = vxor.u32 %v1112, 2147483648
        %v1114 = vmul.f32 %v1113, 1.442695
        %v1115 = vpow.pop %v1114
        %v1116 = vadd.f32 %v1115, 1.0
        %v1117 = vrcp.pop %v1116
        %v1118 = vmul.f32 1.0, %v1117
        %v1119 = vadd.f32 %v1096, %v690
        %v1120 = vmul.f32 %v1111, %v1119
        %v1121 = vadd.f32 %v1104, %v1120
        %v1122 = vtanh.pop %v1121
        %v1123 = vsub.f32 1.0, %v1118
        %v1124 = vmul.f32 %v1123, %v1122
        %v1125 = vmul.f32 %v1118, %v908
        %v1126 = vadd.f32 %v1124, %v1125
        %s1127 = scalar_lea.vmem [#allocation2], 8
        %1128 = vst [vmem:[%s1127] sm:$0xff] %v1126
        %v1129 = vld [vmem:[%s325] sm:$0xff]
        %v1130 = vld [vmem:[%s325 + $0x8] sm:$0xff]
        %v1131 = vld [vmem:[%s325 + $0x10] sm:$0xff]
        %v1132 = vld [vmem:[%s325 + $0x18] sm:$0xff]
        %v1133 = vld [vmem:[%s325 + $0x20] sm:$0xff]
        %v1134 = vld [vmem:[%s325 + $0x28] sm:$0xff]
        %v1135 = vld [vmem:[%s325 + $0x30] sm:$0xff]
        %v1136 = vld [vmem:[%s325 + $0x38] sm:$0xff]
        %v1137 = vld [vmem:[%s325 + $0x40] sm:$0xff]
        %v1138 = vld [vmem:[%s325 + $0x48] sm:$0xff]
        %v1139 = vld [vmem:[%s325 + $0x50] sm:$0xff]
        %v1140 = vld [vmem:[%s325 + $0x58] sm:$0xff]
        %v1141 = vld [vmem:[%s325 + $0x60] sm:$0xff]
        %v1142 = vld [vmem:[%s325 + $0x68] sm:$0xff]
        %v1143 = vld [vmem:[%s325 + $0x70] sm:$0xff]
        %v1144 = vld [vmem:[%s325 + $0x78] sm:$0xff]
        %v1145 = vld [vmem:[%s325 + $0x80] sm:$0xff]
        %v1146 = vld [vmem:[%s325 + $0x88] sm:$0xff]
        %v1147 = vld [vmem:[%s325 + $0x90] sm:$0xff]
        %v1148 = vld [vmem:[%s325 + $0x98] sm:$0xff]
        %v1149 = vld [vmem:[%s325 + $0xa0] sm:$0xff]
        %v1150 = vld [vmem:[%s325 + $0xa8] sm:$0xff]
        %v1151 = vld [vmem:[%s325 + $0xb0] sm:$0xff]
        %v1152 = vld [vmem:[%s325 + $0xb8] sm:$0xff]
        %v1153 = vld [vmem:[%s325 + $0xc0] sm:$0xff]
        %v1154 = vld [vmem:[%s325 + $0xc8] sm:$0xff]
        %v1155 = vld [vmem:[%s325 + $0xd0] sm:$0xff]
        %v1156 = vld [vmem:[%s325 + $0xd8] sm:$0xff]
        %v1157 = vld [vmem:[%s325 + $0xe0] sm:$0xff]
        %v1158 = vld [vmem:[%s325 + $0xe8] sm:$0xff]
        %v1159 = vld [vmem:[%s325 + $0xf0] sm:$0xff]
        %v1160 = vld [vmem:[%s325 + $0xf8] sm:$0xff]
        %v1161 = vld [vmem:[%s325 + $0x100] sm:$0xff]
        %v1162 = vld [vmem:[%s325 + $0x108] sm:$0xff]
        %v1163 = vld [vmem:[%s325 + $0x110] sm:$0xff]
        %v1164 = vld [vmem:[%s325 + $0x118] sm:$0xff]
        %v1165 = vld [vmem:[%s325 + $0x120] sm:$0xff]
        %v1166 = vld [vmem:[%s325 + $0x128] sm:$0xff]
        %v1167 = vld [vmem:[%s325 + $0x130] sm:$0xff]
        %v1168 = vld [vmem:[%s325 + $0x138] sm:$0xff]
        %v1169 = vld [vmem:[%s325 + $0x140] sm:$0xff]
        %v1170 = vld [vmem:[%s325 + $0x148] sm:$0xff]
        %v1171 = vld [vmem:[%s325 + $0x150] sm:$0xff]
        %v1172 = vld [vmem:[%s325 + $0x158] sm:$0xff]
        %v1173 = vld [vmem:[%s325 + $0x160] sm:$0xff]
        %v1174 = vld [vmem:[%s325 + $0x168] sm:$0xff]
        %v1175 = vld [vmem:[%s325 + $0x170] sm:$0xff]
        %v1176 = vld [vmem:[%s325 + $0x178] sm:$0xff]
        %1177 = vmatprep.subr.mxu0 %v1130
        %1178 = vmatpush1.msra.mxu0 %v1129
        %1179 = vmatprep.subr.mxu0 %v1133
        %1180 = vmatpush1.msra.mxu0 %v1132
        %1181 = vmatprep.subr.mxu0 %v1136
        %1182 = vmatpush1.msra.mxu0 %v1135
        %1183 = vmatprep.subr.mxu0 %v1139
        %1184 = vmatpush1.msra.mxu0 %v1138
        %1185 = vmatprep.subr.mxu0 %v1142
        %1186 = vmatpush1.msra.mxu0 %v1141
        %1187 = vmatprep.subr.mxu0 %v1145
        %1188 = vmatpush1.msra.mxu0 %v1144
        %1189 = vmatprep.subr.mxu0 %v1148
        %1190 = vmatpush1.msra.mxu0 %v1147
        %1191 = vmatprep.subr.mxu0 %v1151
        %1192 = vmatpush1.msra.mxu0 %v1150
        %1193 = vmatprep.subr.mxu0 %v1154
        %1194 = vmatpush1.msra.mxu0 %v1153
        %1195 = vmatprep.subr.mxu0 %v1157
        %1196 = vmatpush1.msra.mxu0 %v1156
        %1197 = vmatprep.subr.mxu0 %v1160
        %1198 = vmatpush1.msra.mxu0 %v1159
        %1199 = vmatprep.subr.mxu0 %v1163
        %1200 = vmatpush1.msra.mxu0 %v1162
        %1201 = vmatprep.subr.mxu0 %v1166
        %1202 = vmatpush1.msra.mxu0 %v1165
        %1203 = vmatprep.subr.mxu0 %v1169
        %1204 = vmatpush1.msra.mxu0 %v1168
        %1205 = vmatprep.subr.mxu0 %v1172
        %1206 = vmatpush1.msra.mxu0 %v1171
        %1207 = vmatprep.subr.mxu0 %v1175
        %1208 = vmatpush1.msra.mxu0 %v1174
        %1209 = vmatprep.subr.mxu0 0.0
        %1210 = vmatpush1.msra.mxu0 0.0
        %1211 = vmatprep.subr.mxu0 0.0
        %1212 = vmatpush1.msra.mxu0 0.0
        %1213 = vmatprep.subr.mxu0 0.0
        %1214 = vmatpush1.msra.mxu0 0.0
        %1215 = vmatprep.subr.mxu0 0.0
        %1216 = vmatpush1.msra.mxu0 0.0
        %1217 = vmatprep.subr.mxu0 0.0
        %1218 = vmatpush1.msra.mxu0 0.0
        %1219 = vmatprep.subr.mxu0 0.0
        %1220 = vmatpush1.msra.mxu0 0.0
        %1221 = vmatprep.subr.mxu0 0.0
        %1222 = vmatpush1.msra.mxu0 0.0
        %1223 = vmatprep.subr.mxu0 0.0
        %1224 = vmatpush1.msra.mxu0 0.0
        %1225 = vmatprep.subr.mxu0 0.0
        %1226 = vmatpush1.msra.mxu0 0.0
        %1227 = vmatprep.subr.mxu0 0.0
        %1228 = vmatpush1.msra.mxu0 0.0
        %1229 = vmatprep.subr.mxu0 0.0
        %1230 = vmatpush1.msra.mxu0 0.0
        %1231 = vmatprep.subr.mxu0 0.0
        %1232 = vmatpush1.msra.mxu0 0.0
        %1233 = vmatprep.subr.mxu0 0.0
        %1234 = vmatpush1.msra.mxu0 0.0
        %1235 = vmatprep.subr.mxu0 0.0
        %1236 = vmatpush1.msra.mxu0 0.0
        %1237 = vmatprep.subr.mxu0 0.0
        %1238 = vmatpush1.msra.mxu0 0.0
        %1239 = vmatprep.subr.mxu0 0.0
        %1240 = vmatpush1.msra.mxu0 0.0
        %1241 = vmatprep.mubr.f32.mxu0 0.0
        %1242 = vmatmul.mubr.f32.gmra.mrb[0].mxu0 %v1126
        %v1243 = vpop.f32.mrb[0].mxu0
        %v1244 = vadd.f32 0.0, %v1243
        %v1245 = vpop.f32.mrb[0].mxu0
        %v1246 = vadd.f32 0.0, %v1245
        %1247 = vdwg.mxu0
        %1248 = vmatprep.subr.mxu0 0.0
        %1249 = vmatpush1.msra.mxu0 %v1131
        %1250 = vmatprep.subr.mxu0 0.0
        %1251 = vmatpush1.msra.mxu0 %v1134
        %1252 = vmatprep.subr.mxu0 0.0
        %1253 = vmatpush1.msra.mxu0 %v1137
        %1254 = vmatprep.subr.mxu0 0.0
        %1255 = vmatpush1.msra.mxu0 %v1140
        %1256 = vmatprep.subr.mxu0 0.0
        %1257 = vmatpush1.msra.mxu0 %v1143
        %1258 = vmatprep.subr.mxu0 0.0
        %1259 = vmatpush1.msra.mxu0 %v1146
        %1260 = vmatprep.subr.mxu0 0.0
        %1261 = vmatpush1.msra.mxu0 %v1149
        %1262 = vmatprep.subr.mxu0 0.0
        %1263 = vmatpush1.msra.mxu0 %v1152
        %1264 = vmatprep.subr.mxu0 0.0
        %1265 = vmatpush1.msra.mxu0 %v1155
        %1266 = vmatprep.subr.mxu0 0.0
        %1267 = vmatpush1.msra.mxu0 %v1158
        %1268 = vmatprep.subr.mxu0 0.0
        %1269 = vmatpush1.msra.mxu0 %v1161
        %1270 = vmatprep.subr.mxu0 0.0
        %1271 = vmatpush1.msra.mxu0 %v1164
        %1272 = vmatprep.subr.mxu0 0.0
        %1273 = vmatpush1.msra.mxu0 %v1167
        %1274 = vmatprep.subr.mxu0 0.0
        %1275 = vmatpush1.msra.mxu0 %v1170
        %1276 = vmatprep.subr.mxu0 0.0
        %1277 = vmatpush1.msra.mxu0 %v1173
        %1278 = vmatprep.subr.mxu0 0.0
        %1279 = vmatpush1.msra.mxu0 %v1176
        %1280 = vmatprep.subr.mxu0 0.0
        %1281 = vmatpush1.msra.mxu0 0.0
        %1282 = vmatprep.subr.mxu0 0.0
        %1283 = vmatpush1.msra.mxu0 0.0
        %1284 = vmatprep.subr.mxu0 0.0
        %1285 = vmatpush1.msra.mxu0 0.0
        %1286 = vmatprep.subr.mxu0 0.0
        %1287 = vmatpush1.msra.mxu0 0.0
        %1288 = vmatprep.subr.mxu0 0.0
        %1289 = vmatpush1.msra.mxu0 0.0
        %1290 = vmatprep.subr.mxu0 0.0
        %1291 = vmatpush1.msra.mxu0 0.0
        %1292 = vmatprep.subr.mxu0 0.0
        %1293 = vmatpush1.msra.mxu0 0.0
        %1294 = vmatprep.subr.mxu0 0.0
        %1295 = vmatpush1.msra.mxu0 0.0
        %1296 = vmatprep.subr.mxu0 0.0
        %1297 = vmatpush1.msra.mxu0 0.0
        %1298 = vmatprep.subr.mxu0 0.0
        %1299 = vmatpush1.msra.mxu0 0.0
        %1300 = vmatprep.subr.mxu0 0.0
        %1301 = vmatpush1.msra.mxu0 0.0
        %1302 = vmatprep.subr.mxu0 0.0
        %1303 = vmatpush1.msra.mxu0 0.0
        %1304 = vmatprep.subr.mxu0 0.0
        %1305 = vmatpush1.msra.mxu0 0.0
        %1306 = vmatprep.subr.mxu0 0.0
        %1307 = vmatpush1.msra.mxu0 0.0
        %1308 = vmatprep.subr.mxu0 0.0
        %1309 = vmatpush1.msra.mxu0 0.0
        %1310 = vmatprep.subr.mxu0 0.0
        %1311 = vmatpush1.msra.mxu0 0.0
        %1312 = vmatprep.mubr.f32.mxu0 0.0
        %1313 = vmatmul.mubr.f32.gmra.mrb[0].mxu0 %v1126
        %v1314 = vpop.f32.mrb[0].mxu0
        %v1315 = vadd.f32 0.0, %v1314
        %v1316 = vpop.f32.mrb[0].mxu0
        %1317 = vdwg.mxu0
        %s1318 = smul.u32 2, 3
        %s1319 = smul.addr %s1318, 8
        %s1320 = scalar_lea.vmem [#allocation3], %s1319
        %v1321 = vld [vmem:[%s1320] sm:$0xff]
        %v1322 = vld [vmem:[%s1320 + $0x8] sm:$0xff]
        %v1323 = vld [vmem:[%s1320 + $0x10] sm:$0xff]
        %v1324 = vadd.f32 %v1321, %v1244
        %v1325 = vxor.u32 %v1324, 2147483648
        %v1326 = vmul.f32 %v1325, 1.442695
        %v1327 = vpow.pop %v1326
        %v1328 = vadd.f32 %v1327, 1.0
        %v1329 = vrcp.pop %v1328
        %v1330 = vmul.f32 1.0, %v1329
        %v1331 = vadd.f32 %v1322, %v1246
        %v1332 = vxor.u32 %v1331, 2147483648
        %v1333 = vmul.f32 %v1332, 1.442695
        %v1334 = vpow.pop %v1333
        %v1335 = vadd.f32 %v1334, 1.0
        %v1336 = vrcp.pop %v1335
        %v1337 = vmul.f32 1.0, %v1336
        %v1338 = vadd.f32 %v1315, %v690
        %v1339 = vmul.f32 %v1330, %v1338
        %v1340 = vadd.f32 %v1323, %v1339
        %v1341 = vtanh.pop %v1340
        %v1342 = vsub.f32 1.0, %v1337
        %v1343 = vmul.f32 %v1342, %v1341
        %v1344 = vmul.f32 %v1337, %v1126
        %v1345 = vadd.f32 %v1343, %v1344
        %s1346 = scalar_lea.vmem [#allocation2], 16
        %1347 = vst [vmem:[%s1346] sm:$0xff] %v1345
        %v1348 = vld [vmem:[%s325] sm:$0xff]
        %v1349 = vld [vmem:[%s325 + $0x8] sm:$0xff]
        %v1350 = vld [vmem:[%s325 + $0x10] sm:$0xff]
        %v1351 = vld [vmem:[%s325 + $0x18] sm:$0xff]
        %v1352 = vld [vmem:[%s325 + $0x20] sm:$0xff]
        %v1353 = vld [vmem:[%s325 + $0x28] sm:$0xff]
        %v1354 = vld [vmem:[%s325 + $0x30] sm:$0xff]
        %v1355 = vld [vmem:[%s325 + $0x38] sm:$0xff]
        %v1356 = vld [vmem:[%s325 + $0x40] sm:$0xff]
        %v1357 = vld [vmem:[%s325 + $0x48] sm:$0xff]
        %v1358 = vld [vmem:[%s325 + $0x50] sm:$0xff]
        %v1359 = vld [vmem:[%s325 + $0x58] sm:$0xff]
        %v1360 = vld [vmem:[%s325 + $0x60] sm:$0xff]
        %v1361 = vld [vmem:[%s325 + $0x68] sm:$0xff]
        %v1362 = vld [vmem:[%s325 + $0x70] sm:$0xff]
        %v1363 = vld [vmem:[%s325 + $0x78] sm:$0xff]
        %v1364 = vld [vmem:[%s325 + $0x80] sm:$0xff]
        %v1365 = vld [vmem:[%s325 + $0x88] sm:$0xff]
        %v1366 = vld [vmem:[%s325 + $0x90] sm:$0xff]
        %v1367 = vld [vmem:[%s325 + $0x98] sm:$0xff]
        %v1368 = vld [vmem:[%s325 + $0xa0] sm:$0xff]
        %v1369 = vld [vmem:[%s325 + $0xa8] sm:$0xff]
        %v1370 = vld [vmem:[%s325 + $0xb0] sm:$0xff]
        %v1371 = vld [vmem:[%s325 + $0xb8] sm:$0xff]
        %v1372 = vld [vmem:[%s325 + $0xc0] sm:$0xff]
        %v1373 = vld [vmem:[%s325 + $0xc8] sm:$0xff]
        %v1374 = vld [vmem:[%s325 + $0xd0] sm:$0xff]
        %v1375 = vld [vmem:[%s325 + $0xd8] sm:$0xff]
        %v1376 = vld [vmem:[%s325 + $0xe0] sm:$0xff]
        %v1377 = vld [vmem:[%s325 + $0xe8] sm:$0xff]
        %v1378 = vld [vmem:[%s325 + $0xf0] sm:$0xff]
        %v1379 = vld [vmem:[%s325 + $0xf8] sm:$0xff]
        %v1380 = vld [vmem:[%s325 + $0x100] sm:$0xff]
        %v1381 = vld [vmem:[%s325 + $0x108] sm:$0xff]
        %v1382 = vld [vmem:[%s325 + $0x110] sm:$0xff]
        %v1383 = vld [vmem:[%s325 + $0x118] sm:$0xff]
        %v1384 = vld [vmem:[%s325 + $0x120] sm:$0xff]
        %v1385 = vld [vmem:[%s325 + $0x128] sm:$0xff]
        %v1386 = vld [vmem:[%s325 + $0x130] sm:$0xff]
        %v1387 = vld [vmem:[%s325 + $0x138] sm:$0xff]
        %v1388 = vld [vmem:[%s325 + $0x140] sm:$0xff]
        %v1389 = vld [vmem:[%s325 + $0x148] sm:$0xff]
        %v1390 = vld [vmem:[%s325 + $0x150] sm:$0xff]
        %v1391 = vld [vmem:[%s325 + $0x158] sm:$0xff]
        %v1392 = vld [vmem:[%s325 + $0x160] sm:$0xff]
        %v1393 = vld [vmem:[%s325 + $0x168] sm:$0xff]
        %v1394 = vld [vmem:[%s325 + $0x170] sm:$0xff]
        %v1395 = vld [vmem:[%s325 + $0x178] sm:$0xff]
        %1396 = vmatprep.subr.mxu0 %v1349
        %1397 = vmatpush1.msra.mxu0 %v1348
        %1398 = vmatprep.subr.mxu0 %v1352
        %1399 = vmatpush1.msra.mxu0 %v1351
        %1400 = vmatprep.subr.mxu0 %v1355
        %1401 = vmatpush1.msra.mxu0 %v1354
        %1402 = vmatprep.subr.mxu0 %v1358
        %1403 = vmatpush1.msra.mxu0 %v1357
        %1404 = vmatprep.subr.mxu0 %v1361
        %1405 = vmatpush1.msra.mxu0 %v1360
        %1406 = vmatprep.subr.mxu0 %v1364
        %1407 = vmatpush1.msra.mxu0 %v1363
        %1408 = vmatprep.subr.mxu0 %v1367
        %1409 = vmatpush1.msra.mxu0 %v1366
        %1410 = vmatprep.subr.mxu0 %v1370
        %1411 = vmatpush1.msra.mxu0 %v1369
        %1412 = vmatprep.subr.mxu0 %v1373
        %1413 = vmatpush1.msra.mxu0 %v1372
        %1414 = vmatprep.subr.mxu0 %v1376
        %1415 = vmatpush1.msra.mxu0 %v1375
        %1416 = vmatprep.subr.mxu0 %v1379
        %1417 = vmatpush1.msra.mxu0 %v1378
        %1418 = vmatprep.subr.mxu0 %v1382
        %1419 = vmatpush1.msra.mxu0 %v1381
        %1420 = vmatprep.subr.mxu0 %v1385
        %1421 = vmatpush1.msra.mxu0 %v1384
        %1422 = vmatprep.subr.mxu0 %v1388
        %1423 = vmatpush1.msra.mxu0 %v1387
        %1424 = vmatprep.subr.mxu0 %v1391
        %1425 = vmatpush1.msra.mxu0 %v1390
        %1426 = vmatprep.subr.mxu0 %v1394
        %1427 = vmatpush1.msra.mxu0 %v1393
        %1428 = vmatprep.subr.mxu0 0.0
        %1429 = vmatpush1.msra.mxu0 0.0
        %1430 = vmatprep.subr.mxu0 0.0
        %1431 = vmatpush1.msra.mxu0 0.0
        %1432 = vmatprep.subr.mxu0 0.0
        %1433 = vmatpush1.msra.mxu0 0.0
        %1434 = vmatprep.subr.mxu0 0.0
        %1435 = vmatpush1.msra.mxu0 0.0
        %1436 = vmatprep.subr.mxu0 0.0
        %1437 = vmatpush1.msra.mxu0 0.0
        %1438 = vmatprep.subr.mxu0 0.0
        %1439 = vmatpush1.msra.mxu0 0.0
        %1440 = vmatprep.subr.mxu0 0.0
        %1441 = vmatpush1.msra.mxu0 0.0
        %1442 = vmatprep.subr.mxu0 0.0
        %1443 = vmatpush1.msra.mxu0 0.0
        %1444 = vmatprep.subr.mxu0 0.0
        %1445 = vmatpush1.msra.mxu0 0.0
        %1446 = vmatprep.subr.mxu0 0.0
        %1447 = vmatpush1.msra.mxu0 0.0
        %1448 = vmatprep.subr.mxu0 0.0
        %1449 = vmatpush1.msra.mxu0 0.0
        %1450 = vmatprep.subr.mxu0 0.0
        %1451 = vmatpush1.msra.mxu0 0.0
        %1452 = vmatprep.subr.mxu0 0.0
        %1453 = vmatpush1.msra.mxu0 0.0
        %1454 = vmatprep.subr.mxu0 0.0
        %1455 = vmatpush1.msra.mxu0 0.0
        %1456 = vmatprep.subr.mxu0 0.0
        %1457 = vmatpush1.msra.mxu0 0.0
        %1458 = vmatprep.subr.mxu0 0.0
        %1459 = vmatpush1.msra.mxu0 0.0
        %1460 = vmatprep.mubr.f32.mxu0 0.0
        %1461 = vmatmul.mubr.f32.gmra.mrb[0].mxu0 %v1345
        %v1462 = vpop.f32.mrb[0].mxu0
        %v1463 = vadd.f32 0.0, %v1462
        %v1464 = vpop.f32.mrb[0].mxu0
        %v1465 = vadd.f32 0.0, %v1464
        %1466 = vdwg.mxu0
        %1467 = vmatprep.subr.mxu0 0.0
        %1468 = vmatpush1.msra.mxu0 %v1350
        %1469 = vmatprep.subr.mxu0 0.0
        %1470 = vmatpush1.msra.mxu0 %v1353
        %1471 = vmatprep.subr.mxu0 0.0
        %1472 = vmatpush1.msra.mxu0 %v1356
        %1473 = vmatprep.subr.mxu0 0.0
        %1474 = vmatpush1.msra.mxu0 %v1359
        %1475 = vmatprep.subr.mxu0 0.0
        %1476 = vmatpush1.msra.mxu0 %v1362
        %1477 = vmatprep.subr.mxu0 0.0
        %1478 = vmatpush1.msra.mxu0 %v1365
        %1479 = vmatprep.subr.mxu0 0.0
        %1480 = vmatpush1.msra.mxu0 %v1368
        %1481 = vmatprep.subr.mxu0 0.0
        %1482 = vmatpush1.msra.mxu0 %v1371
        %1483 = vmatprep.subr.mxu0 0.0
        %1484 = vmatpush1.msra.mxu0 %v1374
        %1485 = vmatprep.subr.mxu0 0.0
        %1486 = vmatpush1.msra.mxu0 %v1377
        %1487 = vmatprep.subr.mxu0 0.0
        %1488 = vmatpush1.msra.mxu0 %v1380
        %1489 = vmatprep.subr.mxu0 0.0
        %1490 = vmatpush1.msra.mxu0 %v1383
        %1491 = vmatprep.subr.mxu0 0.0
        %1492 = vmatpush1.msra.mxu0 %v1386
        %1493 = vmatprep.subr.mxu0 0.0
        %1494 = vmatpush1.msra.mxu0 %v1389
        %1495 = vmatprep.subr.mxu0 0.0
        %1496 = vmatpush1.msra.mxu0 %v1392
        %1497 = vmatprep.subr.mxu0 0.0
        %1498 = vmatpush1.msra.mxu0 %v1395
        %1499 = vmatprep.subr.mxu0 0.0
        %1500 = vmatpush1.msra.mxu0 0.0
        %1501 = vmatprep.subr.mxu0 0.0
        %1502 = vmatpush1.msra.mxu0 0.0
        %1503 = vmatprep.subr.mxu0 0.0
        %1504 = vmatpush1.msra.mxu0 0.0
        %1505 = vmatprep.subr.mxu0 0.0
        %1506 = vmatpush1.msra.mxu0 0.0
        %1507 = vmatprep.subr.mxu0 0.0
        %1508 = vmatpush1.msra.mxu0 0.0
        %1509 = vmatprep.subr.mxu0 0.0
        %1510 = vmatpush1.msra.mxu0 0.0
        %1511 = vmatprep.subr.mxu0 0.0
        %1512 = vmatpush1.msra.mxu0 0.0
        %1513 = vmatprep.subr.mxu0 0.0
        %1514 = vmatpush1.msra.mxu0 0.0
        %1515 = vmatprep.subr.mxu0 0.0
        %1516 = vmatpush1.msra.mxu0 0.0
        %1517 = vmatprep.subr.mxu0 0.0
        %1518 = vmatpush1.msra.mxu0 0.0
        %1519 = vmatprep.subr.mxu0 0.0
        %1520 = vmatpush1.msra.mxu0 0.0
        %1521 = vmatprep.subr.mxu0 0.0
        %1522 = vmatpush1.msra.mxu0 0.0
        %1523 = vmatprep.subr.mxu0 0.0
        %1524 = vmatpush1.msra.mxu0 0.0
        %1525 = vmatprep.subr.mxu0 0.0
        %1526 = vmatpush1.msra.mxu0 0.0
        %1527 = vmatprep.subr.mxu0 0.0
        %1528 = vmatpush1.msra.mxu0 0.0
        %1529 = vmatprep.subr.mxu0 0.0
        %1530 = vmatpush1.msra.mxu0 0.0
        %1531 = vmatprep.mubr.f32.mxu0 0.0
        %1532 = vmatmul.mubr.f32.gmra.mrb[0].mxu0 %v1345
        %v1533 = vpop.f32.mrb[0].mxu0
        %v1534 = vadd.f32 0.0, %v1533
        %v1535 = vpop.f32.mrb[0].mxu0
        %1536 = vdwg.mxu0
        %s1537 = smul.u32 3, 3
        %s1538 = smul.addr %s1537, 8
        %s1539 = scalar_lea.vmem [#allocation3], %s1538
        %v1540 = vld [vmem:[%s1539] sm:$0xff]
        %v1541 = vld [vmem:[%s1539 + $0x8] sm:$0xff]
        %v1542 = vld [vmem:[%s1539 + $0x10] sm:$0xff]
        %v1543 = vadd.f32 %v1540, %v1463
        %v1544 = vxor.u32 %v1543, 2147483648
        %v1545 = vmul.f32 %v1544, 1.442695
        %v1546 = vpow.pop %v1545
        %v1547 = vadd.f32 %v1546, 1.0
        %v1548 = vrcp.pop %v1547
        %v1549 = vmul.f32 1.0, %v1548
        %v1550 = vadd.f32 %v1541, %v1465
        %v1551 = vxor.u32 %v1550, 2147483648
        %v1552 = vmul.f32 %v1551, 1.442695
        %v1553 = vpow.pop %v1552
        %v1554 = vadd.f32 %v1553, 1.0
        %v1555 = vrcp.pop %v1554
        %v1556 = vmul.f32 1.0, %v1555
        %v1557 = vadd.f32 %v1534, %v690
        %v1558 = vmul.f32 %v1549, %v1557
        %v1559 = vadd.f32 %v1542, %v1558
        %v1560 = vtanh.pop %v1559
        %v1561 = vsub.f32 1.0, %v1556
        %v1562 = vmul.f32 %v1561, %v1560
        %v1563 = vmul.f32 %v1556, %v1345
        %v1564 = vadd.f32 %v1562, %v1563
        %s1565 = scalar_lea.vmem [#allocation2], 24
        %1566 = vst [vmem:[%s1565] sm:$0xff] %v1564
        %v1567 = vld [vmem:[%s325] sm:$0xff]
        %v1568 = vld [vmem:[%s325 + $0x8] sm:$0xff]
        %v1569 = vld [vmem:[%s325 + $0x10] sm:$0xff]
        %v1570 = vld [vmem:[%s325 + $0x18] sm:$0xff]
        %v1571 = vld [vmem:[%s325 + $0x20] sm:$0xff]
        %v1572 = vld [vmem:[%s325 + $0x28] sm:$0xff]
        %v1573 = vld [vmem:[%s325 + $0x30] sm:$0xff]
        %v1574 = vld [vmem:[%s325 + $0x38] sm:$0xff]
        %v1575 = vld [vmem:[%s325 + $0x40] sm:$0xff]
        %v1576 = vld [vmem:[%s325 + $0x48] sm:$0xff]
        %v1577 = vld [vmem:[%s325 + $0x50] sm:$0xff]
        %v1578 = vld [vmem:[%s325 + $0x58] sm:$0xff]
        %v1579 = vld [vmem:[%s325 + $0x60] sm:$0xff]
        %v1580 = vld [vmem:[%s325 + $0x68] sm:$0xff]
        %v1581 = vld [vmem:[%s325 + $0x70] sm:$0xff]
        %v1582 = vld [vmem:[%s325 + $0x78] sm:$0xff]
        %v1583 = vld [vmem:[%s325 + $0x80] sm:$0xff]
        %v1584 = vld [vmem:[%s325 + $0x88] sm:$0xff]
        %v1585 = vld [vmem:[%s325 + $0x90] sm:$0xff]
        %v1586 = vld [vmem:[%s325 + $0x98] sm:$0xff]
        %v1587 = vld [vmem:[%s325 + $0xa0] sm:$0xff]
        %v1588 = vld [vmem:[%s325 + $0xa8] sm:$0xff]
        %v1589 = vld [vmem:[%s325 + $0xb0] sm:$0xff]
        %v1590 = vld [vmem:[%s325 + $0xb8] sm:$0xff]
        %v1591 = vld [vmem:[%s325 + $0xc0] sm:$0xff]
        %v1592 = vld [vmem:[%s325 + $0xc8] sm:$0xff]
        %v1593 = vld [vmem:[%s325 + $0xd0] sm:$0xff]
        %v1594 = vld [vmem:[%s325 + $0xd8] sm:$0xff]
        %v1595 = vld [vmem:[%s325 + $0xe0] sm:$0xff]
        %v1596 = vld [vmem:[%s325 + $0xe8] sm:$0xff]
        %v1597 = vld [vmem:[%s325 + $0xf0] sm:$0xff]
        %v1598 = vld [vmem:[%s325 + $0xf8] sm:$0xff]
        %v1599 = vld [vmem:[%s325 + $0x100] sm:$0xff]
        %v1600 = vld [vmem:[%s325 + $0x108] sm:$0xff]
        %v1601 = vld [vmem:[%s325 + $0x110] sm:$0xff]
        %v1602 = vld [vmem:[%s325 + $0x118] sm:$0xff]
        %v1603 = vld [vmem:[%s325 + $0x120] sm:$0xff]
        %v1604 = vld [vmem:[%s325 + $0x128] sm:$0xff]
        %v1605 = vld [vmem:[%s325 + $0x130] sm:$0xff]
        %v1606 = vld [vmem:[%s325 + $0x138] sm:$0xff]
        %v1607 = vld [vmem:[%s325 + $0x140] sm:$0xff]
        %v1608 = vld [vmem:[%s325 + $0x148] sm:$0xff]
        %v1609 = vld [vmem:[%s325 + $0x150] sm:$0xff]
        %v1610 = vld [vmem:[%s325 + $0x158] sm:$0xff]
        %v1611 = vld [vmem:[%s325 + $0x160] sm:$0xff]
        %v1612 = vld [vmem:[%s325 + $0x168] sm:$0xff]
        %v1613 = vld [vmem:[%s325 + $0x170] sm:$0xff]
        %v1614 = vld [vmem:[%s325 + $0x178] sm:$0xff]
        %1615 = vmatprep.subr.mxu0 %v1568
        %1616 = vmatpush1.msra.mxu0 %v1567
        %1617 = vmatprep.subr.mxu0 %v1571
        %1618 = vmatpush1.msra.mxu0 %v1570
        %1619 = vmatprep.subr.mxu0 %v1574
        %1620 = vmatpush1.msra.mxu0 %v1573
        %1621 = vmatprep.subr.mxu0 %v1577
        %1622 = vmatpush1.msra.mxu0 %v1576
        %1623 = vmatprep.subr.mxu0 %v1580
        %1624 = vmatpush1.msra.mxu0 %v1579
        %1625 = vmatprep.subr.mxu0 %v1583
        %1626 = vmatpush1.msra.mxu0 %v1582
        %1627 = vmatprep.subr.mxu0 %v1586
        %1628 = vmatpush1.msra.mxu0 %v1585
        %1629 = vmatprep.subr.mxu0 %v1589
        %1630 = vmatpush1.msra.mxu0 %v1588
        %1631 = vmatprep.subr.mxu0 %v1592
        %1632 = vmatpush1.msra.mxu0 %v1591
        %1633 = vmatprep.subr.mxu0 %v1595
        %1634 = vmatpush1.msra.mxu0 %v1594
        %1635 = vmatprep.subr.mxu0 %v1598
        %1636 = vmatpush1.msra.mxu0 %v1597
        %1637 = vmatprep.subr.mxu0 %v1601
        %1638 = vmatpush1.msra.mxu0 %v1600
        %1639 = vmatprep.subr.mxu0 %v1604
        %1640 = vmatpush1.msra.mxu0 %v1603
        %1641 = vmatprep.subr.mxu0 %v1607
        %1642 = vmatpush1.msra.mxu0 %v1606
        %1643 = vmatprep.subr.mxu0 %v1610
        %1644 = vmatpush1.msra.mxu0 %v1609
        %1645 = vmatprep.subr.mxu0 %v1613
        %1646 = vmatpush1.msra.mxu0 %v1612
        %1647 = vmatprep.subr.mxu0 0.0
        %1648 = vmatpush1.msra.mxu0 0.0
        %1649 = vmatprep.subr.mxu0 0.0
        %1650 = vmatpush1.msra.mxu0 0.0
        %1651 = vmatprep.subr.mxu0 0.0
        %1652 = vmatpush1.msra.mxu0 0.0
        %1653 = vmatprep.subr.mxu0 0.0
        %1654 = vmatpush1.msra.mxu0 0.0
        %1655 = vmatprep.subr.mxu0 0.0
        %1656 = vmatpush1.msra.mxu0 0.0
        %1657 = vmatprep.subr.mxu0 0.0
        %1658 = vmatpush1.msra.mxu0 0.0
        %1659 = vmatprep.subr.mxu0 0.0
        %1660 = vmatpush1.msra.mxu0 0.0
        %1661 = vmatprep.subr.mxu0 0.0
        %1662 = vmatpush1.msra.mxu0 0.0
        %1663 = vmatprep.subr.mxu0 0.0
        %1664 = vmatpush1.msra.mxu0 0.0
        %1665 = vmatprep.subr.mxu0 0.0
        %1666 = vmatpush1.msra.mxu0 0.0
        %1667 = vmatprep.subr.mxu0 0.0
        %1668 = vmatpush1.msra.mxu0 0.0
        %1669 = vmatprep.subr.mxu0 0.0
        %1670 = vmatpush1.msra.mxu0 0.0
        %1671 = vmatprep.subr.mxu0 0.0
        %1672 = vmatpush1.msra.mxu0 0.0
        %1673 = vmatprep.subr.mxu0 0.0
        %1674 = vmatpush1.msra.mxu0 0.0
        %1675 = vmatprep.subr.mxu0 0.0
        %1676 = vmatpush1.msra.mxu0 0.0
        %1677 = vmatprep.subr.mxu0 0.0
        %1678 = vmatpush1.msra.mxu0 0.0
        %1679 = vmatprep.mubr.f32.mxu0 0.0
        %1680 = vmatmul.mubr.f32.gmra.mrb[0].mxu0 %v1564
        %v1681 = vpop.f32.mrb[0].mxu0
        %v1682 = vadd.f32 0.0, %v1681
        %v1683 = vpop.f32.mrb[0].mxu0
        %v1684 = vadd.f32 0.0, %v1683
        %1685 = vdwg.mxu0
        %1686 = vmatprep.subr.mxu0 0.0
        %1687 = vmatpush1.msra.mxu0 %v1569
        %1688 = vmatprep.subr.mxu0 0.0
        %1689 = vmatpush1.msra.mxu0 %v1572
        %1690 = vmatprep.subr.mxu0 0.0
        %1691 = vmatpush1.msra.mxu0 %v1575
        %1692 = vmatprep.subr.mxu0 0.0
        %1693 = vmatpush1.msra.mxu0 %v1578
        %1694 = vmatprep.subr.mxu0 0.0
        %1695 = vmatpush1.msra.mxu0 %v1581
        %1696 = vmatprep.subr.mxu0 0.0
        %1697 = vmatpush1.msra.mxu0 %v1584
        %1698 = vmatprep.subr.mxu0 0.0
        %1699 = vmatpush1.msra.mxu0 %v1587
        %1700 = vmatprep.subr.mxu0 0.0
        %1701 = vmatpush1.msra.mxu0 %v1590
        %1702 = vmatprep.subr.mxu0 0.0
        %1703 = vmatpush1.msra.mxu0 %v1593
        %1704 = vmatprep.subr.mxu0 0.0
        %1705 = vmatpush1.msra.mxu0 %v1596
        %1706 = vmatprep.subr.mxu0 0.0
        %1707 = vmatpush1.msra.mxu0 %v1599
        %1708 = vmatprep.subr.mxu0 0.0
        %1709 = vmatpush1.msra.mxu0 %v1602
        %1710 = vmatprep.subr.mxu0 0.0
        %1711 = vmatpush1.msra.mxu0 %v1605
        %1712 = vmatprep.subr.mxu0 0.0
        %1713 = vmatpush1.msra.mxu0 %v1608
        %1714 = vmatprep.subr.mxu0 0.0
        %1715 = vmatpush1.msra.mxu0 %v1611
        %1716 = vmatprep.subr.mxu0 0.0
        %1717 = vmatpush1.msra.mxu0 %v1614
        %1718 = vmatprep.subr.mxu0 0.0
        %1719 = vmatpush1.msra.mxu0 0.0
        %1720 = vmatprep.subr.mxu0 0.0
        %1721 = vmatpush1.msra.mxu0 0.0
        %1722 = vmatprep.subr.mxu0 0.0
        %1723 = vmatpush1.msra.mxu0 0.0
        %1724 = vmatprep.subr.mxu0 0.0
        %1725 = vmatpush1.msra.mxu0 0.0
        %1726 = vmatprep.subr.mxu0 0.0
        %1727 = vmatpush1.msra.mxu0 0.0
        %1728 = vmatprep.subr.mxu0 0.0
        %1729 = vmatpush1.msra.mxu0 0.0
        %1730 = vmatprep.subr.mxu0 0.0
        %1731 = vmatpush1.msra.mxu0 0.0
        %1732 = vmatprep.subr.mxu0 0.0
        %1733 = vmatpush1.msra.mxu0 0.0
        %1734 = vmatprep.subr.mxu0 0.0
        %1735 = vmatpush1.msra.mxu0 0.0
        %1736 = vmatprep.subr.mxu0 0.0
        %1737 = vmatpush1.msra.mxu0 0.0
        %1738 = vmatprep.subr.mxu0 0.0
        %1739 = vmatpush1.msra.mxu0 0.0
        %1740 = vmatprep.subr.mxu0 0.0
        %1741 = vmatpush1.msra.mxu0 0.0
        %1742 = vmatprep.subr.mxu0 0.0
        %1743 = vmatpush1.msra.mxu0 0.0
        %1744 = vmatprep.subr.mxu0 0.0
        %1745 = vmatpush1.msra.mxu0 0.0
        %1746 = vmatprep.subr.mxu0 0.0
        %1747 = vmatpush1.msra.mxu0 0.0
        %1748 = vmatprep.subr.mxu0 0.0
        %1749 = vmatpush1.msra.mxu0 0.0
        %1750 = vmatprep.mubr.f32.mxu0 0.0
        %1751 = vmatmul.mubr.f32.gmra.mrb[0].mxu0 %v1564
        %v1752 = vpop.f32.mrb[0].mxu0
        %v1753 = vadd.f32 0.0, %v1752
        %v1754 = vpop.f32.mrb[0].mxu0
        %1755 = vdwg.mxu0
        %s1756 = smul.u32 4, 3
        %s1757 = smul.addr %s1756, 8
        %s1758 = scalar_lea.vmem [#allocation3], %s1757
        %v1759 = vld [vmem:[%s1758] sm:$0xff]
        %v1760 = vld [vmem:[%s1758 + $0x8] sm:$0xff]
        %v1761 = vld [vmem:[%s1758 + $0x10] sm:$0xff]
        %v1762 = vadd.f32 %v1759, %v1682
        %v1763 = vxor.u32 %v1762, 2147483648
        %v1764 = vmul.f32 %v1763, 1.442695
        %v1765 = vpow.pop %v1764
        %v1766 = vadd.f32 %v1765, 1.0
        %v1767 = vrcp.pop %v1766
        %v1768 = vmul.f32 1.0, %v1767
        %v1769 = vadd.f32 %v1760, %v1684
        %v1770 = vxor.u32 %v1769, 2147483648
        %v1771 = vmul.f32 %v1770, 1.442695
        %v1772 = vpow.pop %v1771
        %v1773 = vadd.f32 %v1772, 1.0
        %v1774 = vrcp.pop %v1773
        %v1775 = vmul.f32 1.0, %v1774
        %v1776 = vadd.f32 %v1753, %v690
        %v1777 = vmul.f32 %v1768, %v1776
        %v1778 = vadd.f32 %v1761, %v1777
        %v1779 = vtanh.pop %v1778
        %v1780 = vsub.f32 1.0, %v1775
        %v1781 = vmul.f32 %v1780, %v1779
        %v1782 = vmul.f32 %v1775, %v1564
        %v1783 = vadd.f32 %v1781, %v1782
        %s1784 = scalar_lea.vmem [#allocation2], 32
        %1785 = vst [vmem:[%s1784] sm:$0xff] %v1783
        %v1786 = vld [vmem:[%s325] sm:$0xff]
        %v1787 = vld [vmem:[%s325 + $0x8] sm:$0xff]
        %v1788 = vld [vmem:[%s325 + $0x10] sm:$0xff]
        %v1789 = vld [vmem:[%s325 + $0x18] sm:$0xff]
        %v1790 = vld [vmem:[%s325 + $0x20] sm:$0xff]
        %v1791 = vld [vmem:[%s325 + $0x28] sm:$0xff]
        %v1792 = vld [vmem:[%s325 + $0x30] sm:$0xff]
        %v1793 = vld [vmem:[%s325 + $0x38] sm:$0xff]
        %v1794 = vld [vmem:[%s325 + $0x40] sm:$0xff]
        %v1795 = vld [vmem:[%s325 + $0x48] sm:$0xff]
        %v1796 = vld [vmem:[%s325 + $0x50] sm:$0xff]
        %v1797 = vld [vmem:[%s325 + $0x58] sm:$0xff]
        %v1798 = vld [vmem:[%s325 + $0x60] sm:$0xff]
        %v1799 = vld [vmem:[%s325 + $0x68] sm:$0xff]
        %v1800 = vld [vmem:[%s325 + $0x70] sm:$0xff]
        %v1801 = vld [vmem:[%s325 + $0x78] sm:$0xff]
        %v1802 = vld [vmem:[%s325 + $0x80] sm:$0xff]
        %v1803 = vld [vmem:[%s325 + $0x88] sm:$0xff]
        %v1804 = vld [vmem:[%s325 + $0x90] sm:$0xff]
        %v1805 = vld [vmem:[%s325 + $0x98] sm:$0xff]
        %v1806 = vld [vmem:[%s325 + $0xa0] sm:$0xff]
        %v1807 = vld [vmem:[%s325 + $0xa8] sm:$0xff]
        %v1808 = vld [vmem:[%s325 + $0xb0] sm:$0xff]
        %v1809 = vld [vmem:[%s325 + $0xb8] sm:$0xff]
        %v1810 = vld [vmem:[%s325 + $0xc0] sm:$0xff]
        %v1811 = vld [vmem:[%s325 + $0xc8] sm:$0xff]
        %v1812 = vld [vmem:[%s325 + $0xd0] sm:$0xff]
        %v1813 = vld [vmem:[%s325 + $0xd8] sm:$0xff]
        %v1814 = vld [vmem:[%s325 + $0xe0] sm:$0xff]
        %v1815 = vld [vmem:[%s325 + $0xe8] sm:$0xff]
        %v1816 = vld [vmem:[%s325 + $0xf0] sm:$0xff]
        %v1817 = vld [vmem:[%s325 + $0xf8] sm:$0xff]
        %v1818 = vld [vmem:[%s325 + $0x100] sm:$0xff]
        %v1819 = vld [vmem:[%s325 + $0x108] sm:$0xff]
        %v1820 = vld [vmem:[%s325 + $0x110] sm:$0xff]
        %v1821 = vld [vmem:[%s325 + $0x118] sm:$0xff]
        %v1822 = vld [vmem:[%s325 + $0x120] sm:$0xff]
        %v1823 = vld [vmem:[%s325 + $0x128] sm:$0xff]
        %v1824 = vld [vmem:[%s325 + $0x130] sm:$0xff]
        %v1825 = vld [vmem:[%s325 + $0x138] sm:$0xff]
        %v1826 = vld [vmem:[%s325 + $0x140] sm:$0xff]
        %v1827 = vld [vmem:[%s325 + $0x148] sm:$0xff]
        %v1828 = vld [vmem:[%s325 + $0x150] sm:$0xff]
        %v1829 = vld [vmem:[%s325 + $0x158] sm:$0xff]
        %v1830 = vld [vmem:[%s325 + $0x160] sm:$0xff]
        %v1831 = vld [vmem:[%s325 + $0x168] sm:$0xff]
        %v1832 = vld [vmem:[%s325 + $0x170] sm:$0xff]
        %v1833 = vld [vmem:[%s325 + $0x178] sm:$0xff]
        %1834 = vmatprep.subr.mxu0 %v1787
        %1835 = vmatpush1.msra.mxu0 %v1786
        %1836 = vmatprep.subr.mxu0 %v1790
        %1837 = vmatpush1.msra.mxu0 %v1789
        %1838 = vmatprep.subr.mxu0 %v1793
        %1839 = vmatpush1.msra.mxu0 %v1792
        %1840 = vmatprep.subr.mxu0 %v1796
        %1841 = vmatpush1.msra.mxu0 %v1795
        %1842 = vmatprep.subr.mxu0 %v1799
        %1843 = vmatpush1.msra.mxu0 %v1798
        %1844 = vmatprep.subr.mxu0 %v1802
        %1845 = vmatpush1.msra.mxu0 %v1801
        %1846 = vmatprep.subr.mxu0 %v1805
        %1847 = vmatpush1.msra.mxu0 %v1804
        %1848 = vmatprep.subr.mxu0 %v1808
        %1849 = vmatpush1.msra.mxu0 %v1807
        %1850 = vmatprep.subr.mxu0 %v1811
        %1851 = vmatpush1.msra.mxu0 %v1810
        %1852 = vmatprep.subr.mxu0 %v1814
        %1853 = vmatpush1.msra.mxu0 %v1813
        %1854 = vmatprep.subr.mxu0 %v1817
        %1855 = vmatpush1.msra.mxu0 %v1816
        %1856 = vmatprep.subr.mxu0 %v1820
        %1857 = vmatpush1.msra.mxu0 %v1819
        %1858 = vmatprep.subr.mxu0 %v1823
        %1859 = vmatpush1.msra.mxu0 %v1822
        %1860 = vmatprep.subr.mxu0 %v1826
        %1861 = vmatpush1.msra.mxu0 %v1825
        %1862 = vmatprep.subr.mxu0 %v1829
        %1863 = vmatpush1.msra.mxu0 %v1828
        %1864 = vmatprep.subr.mxu0 %v1832
        %1865 = vmatpush1.msra.mxu0 %v1831
        %1866 = vmatprep.subr.mxu0 0.0
        %1867 = vmatpush1.msra.mxu0 0.0
        %1868 = vmatprep.subr.mxu0 0.0
        %1869 = vmatpush1.msra.mxu0 0.0
        %1870 = vmatprep.subr.mxu0 0.0
        %1871 = vmatpush1.msra.mxu0 0.0
        %1872 = vmatprep.subr.mxu0 0.0
        %1873 = vmatpush1.msra.mxu0 0.0
        %1874 = vmatprep.subr.mxu0 0.0
        %1875 = vmatpush1.msra.mxu0 0.0
        %1876 = vmatprep.subr.mxu0 0.0
        %1877 = vmatpush1.msra.mxu0 0.0
        %1878 = vmatprep.subr.mxu0 0.0
        %1879 = vmatpush1.msra.mxu0 0.0
        %1880 = vmatprep.subr.mxu0 0.0
        %1881 = vmatpush1.msra.mxu0 0.0
        %1882 = vmatprep.subr.mxu0 0.0
        %1883 = vmatpush1.msra.mxu0 0.0
        %1884 = vmatprep.subr.mxu0 0.0
        %1885 = vmatpush1.msra.mxu0 0.0
        %1886 = vmatprep.subr.mxu0 0.0
        %1887 = vmatpush1.msra.mxu0 0.0
        %1888 = vmatprep.subr.mxu0 0.0
        %1889 = vmatpush1.msra.mxu0 0.0
        %1890 = vmatprep.subr.mxu0 0.0
        %1891 = vmatpush1.msra.mxu0 0.0
        %1892 = vmatprep.subr.mxu0 0.0
        %1893 = vmatpush1.msra.mxu0 0.0
        %1894 = vmatprep.subr.mxu0 0.0
        %1895 = vmatpush1.msra.mxu0 0.0
        %1896 = vmatprep.subr.mxu0 0.0
        %1897 = vmatpush1.msra.mxu0 0.0
        %1898 = vmatprep.mubr.f32.mxu0 0.0
        %1899 = vmatmul.mubr.f32.gmra.mrb[0].mxu0 %v1783
        %v1900 = vpop.f32.mrb[0].mxu0
        %v1901 = vadd.f32 0.0, %v1900
        %v1902 = vpop.f32.mrb[0].mxu0
        %v1903 = vadd.f32 0.0, %v1902
        %1904 = vdwg.mxu0
        %1905 = vmatprep.subr.mxu0 0.0
        %1906 = vmatpush1.msra.mxu0 %v1788
        %1907 = vmatprep.subr.mxu0 0.0
        %1908 = vmatpush1.msra.mxu0 %v1791
        %1909 = vmatprep.subr.mxu0 0.0
        %1910 = vmatpush1.msra.mxu0 %v1794
        %1911 = vmatprep.subr.mxu0 0.0
        %1912 = vmatpush1.msra.mxu0 %v1797
        %1913 = vmatprep.subr.mxu0 0.0
        %1914 = vmatpush1.msra.mxu0 %v1800
        %1915 = vmatprep.subr.mxu0 0.0
        %1916 = vmatpush1.msra.mxu0 %v1803
        %1917 = vmatprep.subr.mxu0 0.0
        %1918 = vmatpush1.msra.mxu0 %v1806
        %1919 = vmatprep.subr.mxu0 0.0
        %1920 = vmatpush1.msra.mxu0 %v1809
        %1921 = vmatprep.subr.mxu0 0.0
        %1922 = vmatpush1.msra.mxu0 %v1812
        %1923 = vmatprep.subr.mxu0 0.0
        %1924 = vmatpush1.msra.mxu0 %v1815
        %1925 = vmatprep.subr.mxu0 0.0
        %1926 = vmatpush1.msra.mxu0 %v1818
        %1927 = vmatprep.subr.mxu0 0.0
        %1928 = vmatpush1.msra.mxu0 %v1821
        %1929 = vmatprep.subr.mxu0 0.0
        %1930 = vmatpush1.msra.mxu0 %v1824
        %1931 = vmatprep.subr.mxu0 0.0
        %1932 = vmatpush1.msra.mxu0 %v1827
        %1933 = vmatprep.subr.mxu0 0.0
        %1934 = vmatpush1.msra.mxu0 %v1830
        %1935 = vmatprep.subr.mxu0 0.0
        %1936 = vmatpush1.msra.mxu0 %v1833
        %1937 = vmatprep.subr.mxu0 0.0
        %1938 = vmatpush1.msra.mxu0 0.0
        %1939 = vmatprep.subr.mxu0 0.0
        %1940 = vmatpush1.msra.mxu0 0.0
        %1941 = vmatprep.subr.mxu0 0.0
        %1942 = vmatpush1.msra.mxu0 0.0
        %1943 = vmatprep.subr.mxu0 0.0
        %1944 = vmatpush1.msra.mxu0 0.0
        %1945 = vmatprep.subr.mxu0 0.0
        %1946 = vmatpush1.msra.mxu0 0.0
        %1947 = vmatprep.subr.mxu0 0.0
        %1948 = vmatpush1.msra.mxu0 0.0
        %1949 = vmatprep.subr.mxu0 0.0
        %1950 = vmatpush1.msra.mxu0 0.0
        %1951 = vmatprep.subr.mxu0 0.0
        %1952 = vmatpush1.msra.mxu0 0.0
        %1953 = vmatprep.subr.mxu0 0.0
        %1954 = vmatpush1.msra.mxu0 0.0
        %1955 = vmatprep.subr.mxu0 0.0
        %1956 = vmatpush1.msra.mxu0 0.0
        %1957 = vmatprep.subr.mxu0 0.0
        %1958 = vmatpush1.msra.mxu0 0.0
        %1959 = vmatprep.subr.mxu0 0.0
        %1960 = vmatpush1.msra.mxu0 0.0
        %1961 = vmatprep.subr.mxu0 0.0
        %1962 = vmatpush1.msra.mxu0 0.0
        %1963 = vmatprep.subr.mxu0 0.0
        %1964 = vmatpush1.msra.mxu0 0.0
        %1965 = vmatprep.subr.mxu0 0.0
        %1966 = vmatpush1.msra.mxu0 0.0
        %1967 = vmatprep.subr.mxu0 0.0
        %1968 = vmatpush1.msra.mxu0 0.0
        %1969 = vmatprep.mubr.f32.mxu0 0.0
        %1970 = vmatmul.mubr.f32.gmra.mrb[0].mxu0 %v1783
        %v1971 = vpop.f32.mrb[0].mxu0
        %v1972 = vadd.f32 0.0, %v1971
        %v1973 = vpop.f32.mrb[0].mxu0
        %1974 = vdwg.mxu0
        %s1975 = smul.u32 5, 3
        %s1976 = smul.addr %s1975, 8
        %s1977 = scalar_lea.vmem [#allocation3], %s1976
        %v1978 = vld [vmem:[%s1977] sm:$0xff]
        %v1979 = vld [vmem:[%s1977 + $0x8] sm:$0xff]
        %v1980 = vld [vmem:[%s1977 + $0x10] sm:$0xff]
        %v1981 = vadd.f32 %v1978, %v1901
        %v1982 = vxor.u32 %v1981, 2147483648
        %v1983 = vmul.f32 %v1982, 1.442695
        %v1984 = vpow.pop %v1983
        %v1985 = vadd.f32 %v1984, 1.0
        %v1986 = vrcp.pop %v1985
        %v1987 = vmul.f32 1.0, %v1986
        %v1988 = vadd.f32 %v1979, %v1903
        %v1989 = vxor.u32 %v1988, 2147483648
        %v1990 = vmul.f32 %v1989, 1.442695
        %v1991 = vpow.pop %v1990
        %v1992 = vadd.f32 %v1991, 1.0
        %v1993 = vrcp.pop %v1992
        %v1994 = vmul.f32 1.0, %v1993
        %v1995 = vadd.f32 %v1972, %v690
        %v1996 = vmul.f32 %v1987, %v1995
        %v1997 = vadd.f32 %v1980, %v1996
        %v1998 = vtanh.pop %v1997
        %v1999 = vsub.f32 1.0, %v1994
        %v2000 = vmul.f32 %v1999, %v1998
        %v2001 = vmul.f32 %v1994, %v1783
        %v2002 = vadd.f32 %v2000, %v2001
        %s2003 = scalar_lea.vmem [#allocation2], 40
        %2004 = vst [vmem:[%s2003] sm:$0xff] %v2002
        %2005 = vst [vmem:[%s371] sm:$0xff] %v2002
        %p2006 = scmp.eq.s32.totalorder %s28, 1
        // Predicated region
        $region57: #{gru_forward.2} parent=43 // pred_check
          %p2007 = pneg %p2006
        $region58: #{gru_forward.2} parent=43 // pred_check_branch
          %2009 = sbr.rel (%p2007) target = $region60
        $region59: #{gru_forward.2} parent=43 // pred_region
          %v2010 = vld [vmem:[#allocation2] sm:$0xff]
          %v2011 = vld [vmem:[#allocation2 + $0x8] sm:$0xff]
          %v2012 = vld [vmem:[#allocation2 + $0x10] sm:$0xff]
          %v2013 = vld [vmem:[#allocation2 + $0x18] sm:$0xff]
          %v2014 = vld [vmem:[#allocation2 + $0x20] sm:$0xff]
          %v2015 = vld [vmem:[#allocation2 + $0x28] sm:$0xff]
          %v2016 = vmax.f32 %v2010, 0.0
          %v2017 = vmax.f32 %v2011, 0.0
          %v2018 = vmax.f32 %v2012, 0.0
          %v2019 = vmax.f32 %v2013, 0.0
          %v2020 = vmax.f32 %v2014, 0.0
          %v2021 = vmax.f32 %v2015, 0.0
          %2022 = vst [vmem:[%s6] sm:$0xff] %v2016
          %2023 = vst [vmem:[%s6 + $0x8] sm:$0xff] %v2017
          %2024 = vst [vmem:[%s6 + $0x10] sm:$0xff] %v2018
          %2025 = vst [vmem:[%s6 + $0x18] sm:$0xff] %v2019
          %2026 = vst [vmem:[%s6 + $0x20] sm:$0xff] %v2020
          %2027 = vst [vmem:[%s6 + $0x28] sm:$0xff] %v2021
        $region60: #{gru_forward.2} parent=43 // pred_fallthru
          _
        %s2028 = sand.u32 %s208, 1
        %s2029 = scalar_lea.sflag [#allocation6], %s2028
        %s2030 = sand.u32 %s208, 1
        %s2031 = smul.addr %s2030, 8
        %s2032 = scalar_lea.vmem [#allocation9], %s2031
        // Predicated region
        $region61: #{gru_forward.2} parent=43 // pred_check
          %p2033 = pneg %p192
        $region62: #{gru_forward.2} parent=43 // pred_check_branch
          %2035 = sbr.rel (%p2033) target = $region64
        $region63: #{gru_forward.2} parent=43 // pred_region
          _
        $region64: #{gru_forward.2} parent=43 // pred_fallthru
          _
        // Predicated region
        $region65: #{gru_forward.2} parent=43 // pred_check
          %p2036 = pneg %p218
        $region66: #{gru_forward.2} parent=43 // pred_check_branch
          %2038 = sbr.rel (%p2036) target = $region68
        $region67: #{gru_forward.2} parent=43 // pred_region
          %s2040 = ssub.s32 128, 128
          %2041 = vsyncadd %s2029, %s2040
          %s2042 = smul.addr %s28, 128
          %s2043 = scalar_lea.hbm %s7, %s2042
          %s2045 = sshll.u32 %s2032, 4
          %s2046 = int_to_ptr.vmem [resolvable:$true] %s2045
          %2048 = dma.vmem_to_hbm [thread:$0]  %s2046, 128, %s2043, %s2029
        $region68: #{gru_forward.2} parent=43 // pred_fallthru
          _
        // Predicated region
        $region69: #{gru_forward.2} parent=43 // pred_check
          %p2049 = pneg %p192
        $region70: #{gru_forward.2} parent=43 // pred_check_branch
          %2051 = sbr.rel (%p2049) target = $region72
        $region71: #{gru_forward.2} parent=43 // pred_region
          _
        $region72: #{gru_forward.2} parent=43 // pred_fallthru
          _
      $region44: #{gru_forward.2} parent=5 // pred_fallthru
        _
      %p2052 = scmp.le.s32.totalorder 2, %s23
      // Predicated region
      $region73: #{gru_forward.2} parent=5 // pred_check
        %p2053 = pneg %p2052
      $region74: #{gru_forward.2} parent=5 // pred_check_branch
        %2055 = sbr.rel (%p2053) target = $region76
      $region75: #{gru_forward.2} parent=5 // pred_region
        %s2056 = ssub.s32 %s23, 2
        // Predicated region
        $region77: #{gru_forward.2} parent=75 // pred_check
          %p2057 = pneg %p224
        $region78: #{gru_forward.2} parent=75 // pred_check_branch
          %2059 = sbr.rel (%p2057) target = $region80
        $region79: #{gru_forward.2} parent=75 // pred_region
          %s2060 = sand.u32 %s209, 1
          %s2061 = scalar_lea.sflag [#allocation6], %s2060
          %s2062 = sand.u32 %s209, 1
          %s2063 = smul.addr %s2062, 8
          %s2064 = scalar_lea.vmem [#allocation9], %s2063
          %2065 = dma.done %s2061, 128
        $region80: #{gru_forward.2} parent=75 // pred_fallthru
          _
      $region76: #{gru_forward.2} parent=5 // pred_fallthru
        _
    $region6: #{gru_forward.2} parent=1 // loop_footer
      %s27 = sadd.s32 1, %s23
    $region7: #{gru_forward.2} parent=1 // loop_footer_branch
      %22 = sbr.rel target = $region3
    $region8: #{gru_forward.2} parent=1 // loop_exit
      _
    %2066 = vsyncpa [#allocation5], 1
    %s2067 = scalar_lea.sflag [#allocation5], 1
    %2068 = vsyncpa %s2067, 1
    %2069 = vsyncpa [#allocation8], 1
    %s2070 = scalar_lea.sflag [#allocation8], 1
    %2071 = vsyncpa %s2070, 1
    %2072 = vsyncpa [#allocation6], 1
    %s2073 = scalar_lea.sflag [#allocation6], 1
    %2074 = vsyncpa %s2073, 1

</llo_original>
